<compile_context>
chip_gen: v5e
topology: v5e:2x2
jax: 0.10.0
libtpu: 0.0.40
codegen_flags: <defaults>
</compile_context>

<pallas_src>
from functools import partial

import jax
import jax.numpy as jnp
from jax.experimental import pallas as pl
from jax.experimental.pallas import tpu as pltpu


# Zero-gap rows between packed batch elements in the scratch slab:
# >= conv halo (K-1)//2 and a multiple of 16 so bf16 fresh-row stores land on
# packed-sublane boundaries (when T is a multiple of 16).
GAP = 16


# --------------------------------------------------------------------------
# Fused kernel: 3x (conv 'same' + folded-BN + ReLU) + linear projection,
# Bt batch elements per grid step, activations resident in VMEM.
# --------------------------------------------------------------------------
def prenet_kernel(x_ref, w1_ref, s1_ref, w2_ref, s2_ref, w3_ref, s3_ref,
                  wp_ref, bp_ref, o_ref, pad_ref, *, Bt, T, K):
    # x_ref:   (Bt, T, C)        input block (Bt batch elements packed per step)
    # wN_ref:  (K*C, C)   bf16   conv weight, K taps unfolded, BN scale folded in
    # sN_ref:  (1, C)     f32    folded (conv bias + BN shift)
    # wp_ref:  (C, Hp)    bf16   projection weight (lane-padded to 128 multiple)
    # bp_ref:  (1, Hp)    f32    projection bias (lane-padded)
    # pad_ref: ((Bt+1)*GAP + Bt*T, C) bf16 scratch slab; element b lives at rows
    #          [GAP + b*(T+GAP), ...+T); the GAP-row gaps stay zero and supply
    #          the 'same' zero padding for all three conv blocks.
    pad = (K - 1) // 2
    C = pad_ref.shape[-1]
    bases = [GAP + b * (T + GAP) for b in range(Bt)]

    # Zero only the halo/gap rows (never overwritten afterwards, so a single
    # zeroing serves all three conv blocks). Real rows are overwritten next.
    zero_gap = jnp.zeros((GAP, C), dtype=pad_ref.dtype)
    for g in range(Bt + 1):
        pad_ref[pl.ds(g * (T + GAP), GAP), :] = zero_gap

    # Copy the input into the slab, casting to bf16 exactly once (MXU operand).
    for b in range(Bt):
        pad_ref[pl.ds(bases[b], T), :] = x_ref[b].astype(pad_ref.dtype)

    blocks = ((w1_ref, s1_ref), (w2_ref, s2_ref), (w3_ref, s3_ref))
    y = None
    for i, (w_ref, s_ref) in enumerate(blocks):
        # Unfold the K taps straight from the slab ref (no whole-slab load):
        # per tap, concat the Bt shifted element windows along M, then concat
        # taps along lanes -> ONE deep (Bt*T, K*C) @ (K*C, C) MXU matmul.
        # TODO(synk): on v5e (128-deep MXU) K accumulating (M,C)@(C,C) dots
        # straight from the windows would avoid materializing the K*C-lane slab.
        xunf = jnp.concatenate(
            [jnp.concatenate(
                [pad_ref[pl.ds(bases[b] - pad + k, T), :] for b in range(Bt)],
                axis=0)
             for k in range(K)], axis=1)                      # (Bt*T, K*C) bf16
        y = jnp.dot(xunf, w_ref[...],
                    preferred_element_type=jnp.float32)       # (Bt*T, C) f32
        y = jnp.maximum(y + s_ref[...], 0.0)                  # conv-bias+BN, ReLU
        if i + 1 < len(blocks):                               # Dropout = identity (eval)
            yb = y.astype(pad_ref.dtype)                      # write back as bf16
            for b in range(Bt):
                pad_ref[pl.ds(bases[b], T), :] = yb[b * T:(b + 1) * T]

    out = jnp.dot(y.astype(jnp.bfloat16), wp_ref[...],
                  preferred_element_type=jnp.float32) + bp_ref[...]
    outc = out.astype(o_ref.dtype)
    for b in range(Bt):                                       # lane-dense stores
        o_ref[b] = outc[b * T:(b + 1) * T]


def _pick_batch_tile(B, T):
    """Pack enough batch elements per grid step to fill the MXU M dimension
    (target ~256 rows for v6e/v7x), while keeping >=2 grid steps when B allows
    so both v7x TensorCores get work and DMAs overlap compute."""
    bt = max(1, min(B, 256 // max(T, 1)))
    bt = min(bt, max(1, B // 2))
    while B % bt:
        bt -= 1
    return bt


def encoder_prenet(x, params, *, batch_tile=None):
    B, T, C = x.shape
    K = params["K"]
    pad = (K - 1) // 2
    assert K % 2 == 1 and pad <= GAP, "kernel_size must be odd and <= 2*GAP+1"
    (w1, s1), (w2, s2), (w3, s3) = params["blocks"]
    wp, bp = params["w_proj"], params["b_proj"]
    Hpad = wp.shape[1]
    H = params["hidden"]

    Bt = batch_tile if batch_tile is not None else _pick_batch_tile(B, T)
    assert B % Bt == 0
    slab_rows = (Bt + 1) * GAP + Bt * T

    # Grid-invariant operands: single-buffer them (no pointless double
    # buffering of weights in VMEM).
    def rep(shape):
        return pl.BlockSpec(shape, lambda i: (0,) * len(shape),
                            pipeline_mode=pl.Buffered(1))

    out = pl.pallas_call(
        partial(prenet_kernel, Bt=Bt, T=T, K=K),
        out_shape=jax.ShapeDtypeStruct((B, T, Hpad), x.dtype),
        grid=(B // Bt,),
        in_specs=[
            pl.BlockSpec((Bt, T, C), lambda i: (i, 0, 0)),
            rep((K * C, C)), rep((1, C)),
            rep((K * C, C)), rep((1, C)),
            rep((K * C, C)), rep((1, C)),
            rep((C, Hpad)), rep((1, Hpad)),
        ],
        out_specs=pl.BlockSpec((Bt, T, Hpad), lambda i: (i, 0, 0)),
        scratch_shapes=[pltpu.VMEM((slab_rows, C), jnp.bfloat16)],
        compiler_params=pltpu.CompilerParams(
            dimension_semantics=("parallel",)),
    )(x, w1, s1, w2, s2, w3, s3, wp, bp)
    # Pick hidden_size as a multiple of 128 (then Hpad == H and this is a
    # no-op); otherwise the consumer should ideally take the lane-padded slab.
    return out if Hpad == H else out[:, :, :H]


# --------------------------------------------------------------------------
# Parameter construction: mirrors the PyTorch module's init, then folds
# BatchNorm (eval) into the conv weights and pre-unfolds the K taps.
# --------------------------------------------------------------------------
def init_params(key, emb, hidden, K):
    assert K % 2 == 1
    eps = 1e-5
    hpad = ((hidden + 127) // 128) * 128
    blocks = []
    for _ in range(3):
        key, k_w, k_b = jax.random.split(key, 3)
        # nn.Conv1d weight (out, in, K), xavier_uniform with relu gain
        gain = jnp.sqrt(2.0)
        fan = emb * K
        a = gain * jnp.sqrt(6.0 / (fan + fan))
        w = jax.random.uniform(k_w, (emb, emb, K), jnp.float32, -a, a)
        bound = 1.0 / jnp.sqrt(float(emb * K))
        bias = jax.random.uniform(k_b, (emb,), jnp.float32, -bound, bound)
        # BatchNorm1d (fresh module, eval mode): gamma=1 beta=0 mean=0 var=1
        gamma = jnp.ones((emb,), jnp.float32)
        beta = jnp.zeros((emb,), jnp.float32)
        mean = jnp.zeros((emb,), jnp.float32)
        var = jnp.ones((emb,), jnp.float32)
        scale = gamma / jnp.sqrt(var + eps)
        # unfold taps: (K, C_in, C_out) -> (K*C_in, C_out); fold BN scale in
        w_unf = jnp.transpose(w, (2, 1, 0)).reshape(K * emb, emb)
        w_folded = (w_unf * scale[None, :]).astype(jnp.bfloat16)
        shift = ((bias - mean) * scale + beta).reshape(1, emb)   # f32
        blocks.append((w_folded, shift))

    key, k_w, k_b = jax.random.split(key, 3)
    bound = 1.0 / jnp.sqrt(float(emb))
    w_proj = jax.random.uniform(k_w, (emb, hidden), jnp.float32, -bound, bound)
    b_proj = jax.random.uniform(k_b, (hidden,), jnp.float32, -bound, bound)
    # lane-pad the projection so the kernel's output store is lane-dense
    w_proj = jnp.pad(w_proj, ((0, 0), (0, hpad - hidden))).astype(jnp.bfloat16)
    b_proj = jnp.pad(b_proj, ((0, hpad - hidden),)).reshape(1, hpad)
    return {"blocks": blocks, "w_proj": w_proj, "b_proj": b_proj,
            "K": K, "hidden": hidden}


# --------------------------------------------------------------------------
# Pure-JAX reference (same bf16-operand / f32-accumulate arithmetic)
# --------------------------------------------------------------------------
def encoder_prenet_ref(x, params):
    K = params["K"]
    pad = (K - 1) // 2
    H = params["hidden"]
    act = x
    for (w, s) in params["blocks"]:
        B, T, C = act.shape
        a16 = act.astype(jnp.bfloat16)
        xpad = jnp.pad(a16, ((0, 0), (pad, pad), (0, 0)))
        xunf = jnp.concatenate([xpad[:, k:k + T, :] for k in range(K)], axis=-1)
        y = jnp.einsum("btc,cd->btd", xunf, w,
                       preferred_element_type=jnp.float32)
        act = jnp.maximum(y + s, 0.0)
    a16 = act.astype(jnp.bfloat16)
    out = jnp.einsum("btc,ch->bth", a16, params["w_proj"],
                     preferred_element_type=jnp.float32) + params["b_proj"]
    return out[:, :, :H]


if __name__ == "__main__":
    # Small demo shapes: hidden is a multiple of 128 so no wrapper-side slice.
    B, T, EMB, HIDDEN, K = 16, 16, 128, 256, 5
    key = jax.random.PRNGKey(0)
    key, kx = jax.random.split(key)
    x = jax.random.normal(kx, (B, T, EMB), jnp.float32)   # (B, T, emb)

    params = init_params(key, EMB, HIDDEN, K)

    out = jax.block_until_ready(encoder_prenet(x, params))
    ref = encoder_prenet_ref(x, params)

    assert out.shape == (B, T, HIDDEN), out.shape
    max_err = float(jnp.max(jnp.abs(out - ref)))
    assert jnp.allclose(out, ref, atol=2e-2, rtol=2e-2), max_err

    print("KERNEL_OK")
</pallas_src>

<mosaic_0001>
module attributes {stable_mosaic.version = 11 : i64} {
  func.func @prenet_kernel(%arg0: i32, %arg1: memref<8x16x128xf32, #tpu.memory_space<vmem>>, %arg2: memref<640x128xbf16, #tpu.memory_space<vmem>>, %arg3: memref<1x128xf32, #tpu.memory_space<vmem>>, %arg4: memref<640x128xbf16, #tpu.memory_space<vmem>>, %arg5: memref<1x128xf32, #tpu.memory_space<vmem>>, %arg6: memref<640x128xbf16, #tpu.memory_space<vmem>>, %arg7: memref<1x128xf32, #tpu.memory_space<vmem>>, %arg8: memref<128x256xbf16, #tpu.memory_space<vmem>>, %arg9: memref<1x256xf32, #tpu.memory_space<vmem>>, %arg10: memref<8x16x256xf32, #tpu.memory_space<vmem>>, %arg11: memref<272x128xbf16, #tpu.memory_space<vmem>>) attributes {dimension_semantics = [#tpu.dimension_semantics<parallel>], iteration_bounds = array<i64: 2>, scalar_prefetch = 0 : i64, scratch_operands = 1 : i64, tpu.core_type = #tpu.core_type<tc>, window_params = [{transform_indices = @transform_0, window_bounds = array<i64: 8, 16, 128>}, {pipeline_mode = #tpu.pipeline_mode<synchronous>, transform_indices = @transform_1, window_bounds = array<i64: 640, 128>}, {pipeline_mode = #tpu.pipeline_mode<synchronous>, transform_indices = @transform_2, window_bounds = array<i64: 1, 128>}, {pipeline_mode = #tpu.pipeline_mode<synchronous>, transform_indices = @transform_3, window_bounds = array<i64: 640, 128>}, {pipeline_mode = #tpu.pipeline_mode<synchronous>, transform_indices = @transform_4, window_bounds = array<i64: 1, 128>}, {pipeline_mode = #tpu.pipeline_mode<synchronous>, transform_indices = @transform_5, window_bounds = array<i64: 640, 128>}, {pipeline_mode = #tpu.pipeline_mode<synchronous>, transform_indices = @transform_6, window_bounds = array<i64: 1, 128>}, {pipeline_mode = #tpu.pipeline_mode<synchronous>, transform_indices = @transform_7, window_bounds = array<i64: 128, 256>}, {pipeline_mode = #tpu.pipeline_mode<synchronous>, transform_indices = @transform_8, window_bounds = array<i64: 1, 256>}, {transform_indices = @transform_9, window_bounds = array<i64: 8, 16, 256>}]} {
    %cst = arith.constant 0.000000e+00 : bf16
    %0 = vector.broadcast %cst : bf16 to vector<16x128xbf16>
    %c0 = arith.constant 0 : index
    %c0_0 = arith.constant 0 : index
    %1 = vector.load %arg11[%c0, %c0_0] : memref<272x128xbf16, #tpu.memory_space<vmem>>, vector<16x128xbf16>
    tpu.vector_store %arg11[%c0, %c0_0], %0 {strides = array<i32>} : memref<272x128xbf16, #tpu.memory_space<vmem>>, vector<16x128xbf16>,
    %c32 = arith.constant 32 : index
    %c0_1 = arith.constant 0 : index
    %2 = vector.load %arg11[%c32, %c0_1] : memref<272x128xbf16, #tpu.memory_space<vmem>>, vector<16x128xbf16>
    tpu.vector_store %arg11[%c32, %c0_1], %0 {strides = array<i32>} : memref<272x128xbf16, #tpu.memory_space<vmem>>, vector<16x128xbf16>,
    %c64 = arith.constant 64 : index
    %c0_2 = arith.constant 0 : index
    %3 = vector.load %arg11[%c64, %c0_2] : memref<272x128xbf16, #tpu.memory_space<vmem>>, vector<16x128xbf16>
    tpu.vector_store %arg11[%c64, %c0_2], %0 {strides = array<i32>} : memref<272x128xbf16, #tpu.memory_space<vmem>>, vector<16x128xbf16>,
    %c96 = arith.constant 96 : index
    %c0_3 = arith.constant 0 : index
    %4 = vector.load %arg11[%c96, %c0_3] : memref<272x128xbf16, #tpu.memory_space<vmem>>, vector<16x128xbf16>
    tpu.vector_store %arg11[%c96, %c0_3], %0 {strides = array<i32>} : memref<272x128xbf16, #tpu.memory_space<vmem>>, vector<16x128xbf16>,
    %c128 = arith.constant 128 : index
    %c0_4 = arith.constant 0 : index
    %5 = vector.load %arg11[%c128, %c0_4] : memref<272x128xbf16, #tpu.memory_space<vmem>>, vector<16x128xbf16>
    tpu.vector_store %arg11[%c128, %c0_4], %0 {strides = array<i32>} : memref<272x128xbf16, #tpu.memory_space<vmem>>, vector<16x128xbf16>,
    %c160 = arith.constant 160 : index
    %c0_5 = arith.constant 0 : index
    %6 = vector.load %arg11[%c160, %c0_5] : memref<272x128xbf16, #tpu.memory_space<vmem>>, vector<16x128xbf16>
    tpu.vector_store %arg11[%c160, %c0_5], %0 {strides = array<i32>} : memref<272x128xbf16, #tpu.memory_space<vmem>>, vector<16x128xbf16>,
    %c192 = arith.constant 192 : index
    %c0_6 = arith.constant 0 : index
    %7 = vector.load %arg11[%c192, %c0_6] : memref<272x128xbf16, #tpu.memory_space<vmem>>, vector<16x128xbf16>
    tpu.vector_store %arg11[%c192, %c0_6], %0 {strides = array<i32>} : memref<272x128xbf16, #tpu.memory_space<vmem>>, vector<16x128xbf16>,
    %c224 = arith.constant 224 : index
    %c0_7 = arith.constant 0 : index
    %8 = vector.load %arg11[%c224, %c0_7] : memref<272x128xbf16, #tpu.memory_space<vmem>>, vector<16x128xbf16>
    tpu.vector_store %arg11[%c224, %c0_7], %0 {strides = array<i32>} : memref<272x128xbf16, #tpu.memory_space<vmem>>, vector<16x128xbf16>,
    %c256 = arith.constant 256 : index
    %c0_8 = arith.constant 0 : index
    %9 = vector.load %arg11[%c256, %c0_8] : memref<272x128xbf16, #tpu.memory_space<vmem>>, vector<16x128xbf16>
    tpu.vector_store %arg11[%c256, %c0_8], %0 {strides = array<i32>} : memref<272x128xbf16, #tpu.memory_space<vmem>>, vector<16x128xbf16>,
    %c0_9 = arith.constant 0 : index
    %c0_10 = arith.constant 0 : index
    %c0_11 = arith.constant 0 : index
    %10 = vector.load %arg1[%c0_9, %c0_10, %c0_11] : memref<8x16x128xf32, #tpu.memory_space<vmem>>, vector<1x16x128xf32>
    %11 = vector.shape_cast %10 : vector<1x16x128xf32> to vector<16x128xf32>
    %12 = arith.truncf %11 : vector<16x128xf32> to vector<16x128xbf16>
    %c16 = arith.constant 16 : index
    %c0_12 = arith.constant 0 : index
    %13 = vector.load %arg11[%c16, %c0_12] : memref<272x128xbf16, #tpu.memory_space<vmem>>, vector<16x128xbf16>
    tpu.vector_store %arg11[%c16, %c0_12], %12 {strides = array<i32>} : memref<272x128xbf16, #tpu.memory_space<vmem>>, vector<16x128xbf16>,
    %c1 = arith.constant 1 : index
    %c0_13 = arith.constant 0 : index
    %c0_14 = arith.constant 0 : index
    %14 = vector.load %arg1[%c1, %c0_13, %c0_14] : memref<8x16x128xf32, #tpu.memory_space<vmem>>, vector<1x16x128xf32>
    %15 = vector.shape_cast %14 : vector<1x16x128xf32> to vector<16x128xf32>
    %16 = arith.truncf %15 : vector<16x128xf32> to vector<16x128xbf16>
    %c48 = arith.constant 48 : index
    %c0_15 = arith.constant 0 : index
    %17 = vector.load %arg11[%c48, %c0_15] : memref<272x128xbf16, #tpu.memory_space<vmem>>, vector<16x128xbf16>
    tpu.vector_store %arg11[%c48, %c0_15], %16 {strides = array<i32>} : memref<272x128xbf16, #tpu.memory_space<vmem>>, vector<16x128xbf16>,
    %c2 = arith.constant 2 : index
    %c0_16 = arith.constant 0 : index
    %c0_17 = arith.constant 0 : index
    %18 = vector.load %arg1[%c2, %c0_16, %c0_17] : memref<8x16x128xf32, #tpu.memory_space<vmem>>, vector<1x16x128xf32>
    %19 = vector.shape_cast %18 : vector<1x16x128xf32> to vector<16x128xf32>
    %20 = arith.truncf %19 : vector<16x128xf32> to vector<16x128xbf16>
    %c80 = arith.constant 80 : index
    %c0_18 = arith.constant 0 : index
    %21 = vector.load %arg11[%c80, %c0_18] : memref<272x128xbf16, #tpu.memory_space<vmem>>, vector<16x128xbf16>
    tpu.vector_store %arg11[%c80, %c0_18], %20 {strides = array<i32>} : memref<272x128xbf16, #tpu.memory_space<vmem>>, vector<16x128xbf16>,
    %c3 = arith.constant 3 : index
    %c0_19 = arith.constant 0 : index
    %c0_20 = arith.constant 0 : index
    %22 = vector.load %arg1[%c3, %c0_19, %c0_20] : memref<8x16x128xf32, #tpu.memory_space<vmem>>, vector<1x16x128xf32>
    %23 = vector.shape_cast %22 : vector<1x16x128xf32> to vector<16x128xf32>
    %24 = arith.truncf %23 : vector<16x128xf32> to vector<16x128xbf16>
    %c112 = arith.constant 112 : index
    %c0_21 = arith.constant 0 : index
    %25 = vector.load %arg11[%c112, %c0_21] : memref<272x128xbf16, #tpu.memory_space<vmem>>, vector<16x128xbf16>
    tpu.vector_store %arg11[%c112, %c0_21], %24 {strides = array<i32>} : memref<272x128xbf16, #tpu.memory_space<vmem>>, vector<16x128xbf16>,
    %c4 = arith.constant 4 : index
    %c0_22 = arith.constant 0 : index
    %c0_23 = arith.constant 0 : index
    %26 = vector.load %arg1[%c4, %c0_22, %c0_23] : memref<8x16x128xf32, #tpu.memory_space<vmem>>, vector<1x16x128xf32>
    %27 = vector.shape_cast %26 : vector<1x16x128xf32> to vector<16x128xf32>
    %28 = arith.truncf %27 : vector<16x128xf32> to vector<16x128xbf16>
    %c144 = arith.constant 144 : index
    %c0_24 = arith.constant 0 : index
    %29 = vector.load %arg11[%c144, %c0_24] : memref<272x128xbf16, #tpu.memory_space<vmem>>, vector<16x128xbf16>
    tpu.vector_store %arg11[%c144, %c0_24], %28 {strides = array<i32>} : memref<272x128xbf16, #tpu.memory_space<vmem>>, vector<16x128xbf16>,
    %c5 = arith.constant 5 : index
    %c0_25 = arith.constant 0 : index
    %c0_26 = arith.constant 0 : index
    %30 = vector.load %arg1[%c5, %c0_25, %c0_26] : memref<8x16x128xf32, #tpu.memory_space<vmem>>, vector<1x16x128xf32>
    %31 = vector.shape_cast %30 : vector<1x16x128xf32> to vector<16x128xf32>
    %32 = arith.truncf %31 : vector<16x128xf32> to vector<16x128xbf16>
    %c176 = arith.constant 176 : index
    %c0_27 = arith.constant 0 : index
    %33 = vector.load %arg11[%c176, %c0_27] : memref<272x128xbf16, #tpu.memory_space<vmem>>, vector<16x128xbf16>
    tpu.vector_store %arg11[%c176, %c0_27], %32 {strides = array<i32>} : memref<272x128xbf16, #tpu.memory_space<vmem>>, vector<16x128xbf16>,
    %c6 = arith.constant 6 : index
    %c0_28 = arith.constant 0 : index
    %c0_29 = arith.constant 0 : index
    %34 = vector.load %arg1[%c6, %c0_28, %c0_29] : memref<8x16x128xf32, #tpu.memory_space<vmem>>, vector<1x16x128xf32>
    %35 = vector.shape_cast %34 : vector<1x16x128xf32> to vector<16x128xf32>
    %36 = arith.truncf %35 : vector<16x128xf32> to vector<16x128xbf16>
    %c208 = arith.constant 208 : index
    %c0_30 = arith.constant 0 : index
    %37 = vector.load %arg11[%c208, %c0_30] : memref<272x128xbf16, #tpu.memory_space<vmem>>, vector<16x128xbf16>
    tpu.vector_store %arg11[%c208, %c0_30], %36 {strides = array<i32>} : memref<272x128xbf16, #tpu.memory_space<vmem>>, vector<16x128xbf16>,
    %c7 = arith.constant 7 : index
    %c0_31 = arith.constant 0 : index
    %c0_32 = arith.constant 0 : index
    %38 = vector.load %arg1[%c7, %c0_31, %c0_32] : memref<8x16x128xf32, #tpu.memory_space<vmem>>, vector<1x16x128xf32>
    %39 = vector.shape_cast %38 : vector<1x16x128xf32> to vector<16x128xf32>
    %40 = arith.truncf %39 : vector<16x128xf32> to vector<16x128xbf16>
    %c240 = arith.constant 240 : index
    %c0_33 = arith.constant 0 : index
    %41 = vector.load %arg11[%c240, %c0_33] : memref<272x128xbf16, #tpu.memory_space<vmem>>, vector<16x128xbf16>
    tpu.vector_store %arg11[%c240, %c0_33], %40 {strides = array<i32>} : memref<272x128xbf16, #tpu.memory_space<vmem>>, vector<16x128xbf16>,
    %c14 = arith.constant 14 : index
    %c0_34 = arith.constant 0 : index
    %42 = vector.load %arg11[%c14, %c0_34] : memref<272x128xbf16, #tpu.memory_space<vmem>>, vector<16x128xbf16>
    %c46 = arith.constant 46 : index
    %c0_35 = arith.constant 0 : index
    %43 = vector.load %arg11[%c46, %c0_35] : memref<272x128xbf16, #tpu.memory_space<vmem>>, vector<16x128xbf16>
    %c78 = arith.constant 78 : index
    %c0_36 = arith.constant 0 : index
    %44 = vector.load %arg11[%c78, %c0_36] : memref<272x128xbf16, #tpu.memory_space<vmem>>, vector<16x128xbf16>
    %c110 = arith.constant 110 : index
    %c0_37 = arith.constant 0 : index
    %45 = vector.load %arg11[%c110, %c0_37] : memref<272x128xbf16, #tpu.memory_space<vmem>>, vector<16x128xbf16>
    %c142 = arith.constant 142 : index
    %c0_38 = arith.constant 0 : index
    %46 = vector.load %arg11[%c142, %c0_38] : memref<272x128xbf16, #tpu.memory_space<vmem>>, vector<16x128xbf16>
    %c174 = arith.constant 174 : index
    %c0_39 = arith.constant 0 : index
    %47 = vector.load %arg11[%c174, %c0_39] : memref<272x128xbf16, #tpu.memory_space<vmem>>, vector<16x128xbf16>
    %c206 = arith.constant 206 : index
    %c0_40 = arith.constant 0 : index
    %48 = vector.load %arg11[%c206, %c0_40] : memref<272x128xbf16, #tpu.memory_space<vmem>>, vector<16x128xbf16>
    %c238 = arith.constant 238 : index
    %c0_41 = arith.constant 0 : index
    %49 = vector.load %arg11[%c238, %c0_41] : memref<272x128xbf16, #tpu.memory_space<vmem>>, vector<16x128xbf16>
    %50 = tpu.concatenate %42, %43, %44, %45, %46, %47, %48, %49 in 0 : vector<16x128xbf16>, vector<16x128xbf16>, vector<16x128xbf16>, vector<16x128xbf16>, vector<16x128xbf16>, vector<16x128xbf16>, vector<16x128xbf16>, vector<16x128xbf16> -> vector<128x128xbf16>
    %c15 = arith.constant 15 : index
    %c0_42 = arith.constant 0 : index
    %51 = vector.load %arg11[%c15, %c0_42] : memref<272x128xbf16, #tpu.memory_space<vmem>>, vector<16x128xbf16>
    %c47 = arith.constant 47 : index
    %c0_43 = arith.constant 0 : index
    %52 = vector.load %arg11[%c47, %c0_43] : memref<272x128xbf16, #tpu.memory_space<vmem>>, vector<16x128xbf16>
    %c79 = arith.constant 79 : index
    %c0_44 = arith.constant 0 : index
    %53 = vector.load %arg11[%c79, %c0_44] : memref<272x128xbf16, #tpu.memory_space<vmem>>, vector<16x128xbf16>
    %c111 = arith.constant 111 : index
    %c0_45 = arith.constant 0 : index
    %54 = vector.load %arg11[%c111, %c0_45] : memref<272x128xbf16, #tpu.memory_space<vmem>>, vector<16x128xbf16>
    %c143 = arith.constant 143 : index
    %c0_46 = arith.constant 0 : index
    %55 = vector.load %arg11[%c143, %c0_46] : memref<272x128xbf16, #tpu.memory_space<vmem>>, vector<16x128xbf16>
    %c175 = arith.constant 175 : index
    %c0_47 = arith.constant 0 : index
    %56 = vector.load %arg11[%c175, %c0_47] : memref<272x128xbf16, #tpu.memory_space<vmem>>, vector<16x128xbf16>
    %c207 = arith.constant 207 : index
    %c0_48 = arith.constant 0 : index
    %57 = vector.load %arg11[%c207, %c0_48] : memref<272x128xbf16, #tpu.memory_space<vmem>>, vector<16x128xbf16>
    %c239 = arith.constant 239 : index
    %c0_49 = arith.constant 0 : index
    %58 = vector.load %arg11[%c239, %c0_49] : memref<272x128xbf16, #tpu.memory_space<vmem>>, vector<16x128xbf16>
    %59 = tpu.concatenate %51, %52, %53, %54, %55, %56, %57, %58 in 0 : vector<16x128xbf16>, vector<16x128xbf16>, vector<16x128xbf16>, vector<16x128xbf16>, vector<16x128xbf16>, vector<16x128xbf16>, vector<16x128xbf16>, vector<16x128xbf16> -> vector<128x128xbf16>
    %c16_50 = arith.constant 16 : index
    %c0_51 = arith.constant 0 : index
    %60 = vector.load %arg11[%c16_50, %c0_51] : memref<272x128xbf16, #tpu.memory_space<vmem>>, vector<16x128xbf16>
    %c48_52 = arith.constant 48 : index
    %c0_53 = arith.constant 0 : index
    %61 = vector.load %arg11[%c48_52, %c0_53] : memref<272x128xbf16, #tpu.memory_space<vmem>>, vector<16x128xbf16>
    %c80_54 = arith.constant 80 : index
    %c0_55 = arith.constant 0 : index
    %62 = vector.load %arg11[%c80_54, %c0_55] : memref<272x128xbf16, #tpu.memory_space<vmem>>, vector<16x128xbf16>
    %c112_56 = arith.constant 112 : index
    %c0_57 = arith.constant 0 : index
    %63 = vector.load %arg11[%c112_56, %c0_57] : memref<272x128xbf16, #tpu.memory_space<vmem>>, vector<16x128xbf16>
    %c144_58 = arith.constant 144 : index
    %c0_59 = arith.constant 0 : index
    %64 = vector.load %arg11[%c144_58, %c0_59] : memref<272x128xbf16, #tpu.memory_space<vmem>>, vector<16x128xbf16>
    %c176_60 = arith.constant 176 : index
    %c0_61 = arith.constant 0 : index
    %65 = vector.load %arg11[%c176_60, %c0_61] : memref<272x128xbf16, #tpu.memory_space<vmem>>, vector<16x128xbf16>
    %c208_62 = arith.constant 208 : index
    %c0_63 = arith.constant 0 : index
    %66 = vector.load %arg11[%c208_62, %c0_63] : memref<272x128xbf16, #tpu.memory_space<vmem>>, vector<16x128xbf16>
    %c240_64 = arith.constant 240 : index
    %c0_65 = arith.constant 0 : index
    %67 = vector.load %arg11[%c240_64, %c0_65] : memref<272x128xbf16, #tpu.memory_space<vmem>>, vector<16x128xbf16>
    %68 = tpu.concatenate %60, %61, %62, %63, %64, %65, %66, %67 in 0 : vector<16x128xbf16>, vector<16x128xbf16>, vector<16x128xbf16>, vector<16x128xbf16>, vector<16x128xbf16>, vector<16x128xbf16>, vector<16x128xbf16>, vector<16x128xbf16> -> vector<128x128xbf16>
    %c17 = arith.constant 17 : index
    %c0_66 = arith.constant 0 : index
    %69 = vector.load %arg11[%c17, %c0_66] : memref<272x128xbf16, #tpu.memory_space<vmem>>, vector<16x128xbf16>
    %c49 = arith.constant 49 : index
    %c0_67 = arith.constant 0 : index
    %70 = vector.load %arg11[%c49, %c0_67] : memref<272x128xbf16, #tpu.memory_space<vmem>>, vector<16x128xbf16>
    %c81 = arith.constant 81 : index
    %c0_68 = arith.constant 0 : index
    %71 = vector.load %arg11[%c81, %c0_68] : memref<272x128xbf16, #tpu.memory_space<vmem>>, vector<16x128xbf16>
    %c113 = arith.constant 113 : index
    %c0_69 = arith.constant 0 : index
    %72 = vector.load %arg11[%c113, %c0_69] : memref<272x128xbf16, #tpu.memory_space<vmem>>, vector<16x128xbf16>
    %c145 = arith.constant 145 : index
    %c0_70 = arith.constant 0 : index
    %73 = vector.load %arg11[%c145, %c0_70] : memref<272x128xbf16, #tpu.memory_space<vmem>>, vector<16x128xbf16>
    %c177 = arith.constant 177 : index
    %c0_71 = arith.constant 0 : index
    %74 = vector.load %arg11[%c177, %c0_71] : memref<272x128xbf16, #tpu.memory_space<vmem>>, vector<16x128xbf16>
    %c209 = arith.constant 209 : index
    %c0_72 = arith.constant 0 : index
    %75 = vector.load %arg11[%c209, %c0_72] : memref<272x128xbf16, #tpu.memory_space<vmem>>, vector<16x128xbf16>
    %c241 = arith.constant 241 : index
    %c0_73 = arith.constant 0 : index
    %76 = vector.load %arg11[%c241, %c0_73] : memref<272x128xbf16, #tpu.memory_space<vmem>>, vector<16x128xbf16>
    %77 = tpu.concatenate %69, %70, %71, %72, %73, %74, %75, %76 in 0 : vector<16x128xbf16>, vector<16x128xbf16>, vector<16x128xbf16>, vector<16x128xbf16>, vector<16x128xbf16>, vector<16x128xbf16>, vector<16x128xbf16>, vector<16x128xbf16> -> vector<128x128xbf16>
    %c18 = arith.constant 18 : index
    %c0_74 = arith.constant 0 : index
    %78 = vector.load %arg11[%c18, %c0_74] : memref<272x128xbf16, #tpu.memory_space<vmem>>, vector<16x128xbf16>
    %c50 = arith.constant 50 : index
    %c0_75 = arith.constant 0 : index
    %79 = vector.load %arg11[%c50, %c0_75] : memref<272x128xbf16, #tpu.memory_space<vmem>>, vector<16x128xbf16>
    %c82 = arith.constant 82 : index
    %c0_76 = arith.constant 0 : index
    %80 = vector.load %arg11[%c82, %c0_76] : memref<272x128xbf16, #tpu.memory_space<vmem>>, vector<16x128xbf16>
    %c114 = arith.constant 114 : index
    %c0_77 = arith.constant 0 : index
    %81 = vector.load %arg11[%c114, %c0_77] : memref<272x128xbf16, #tpu.memory_space<vmem>>, vector<16x128xbf16>
    %c146 = arith.constant 146 : index
    %c0_78 = arith.constant 0 : index
    %82 = vector.load %arg11[%c146, %c0_78] : memref<272x128xbf16, #tpu.memory_space<vmem>>, vector<16x128xbf16>
    %c178 = arith.constant 178 : index
    %c0_79 = arith.constant 0 : index
    %83 = vector.load %arg11[%c178, %c0_79] : memref<272x128xbf16, #tpu.memory_space<vmem>>, vector<16x128xbf16>
    %c210 = arith.constant 210 : index
    %c0_80 = arith.constant 0 : index
    %84 = vector.load %arg11[%c210, %c0_80] : memref<272x128xbf16, #tpu.memory_space<vmem>>, vector<16x128xbf16>
    %c242 = arith.constant 242 : index
    %c0_81 = arith.constant 0 : index
    %85 = vector.load %arg11[%c242, %c0_81] : memref<272x128xbf16, #tpu.memory_space<vmem>>, vector<16x128xbf16>
    %86 = tpu.concatenate %78, %79, %80, %81, %82, %83, %84, %85 in 0 : vector<16x128xbf16>, vector<16x128xbf16>, vector<16x128xbf16>, vector<16x128xbf16>, vector<16x128xbf16>, vector<16x128xbf16>, vector<16x128xbf16>, vector<16x128xbf16> -> vector<128x128xbf16>
    %87 = tpu.concatenate %50, %59, %68, %77, %86 in 1 : vector<128x128xbf16>, vector<128x128xbf16>, vector<128x128xbf16>, vector<128x128xbf16>, vector<128x128xbf16> -> vector<128x640xbf16>
    %c0_82 = arith.constant 0 : index
    %c0_83 = arith.constant 0 : index
    %88 = vector.load %arg2[%c0_82, %c0_83] : memref<640x128xbf16, #tpu.memory_space<vmem>>, vector<640x128xbf16>
    %cst_84 = arith.constant dense<0.000000e+00> : vector<128x128xf32>
    %89 = tpu.matmul %87, %88, %cst_84 {dimension_numbers = #tpu.dot_dimension_numbers<[1], [0], [0], [1], [0, 0, 1, 1], [], []>} : vector<128x640xbf16>, vector<640x128xbf16>, vector<128x128xf32> -> vector<128x128xf32>
    %c0_85 = arith.constant 0 : index
    %c0_86 = arith.constant 0 : index
    %90 = vector.load %arg3[%c0_85, %c0_86] : memref<1x128xf32, #tpu.memory_space<vmem>>, vector<1x128xf32>
    %91 = vector.broadcast %90 : vector<1x128xf32> to vector<128x128xf32>
    %92 = arith.addf %89, %91 : vector<128x128xf32>
    %cst_87 = arith.constant 0.000000e+00 : f32
    %93 = vector.broadcast %cst_87 : f32 to vector<128x128xf32>
    %94 = arith.maximumf %92, %93 : vector<128x128xf32>
    %95 = arith.truncf %94 : vector<128x128xf32> to vector<128x128xbf16>
    %96 = vector.extract_strided_slice %95 {offsets = [0, 0], sizes = [16, 128], strides = [1, 1]} : vector<128x128xbf16> to vector<16x128xbf16>
    %c16_88 = arith.constant 16 : index
    %c0_89 = arith.constant 0 : index
    %97 = vector.load %arg11[%c16_88, %c0_89] : memref<272x128xbf16, #tpu.memory_space<vmem>>, vector<16x128xbf16>
    tpu.vector_store %arg11[%c16_88, %c0_89], %96 {strides = array<i32>} : memref<272x128xbf16, #tpu.memory_space<vmem>>, vector<16x128xbf16>,
    %98 = vector.extract_strided_slice %95 {offsets = [16, 0], sizes = [16, 128], strides = [1, 1]} : vector<128x128xbf16> to vector<16x128xbf16>
    %c48_90 = arith.constant 48 : index
    %c0_91 = arith.constant 0 : index
    %99 = vector.load %arg11[%c48_90, %c0_91] : memref<272x128xbf16, #tpu.memory_space<vmem>>, vector<16x128xbf16>
    tpu.vector_store %arg11[%c48_90, %c0_91], %98 {strides = array<i32>} : memref<272x128xbf16, #tpu.memory_space<vmem>>, vector<16x128xbf16>,
    %100 = vector.extract_strided_slice %95 {offsets = [32, 0], sizes = [16, 128], strides = [1, 1]} : vector<128x128xbf16> to vector<16x128xbf16>
    %c80_92 = arith.constant 80 : index
    %c0_93 = arith.constant 0 : index
    %101 = vector.load %arg11[%c80_92, %c0_93] : memref<272x128xbf16, #tpu.memory_space<vmem>>, vector<16x128xbf16>
    tpu.vector_store %arg11[%c80_92, %c0_93], %100 {strides = array<i32>} : memref<272x128xbf16, #tpu.memory_space<vmem>>, vector<16x128xbf16>,
    %102 = vector.extract_strided_slice %95 {offsets = [48, 0], sizes = [16, 128], strides = [1, 1]} : vector<128x128xbf16> to vector<16x128xbf16>
    %c112_94 = arith.constant 112 : index
    %c0_95 = arith.constant 0 : index
    %103 = vector.load %arg11[%c112_94, %c0_95] : memref<272x128xbf16, #tpu.memory_space<vmem>>, vector<16x128xbf16>
    tpu.vector_store %arg11[%c112_94, %c0_95], %102 {strides = array<i32>} : memref<272x128xbf16, #tpu.memory_space<vmem>>, vector<16x128xbf16>,
    %104 = vector.extract_strided_slice %95 {offsets = [64, 0], sizes = [16, 128], strides = [1, 1]} : vector<128x128xbf16> to vector<16x128xbf16>
    %c144_96 = arith.constant 144 : index
    %c0_97 = arith.constant 0 : index
    %105 = vector.load %arg11[%c144_96, %c0_97] : memref<272x128xbf16, #tpu.memory_space<vmem>>, vector<16x128xbf16>
    tpu.vector_store %arg11[%c144_96, %c0_97], %104 {strides = array<i32>} : memref<272x128xbf16, #tpu.memory_space<vmem>>, vector<16x128xbf16>,
    %106 = vector.extract_strided_slice %95 {offsets = [80, 0], sizes = [16, 128], strides = [1, 1]} : vector<128x128xbf16> to vector<16x128xbf16>
    %c176_98 = arith.constant 176 : index
    %c0_99 = arith.constant 0 : index
    %107 = vector.load %arg11[%c176_98, %c0_99] : memref<272x128xbf16, #tpu.memory_space<vmem>>, vector<16x128xbf16>
    tpu.vector_store %arg11[%c176_98, %c0_99], %106 {strides = array<i32>} : memref<272x128xbf16, #tpu.memory_space<vmem>>, vector<16x128xbf16>,
    %108 = vector.extract_strided_slice %95 {offsets = [96, 0], sizes = [16, 128], strides = [1, 1]} : vector<128x128xbf16> to vector<16x128xbf16>
    %c208_100 = arith.constant 208 : index
    %c0_101 = arith.constant 0 : index
    %109 = vector.load %arg11[%c208_100, %c0_101] : memref<272x128xbf16, #tpu.memory_space<vmem>>, vector<16x128xbf16>
    tpu.vector_store %arg11[%c208_100, %c0_101], %108 {strides = array<i32>} : memref<272x128xbf16, #tpu.memory_space<vmem>>, vector<16x128xbf16>,
    %110 = vector.extract_strided_slice %95 {offsets = [112, 0], sizes = [16, 128], strides = [1, 1]} : vector<128x128xbf16> to vector<16x128xbf16>
    %c240_102 = arith.constant 240 : index
    %c0_103 = arith.constant 0 : index
    %111 = vector.load %arg11[%c240_102, %c0_103] : memref<272x128xbf16, #tpu.memory_space<vmem>>, vector<16x128xbf16>
    tpu.vector_store %arg11[%c240_102, %c0_103], %110 {strides = array<i32>} : memref<272x128xbf16, #tpu.memory_space<vmem>>, vector<16x128xbf16>,
    %c14_104 = arith.constant 14 : index
    %c0_105 = arith.constant 0 : index
    %112 = vector.load %arg11[%c14_104, %c0_105] : memref<272x128xbf16, #tpu.memory_space<vmem>>, vector<16x128xbf16>
    %c46_106 = arith.constant 46 : index
    %c0_107 = arith.constant 0 : index
    %113 = vector.load %arg11[%c46_106, %c0_107] : memref<272x128xbf16, #tpu.memory_space<vmem>>, vector<16x128xbf16>
    %c78_108 = arith.constant 78 : index
    %c0_109 = arith.constant 0 : index
    %114 = vector.load %arg11[%c78_108, %c0_109] : memref<272x128xbf16, #tpu.memory_space<vmem>>, vector<16x128xbf16>
    %c110_110 = arith.constant 110 : index
    %c0_111 = arith.constant 0 : index
    %115 = vector.load %arg11[%c110_110, %c0_111] : memref<272x128xbf16, #tpu.memory_space<vmem>>, vector<16x128xbf16>
    %c142_112 = arith.constant 142 : index
    %c0_113 = arith.constant 0 : index
    %116 = vector.load %arg11[%c142_112, %c0_113] : memref<272x128xbf16, #tpu.memory_space<vmem>>, vector<16x128xbf16>
    %c174_114 = arith.constant 174 : index
    %c0_115 = arith.constant 0 : index
    %117 = vector.load %arg11[%c174_114, %c0_115] : memref<272x128xbf16, #tpu.memory_space<vmem>>, vector<16x128xbf16>
    %c206_116 = arith.constant 206 : index
    %c0_117 = arith.constant 0 : index
    %118 = vector.load %arg11[%c206_116, %c0_117] : memref<272x128xbf16, #tpu.memory_space<vmem>>, vector<16x128xbf16>
    %c238_118 = arith.constant 238 : index
    %c0_119 = arith.constant 0 : index
    %119 = vector.load %arg11[%c238_118, %c0_119] : memref<272x128xbf16, #tpu.memory_space<vmem>>, vector<16x128xbf16>
    %120 = tpu.concatenate %112, %113, %114, %115, %116, %117, %118, %119 in 0 : vector<16x128xbf16>, vector<16x128xbf16>, vector<16x128xbf16>, vector<16x128xbf16>, vector<16x128xbf16>, vector<16x128xbf16>, vector<16x128xbf16>, vector<16x128xbf16> -> vector<128x128xbf16>
    %c15_120 = arith.constant 15 : index
    %c0_121 = arith.constant 0 : index
    %121 = vector.load %arg11[%c15_120, %c0_121] : memref<272x128xbf16, #tpu.memory_space<vmem>>, vector<16x128xbf16>
    %c47_122 = arith.constant 47 : index
    %c0_123 = arith.constant 0 : index
    %122 = vector.load %arg11[%c47_122, %c0_123] : memref<272x128xbf16, #tpu.memory_space<vmem>>, vector<16x128xbf16>
    %c79_124 = arith.constant 79 : index
    %c0_125 = arith.constant 0 : index
    %123 = vector.load %arg11[%c79_124, %c0_125] : memref<272x128xbf16, #tpu.memory_space<vmem>>, vector<16x128xbf16>
    %c111_126 = arith.constant 111 : index
    %c0_127 = arith.constant 0 : index
    %124 = vector.load %arg11[%c111_126, %c0_127] : memref<272x128xbf16, #tpu.memory_space<vmem>>, vector<16x128xbf16>
    %c143_128 = arith.constant 143 : index
    %c0_129 = arith.constant 0 : index
    %125 = vector.load %arg11[%c143_128, %c0_129] : memref<272x128xbf16, #tpu.memory_space<vmem>>, vector<16x128xbf16>
    %c175_130 = arith.constant 175 : index
    %c0_131 = arith.constant 0 : index
    %126 = vector.load %arg11[%c175_130, %c0_131] : memref<272x128xbf16, #tpu.memory_space<vmem>>, vector<16x128xbf16>
    %c207_132 = arith.constant 207 : index
    %c0_133 = arith.constant 0 : index
    %127 = vector.load %arg11[%c207_132, %c0_133] : memref<272x128xbf16, #tpu.memory_space<vmem>>, vector<16x128xbf16>
    %c239_134 = arith.constant 239 : index
    %c0_135 = arith.constant 0 : index
    %128 = vector.load %arg11[%c239_134, %c0_135] : memref<272x128xbf16, #tpu.memory_space<vmem>>, vector<16x128xbf16>
    %129 = tpu.concatenate %121, %122, %123, %124, %125, %126, %127, %128 in 0 : vector<16x128xbf16>, vector<16x128xbf16>, vector<16x128xbf16>, vector<16x128xbf16>, vector<16x128xbf16>, vector<16x128xbf16>, vector<16x128xbf16>, vector<16x128xbf16> -> vector<128x128xbf16>
    %c16_136 = arith.constant 16 : index
    %c0_137 = arith.constant 0 : index
    %130 = vector.load %arg11[%c16_136, %c0_137] : memref<272x128xbf16, #tpu.memory_space<vmem>>, vector<16x128xbf16>
    %c48_138 = arith.constant 48 : index
    %c0_139 = arith.constant 0 : index
    %131 = vector.load %arg11[%c48_138, %c0_139] : memref<272x128xbf16, #tpu.memory_space<vmem>>, vector<16x128xbf16>
    %c80_140 = arith.constant 80 : index
    %c0_141 = arith.constant 0 : index
    %132 = vector.load %arg11[%c80_140, %c0_141] : memref<272x128xbf16, #tpu.memory_space<vmem>>, vector<16x128xbf16>
    %c112_142 = arith.constant 112 : index
    %c0_143 = arith.constant 0 : index
    %133 = vector.load %arg11[%c112_142, %c0_143] : memref<272x128xbf16, #tpu.memory_space<vmem>>, vector<16x128xbf16>
    %c144_144 = arith.constant 144 : index
    %c0_145 = arith.constant 0 : index
    %134 = vector.load %arg11[%c144_144, %c0_145] : memref<272x128xbf16, #tpu.memory_space<vmem>>, vector<16x128xbf16>
    %c176_146 = arith.constant 176 : index
    %c0_147 = arith.constant 0 : index
    %135 = vector.load %arg11[%c176_146, %c0_147] : memref<272x128xbf16, #tpu.memory_space<vmem>>, vector<16x128xbf16>
    %c208_148 = arith.constant 208 : index
    %c0_149 = arith.constant 0 : index
    %136 = vector.load %arg11[%c208_148, %c0_149] : memref<272x128xbf16, #tpu.memory_space<vmem>>, vector<16x128xbf16>
    %c240_150 = arith.constant 240 : index
    %c0_151 = arith.constant 0 : index
    %137 = vector.load %arg11[%c240_150, %c0_151] : memref<272x128xbf16, #tpu.memory_space<vmem>>, vector<16x128xbf16>
    %138 = tpu.concatenate %130, %131, %132, %133, %134, %135, %136, %137 in 0 : vector<16x128xbf16>, vector<16x128xbf16>, vector<16x128xbf16>, vector<16x128xbf16>, vector<16x128xbf16>, vector<16x128xbf16>, vector<16x128xbf16>, vector<16x128xbf16> -> vector<128x128xbf16>
    %c17_152 = arith.constant 17 : index
    %c0_153 = arith.constant 0 : index
    %139 = vector.load %arg11[%c17_152, %c0_153] : memref<272x128xbf16, #tpu.memory_space<vmem>>, vector<16x128xbf16>
    %c49_154 = arith.constant 49 : index
    %c0_155 = arith.constant 0 : index
    %140 = vector.load %arg11[%c49_154, %c0_155] : memref<272x128xbf16, #tpu.memory_space<vmem>>, vector<16x128xbf16>
    %c81_156 = arith.constant 81 : index
    %c0_157 = arith.constant 0 : index
    %141 = vector.load %arg11[%c81_156, %c0_157] : memref<272x128xbf16, #tpu.memory_space<vmem>>, vector<16x128xbf16>
    %c113_158 = arith.constant 113 : index
    %c0_159 = arith.constant 0 : index
    %142 = vector.load %arg11[%c113_158, %c0_159] : memref<272x128xbf16, #tpu.memory_space<vmem>>, vector<16x128xbf16>
    %c145_160 = arith.constant 145 : index
    %c0_161 = arith.constant 0 : index
    %143 = vector.load %arg11[%c145_160, %c0_161] : memref<272x128xbf16, #tpu.memory_space<vmem>>, vector<16x128xbf16>
    %c177_162 = arith.constant 177 : index
    %c0_163 = arith.constant 0 : index
    %144 = vector.load %arg11[%c177_162, %c0_163] : memref<272x128xbf16, #tpu.memory_space<vmem>>, vector<16x128xbf16>
    %c209_164 = arith.constant 209 : index
    %c0_165 = arith.constant 0 : index
    %145 = vector.load %arg11[%c209_164, %c0_165] : memref<272x128xbf16, #tpu.memory_space<vmem>>, vector<16x128xbf16>
    %c241_166 = arith.constant 241 : index
    %c0_167 = arith.constant 0 : index
    %146 = vector.load %arg11[%c241_166, %c0_167] : memref<272x128xbf16, #tpu.memory_space<vmem>>, vector<16x128xbf16>
    %147 = tpu.concatenate %139, %140, %141, %142, %143, %144, %145, %146 in 0 : vector<16x128xbf16>, vector<16x128xbf16>, vector<16x128xbf16>, vector<16x128xbf16>, vector<16x128xbf16>, vector<16x128xbf16>, vector<16x128xbf16>, vector<16x128xbf16> -> vector<128x128xbf16>
    %c18_168 = arith.constant 18 : index
    %c0_169 = arith.constant 0 : index
    %148 = vector.load %arg11[%c18_168, %c0_169] : memref<272x128xbf16, #tpu.memory_space<vmem>>, vector<16x128xbf16>
    %c50_170 = arith.constant 50 : index
    %c0_171 = arith.constant 0 : index
    %149 = vector.load %arg11[%c50_170, %c0_171] : memref<272x128xbf16, #tpu.memory_space<vmem>>, vector<16x128xbf16>
    %c82_172 = arith.constant 82 : index
    %c0_173 = arith.constant 0 : index
    %150 = vector.load %arg11[%c82_172, %c0_173] : memref<272x128xbf16, #tpu.memory_space<vmem>>, vector<16x128xbf16>
    %c114_174 = arith.constant 114 : index
    %c0_175 = arith.constant 0 : index
    %151 = vector.load %arg11[%c114_174, %c0_175] : memref<272x128xbf16, #tpu.memory_space<vmem>>, vector<16x128xbf16>
    %c146_176 = arith.constant 146 : index
    %c0_177 = arith.constant 0 : index
    %152 = vector.load %arg11[%c146_176, %c0_177] : memref<272x128xbf16, #tpu.memory_space<vmem>>, vector<16x128xbf16>
    %c178_178 = arith.constant 178 : index
    %c0_179 = arith.constant 0 : index
    %153 = vector.load %arg11[%c178_178, %c0_179] : memref<272x128xbf16, #tpu.memory_space<vmem>>, vector<16x128xbf16>
    %c210_180 = arith.constant 210 : index
    %c0_181 = arith.constant 0 : index
    %154 = vector.load %arg11[%c210_180, %c0_181] : memref<272x128xbf16, #tpu.memory_space<vmem>>, vector<16x128xbf16>
    %c242_182 = arith.constant 242 : index
    %c0_183 = arith.constant 0 : index
    %155 = vector.load %arg11[%c242_182, %c0_183] : memref<272x128xbf16, #tpu.memory_space<vmem>>, vector<16x128xbf16>
    %156 = tpu.concatenate %148, %149, %150, %151, %152, %153, %154, %155 in 0 : vector<16x128xbf16>, vector<16x128xbf16>, vector<16x128xbf16>, vector<16x128xbf16>, vector<16x128xbf16>, vector<16x128xbf16>, vector<16x128xbf16>, vector<16x128xbf16> -> vector<128x128xbf16>
    %157 = tpu.concatenate %120, %129, %138, %147, %156 in 1 : vector<128x128xbf16>, vector<128x128xbf16>, vector<128x128xbf16>, vector<128x128xbf16>, vector<128x128xbf16> -> vector<128x640xbf16>
    %c0_184 = arith.constant 0 : index
    %c0_185 = arith.constant 0 : index
    %158 = vector.load %arg4[%c0_184, %c0_185] : memref<640x128xbf16, #tpu.memory_space<vmem>>, vector<640x128xbf16>
    %cst_186 = arith.constant dense<0.000000e+00> : vector<128x128xf32>
    %159 = tpu.matmul %157, %158, %cst_186 {dimension_numbers = #tpu.dot_dimension_numbers<[1], [0], [0], [1], [0, 0, 1, 1], [], []>} : vector<128x640xbf16>, vector<640x128xbf16>, vector<128x128xf32> -> vector<128x128xf32>
    %c0_187 = arith.constant 0 : index
    %c0_188 = arith.constant 0 : index
    %160 = vector.load %arg5[%c0_187, %c0_188] : memref<1x128xf32, #tpu.memory_space<vmem>>, vector<1x128xf32>
    %161 = vector.broadcast %160 : vector<1x128xf32> to vector<128x128xf32>
    %162 = arith.addf %159, %161 : vector<128x128xf32>
    %cst_189 = arith.constant 0.000000e+00 : f32
    %163 = vector.broadcast %cst_189 : f32 to vector<128x128xf32>
    %164 = arith.maximumf %162, %163 : vector<128x128xf32>
    %165 = arith.truncf %164 : vector<128x128xf32> to vector<128x128xbf16>
    %166 = vector.extract_strided_slice %165 {offsets = [0, 0], sizes = [16, 128], strides = [1, 1]} : vector<128x128xbf16> to vector<16x128xbf16>
    %c16_190 = arith.constant 16 : index
    %c0_191 = arith.constant 0 : index
    %167 = vector.load %arg11[%c16_190, %c0_191] : memref<272x128xbf16, #tpu.memory_space<vmem>>, vector<16x128xbf16>
    tpu.vector_store %arg11[%c16_190, %c0_191], %166 {strides = array<i32>} : memref<272x128xbf16, #tpu.memory_space<vmem>>, vector<16x128xbf16>,
    %168 = vector.extract_strided_slice %165 {offsets = [16, 0], sizes = [16, 128], strides = [1, 1]} : vector<128x128xbf16> to vector<16x128xbf16>
    %c48_192 = arith.constant 48 : index
    %c0_193 = arith.constant 0 : index
    %169 = vector.load %arg11[%c48_192, %c0_193] : memref<272x128xbf16, #tpu.memory_space<vmem>>, vector<16x128xbf16>
    tpu.vector_store %arg11[%c48_192, %c0_193], %168 {strides = array<i32>} : memref<272x128xbf16, #tpu.memory_space<vmem>>, vector<16x128xbf16>,
    %170 = vector.extract_strided_slice %165 {offsets = [32, 0], sizes = [16, 128], strides = [1, 1]} : vector<128x128xbf16> to vector<16x128xbf16>
    %c80_194 = arith.constant 80 : index
    %c0_195 = arith.constant 0 : index
    %171 = vector.load %arg11[%c80_194, %c0_195] : memref<272x128xbf16, #tpu.memory_space<vmem>>, vector<16x128xbf16>
    tpu.vector_store %arg11[%c80_194, %c0_195], %170 {strides = array<i32>} : memref<272x128xbf16, #tpu.memory_space<vmem>>, vector<16x128xbf16>,
    %172 = vector.extract_strided_slice %165 {offsets = [48, 0], sizes = [16, 128], strides = [1, 1]} : vector<128x128xbf16> to vector<16x128xbf16>
    %c112_196 = arith.constant 112 : index
    %c0_197 = arith.constant 0 : index
    %173 = vector.load %arg11[%c112_196, %c0_197] : memref<272x128xbf16, #tpu.memory_space<vmem>>, vector<16x128xbf16>
    tpu.vector_store %arg11[%c112_196, %c0_197], %172 {strides = array<i32>} : memref<272x128xbf16, #tpu.memory_space<vmem>>, vector<16x128xbf16>,
    %174 = vector.extract_strided_slice %165 {offsets = [64, 0], sizes = [16, 128], strides = [1, 1]} : vector<128x128xbf16> to vector<16x128xbf16>
    %c144_198 = arith.constant 144 : index
    %c0_199 = arith.constant 0 : index
    %175 = vector.load %arg11[%c144_198, %c0_199] : memref<272x128xbf16, #tpu.memory_space<vmem>>, vector<16x128xbf16>
    tpu.vector_store %arg11[%c144_198, %c0_199], %174 {strides = array<i32>} : memref<272x128xbf16, #tpu.memory_space<vmem>>, vector<16x128xbf16>,
    %176 = vector.extract_strided_slice %165 {offsets = [80, 0], sizes = [16, 128], strides = [1, 1]} : vector<128x128xbf16> to vector<16x128xbf16>
    %c176_200 = arith.constant 176 : index
    %c0_201 = arith.constant 0 : index
    %177 = vector.load %arg11[%c176_200, %c0_201] : memref<272x128xbf16, #tpu.memory_space<vmem>>, vector<16x128xbf16>
    tpu.vector_store %arg11[%c176_200, %c0_201], %176 {strides = array<i32>} : memref<272x128xbf16, #tpu.memory_space<vmem>>, vector<16x128xbf16>,
    %178 = vector.extract_strided_slice %165 {offsets = [96, 0], sizes = [16, 128], strides = [1, 1]} : vector<128x128xbf16> to vector<16x128xbf16>
    %c208_202 = arith.constant 208 : index
    %c0_203 = arith.constant 0 : index
    %179 = vector.load %arg11[%c208_202, %c0_203] : memref<272x128xbf16, #tpu.memory_space<vmem>>, vector<16x128xbf16>
    tpu.vector_store %arg11[%c208_202, %c0_203], %178 {strides = array<i32>} : memref<272x128xbf16, #tpu.memory_space<vmem>>, vector<16x128xbf16>,
    %180 = vector.extract_strided_slice %165 {offsets = [112, 0], sizes = [16, 128], strides = [1, 1]} : vector<128x128xbf16> to vector<16x128xbf16>
    %c240_204 = arith.constant 240 : index
    %c0_205 = arith.constant 0 : index
    %181 = vector.load %arg11[%c240_204, %c0_205] : memref<272x128xbf16, #tpu.memory_space<vmem>>, vector<16x128xbf16>
    tpu.vector_store %arg11[%c240_204, %c0_205], %180 {strides = array<i32>} : memref<272x128xbf16, #tpu.memory_space<vmem>>, vector<16x128xbf16>,
    %c14_206 = arith.constant 14 : index
    %c0_207 = arith.constant 0 : index
    %182 = vector.load %arg11[%c14_206, %c0_207] : memref<272x128xbf16, #tpu.memory_space<vmem>>, vector<16x128xbf16>
    %c46_208 = arith.constant 46 : index
    %c0_209 = arith.constant 0 : index
    %183 = vector.load %arg11[%c46_208, %c0_209] : memref<272x128xbf16, #tpu.memory_space<vmem>>, vector<16x128xbf16>
    %c78_210 = arith.constant 78 : index
    %c0_211 = arith.constant 0 : index
    %184 = vector.load %arg11[%c78_210, %c0_211] : memref<272x128xbf16, #tpu.memory_space<vmem>>, vector<16x128xbf16>
    %c110_212 = arith.constant 110 : index
    %c0_213 = arith.constant 0 : index
    %185 = vector.load %arg11[%c110_212, %c0_213] : memref<272x128xbf16, #tpu.memory_space<vmem>>, vector<16x128xbf16>
    %c142_214 = arith.constant 142 : index
    %c0_215 = arith.constant 0 : index
    %186 = vector.load %arg11[%c142_214, %c0_215] : memref<272x128xbf16, #tpu.memory_space<vmem>>, vector<16x128xbf16>
    %c174_216 = arith.constant 174 : index
    %c0_217 = arith.constant 0 : index
    %187 = vector.load %arg11[%c174_216, %c0_217] : memref<272x128xbf16, #tpu.memory_space<vmem>>, vector<16x128xbf16>
    %c206_218 = arith.constant 206 : index
    %c0_219 = arith.constant 0 : index
    %188 = vector.load %arg11[%c206_218, %c0_219] : memref<272x128xbf16, #tpu.memory_space<vmem>>, vector<16x128xbf16>
    %c238_220 = arith.constant 238 : index
    %c0_221 = arith.constant 0 : index
    %189 = vector.load %arg11[%c238_220, %c0_221] : memref<272x128xbf16, #tpu.memory_space<vmem>>, vector<16x128xbf16>
    %190 = tpu.concatenate %182, %183, %184, %185, %186, %187, %188, %189 in 0 : vector<16x128xbf16>, vector<16x128xbf16>, vector<16x128xbf16>, vector<16x128xbf16>, vector<16x128xbf16>, vector<16x128xbf16>, vector<16x128xbf16>, vector<16x128xbf16> -> vector<128x128xbf16>
    %c15_222 = arith.constant 15 : index
    %c0_223 = arith.constant 0 : index
    %191 = vector.load %arg11[%c15_222, %c0_223] : memref<272x128xbf16, #tpu.memory_space<vmem>>, vector<16x128xbf16>
    %c47_224 = arith.constant 47 : index
    %c0_225 = arith.constant 0 : index
    %192 = vector.load %arg11[%c47_224, %c0_225] : memref<272x128xbf16, #tpu.memory_space<vmem>>, vector<16x128xbf16>
    %c79_226 = arith.constant 79 : index
    %c0_227 = arith.constant 0 : index
    %193 = vector.load %arg11[%c79_226, %c0_227] : memref<272x128xbf16, #tpu.memory_space<vmem>>, vector<16x128xbf16>
    %c111_228 = arith.constant 111 : index
    %c0_229 = arith.constant 0 : index
    %194 = vector.load %arg11[%c111_228, %c0_229] : memref<272x128xbf16, #tpu.memory_space<vmem>>, vector<16x128xbf16>
    %c143_230 = arith.constant 143 : index
    %c0_231 = arith.constant 0 : index
    %195 = vector.load %arg11[%c143_230, %c0_231] : memref<272x128xbf16, #tpu.memory_space<vmem>>, vector<16x128xbf16>
    %c175_232 = arith.constant 175 : index
    %c0_233 = arith.constant 0 : index
    %196 = vector.load %arg11[%c175_232, %c0_233] : memref<272x128xbf16, #tpu.memory_space<vmem>>, vector<16x128xbf16>
    %c207_234 = arith.constant 207 : index
    %c0_235 = arith.constant 0 : index
    %197 = vector.load %arg11[%c207_234, %c0_235] : memref<272x128xbf16, #tpu.memory_space<vmem>>, vector<16x128xbf16>
    %c239_236 = arith.constant 239 : index
    %c0_237 = arith.constant 0 : index
    %198 = vector.load %arg11[%c239_236, %c0_237] : memref<272x128xbf16, #tpu.memory_space<vmem>>, vector<16x128xbf16>
    %199 = tpu.concatenate %191, %192, %193, %194, %195, %196, %197, %198 in 0 : vector<16x128xbf16>, vector<16x128xbf16>, vector<16x128xbf16>, vector<16x128xbf16>, vector<16x128xbf16>, vector<16x128xbf16>, vector<16x128xbf16>, vector<16x128xbf16> -> vector<128x128xbf16>
    %c16_238 = arith.constant 16 : index
    %c0_239 = arith.constant 0 : index
    %200 = vector.load %arg11[%c16_238, %c0_239] : memref<272x128xbf16, #tpu.memory_space<vmem>>, vector<16x128xbf16>
    %c48_240 = arith.constant 48 : index
    %c0_241 = arith.constant 0 : index
    %201 = vector.load %arg11[%c48_240, %c0_241] : memref<272x128xbf16, #tpu.memory_space<vmem>>, vector<16x128xbf16>
    %c80_242 = arith.constant 80 : index
    %c0_243 = arith.constant 0 : index
    %202 = vector.load %arg11[%c80_242, %c0_243] : memref<272x128xbf16, #tpu.memory_space<vmem>>, vector<16x128xbf16>
    %c112_244 = arith.constant 112 : index
    %c0_245 = arith.constant 0 : index
    %203 = vector.load %arg11[%c112_244, %c0_245] : memref<272x128xbf16, #tpu.memory_space<vmem>>, vector<16x128xbf16>
    %c144_246 = arith.constant 144 : index
    %c0_247 = arith.constant 0 : index
    %204 = vector.load %arg11[%c144_246, %c0_247] : memref<272x128xbf16, #tpu.memory_space<vmem>>, vector<16x128xbf16>
    %c176_248 = arith.constant 176 : index
    %c0_249 = arith.constant 0 : index
    %205 = vector.load %arg11[%c176_248, %c0_249] : memref<272x128xbf16, #tpu.memory_space<vmem>>, vector<16x128xbf16>
    %c208_250 = arith.constant 208 : index
    %c0_251 = arith.constant 0 : index
    %206 = vector.load %arg11[%c208_250, %c0_251] : memref<272x128xbf16, #tpu.memory_space<vmem>>, vector<16x128xbf16>
    %c240_252 = arith.constant 240 : index
    %c0_253 = arith.constant 0 : index
    %207 = vector.load %arg11[%c240_252, %c0_253] : memref<272x128xbf16, #tpu.memory_space<vmem>>, vector<16x128xbf16>
    %208 = tpu.concatenate %200, %201, %202, %203, %204, %205, %206, %207 in 0 : vector<16x128xbf16>, vector<16x128xbf16>, vector<16x128xbf16>, vector<16x128xbf16>, vector<16x128xbf16>, vector<16x128xbf16>, vector<16x128xbf16>, vector<16x128xbf16> -> vector<128x128xbf16>
    %c17_254 = arith.constant 17 : index
    %c0_255 = arith.constant 0 : index
    %209 = vector.load %arg11[%c17_254, %c0_255] : memref<272x128xbf16, #tpu.memory_space<vmem>>, vector<16x128xbf16>
    %c49_256 = arith.constant 49 : index
    %c0_257 = arith.constant 0 : index
    %210 = vector.load %arg11[%c49_256, %c0_257] : memref<272x128xbf16, #tpu.memory_space<vmem>>, vector<16x128xbf16>
    %c81_258 = arith.constant 81 : index
    %c0_259 = arith.constant 0 : index
    %211 = vector.load %arg11[%c81_258, %c0_259] : memref<272x128xbf16, #tpu.memory_space<vmem>>, vector<16x128xbf16>
    %c113_260 = arith.constant 113 : index
    %c0_261 = arith.constant 0 : index
    %212 = vector.load %arg11[%c113_260, %c0_261] : memref<272x128xbf16, #tpu.memory_space<vmem>>, vector<16x128xbf16>
    %c145_262 = arith.constant 145 : index
    %c0_263 = arith.constant 0 : index
    %213 = vector.load %arg11[%c145_262, %c0_263] : memref<272x128xbf16, #tpu.memory_space<vmem>>, vector<16x128xbf16>
    %c177_264 = arith.constant 177 : index
    %c0_265 = arith.constant 0 : index
    %214 = vector.load %arg11[%c177_264, %c0_265] : memref<272x128xbf16, #tpu.memory_space<vmem>>, vector<16x128xbf16>
    %c209_266 = arith.constant 209 : index
    %c0_267 = arith.constant 0 : index
    %215 = vector.load %arg11[%c209_266, %c0_267] : memref<272x128xbf16, #tpu.memory_space<vmem>>, vector<16x128xbf16>
    %c241_268 = arith.constant 241 : index
    %c0_269 = arith.constant 0 : index
    %216 = vector.load %arg11[%c241_268, %c0_269] : memref<272x128xbf16, #tpu.memory_space<vmem>>, vector<16x128xbf16>
    %217 = tpu.concatenate %209, %210, %211, %212, %213, %214, %215, %216 in 0 : vector<16x128xbf16>, vector<16x128xbf16>, vector<16x128xbf16>, vector<16x128xbf16>, vector<16x128xbf16>, vector<16x128xbf16>, vector<16x128xbf16>, vector<16x128xbf16> -> vector<128x128xbf16>
    %c18_270 = arith.constant 18 : index
    %c0_271 = arith.constant 0 : index
    %218 = vector.load %arg11[%c18_270, %c0_271] : memref<272x128xbf16, #tpu.memory_space<vmem>>, vector<16x128xbf16>
    %c50_272 = arith.constant 50 : index
    %c0_273 = arith.constant 0 : index
    %219 = vector.load %arg11[%c50_272, %c0_273] : memref<272x128xbf16, #tpu.memory_space<vmem>>, vector<16x128xbf16>
    %c82_274 = arith.constant 82 : index
    %c0_275 = arith.constant 0 : index
    %220 = vector.load %arg11[%c82_274, %c0_275] : memref<272x128xbf16, #tpu.memory_space<vmem>>, vector<16x128xbf16>
    %c114_276 = arith.constant 114 : index
    %c0_277 = arith.constant 0 : index
    %221 = vector.load %arg11[%c114_276, %c0_277] : memref<272x128xbf16, #tpu.memory_space<vmem>>, vector<16x128xbf16>
    %c146_278 = arith.constant 146 : index
    %c0_279 = arith.constant 0 : index
    %222 = vector.load %arg11[%c146_278, %c0_279] : memref<272x128xbf16, #tpu.memory_space<vmem>>, vector<16x128xbf16>
    %c178_280 = arith.constant 178 : index
    %c0_281 = arith.constant 0 : index
    %223 = vector.load %arg11[%c178_280, %c0_281] : memref<272x128xbf16, #tpu.memory_space<vmem>>, vector<16x128xbf16>
    %c210_282 = arith.constant 210 : index
    %c0_283 = arith.constant 0 : index
    %224 = vector.load %arg11[%c210_282, %c0_283] : memref<272x128xbf16, #tpu.memory_space<vmem>>, vector<16x128xbf16>
    %c242_284 = arith.constant 242 : index
    %c0_285 = arith.constant 0 : index
    %225 = vector.load %arg11[%c242_284, %c0_285] : memref<272x128xbf16, #tpu.memory_space<vmem>>, vector<16x128xbf16>
    %226 = tpu.concatenate %218, %219, %220, %221, %222, %223, %224, %225 in 0 : vector<16x128xbf16>, vector<16x128xbf16>, vector<16x128xbf16>, vector<16x128xbf16>, vector<16x128xbf16>, vector<16x128xbf16>, vector<16x128xbf16>, vector<16x128xbf16> -> vector<128x128xbf16>
    %227 = tpu.concatenate %190, %199, %208, %217, %226 in 1 : vector<128x128xbf16>, vector<128x128xbf16>, vector<128x128xbf16>, vector<128x128xbf16>, vector<128x128xbf16> -> vector<128x640xbf16>
    %c0_286 = arith.constant 0 : index
    %c0_287 = arith.constant 0 : index
    %228 = vector.load %arg6[%c0_286, %c0_287] : memref<640x128xbf16, #tpu.memory_space<vmem>>, vector<640x128xbf16>
    %cst_288 = arith.constant dense<0.000000e+00> : vector<128x128xf32>
    %229 = tpu.matmul %227, %228, %cst_288 {dimension_numbers = #tpu.dot_dimension_numbers<[1], [0], [0], [1], [0, 0, 1, 1], [], []>} : vector<128x640xbf16>, vector<640x128xbf16>, vector<128x128xf32> -> vector<128x128xf32>
    %c0_289 = arith.constant 0 : index
    %c0_290 = arith.constant 0 : index
    %230 = vector.load %arg7[%c0_289, %c0_290] : memref<1x128xf32, #tpu.memory_space<vmem>>, vector<1x128xf32>
    %231 = vector.broadcast %230 : vector<1x128xf32> to vector<128x128xf32>
    %232 = arith.addf %229, %231 : vector<128x128xf32>
    %cst_291 = arith.constant 0.000000e+00 : f32
    %233 = vector.broadcast %cst_291 : f32 to vector<128x128xf32>
    %234 = arith.maximumf %232, %233 : vector<128x128xf32>
    %235 = arith.truncf %234 : vector<128x128xf32> to vector<128x128xbf16>
    %c0_292 = arith.constant 0 : index
    %c0_293 = arith.constant 0 : index
    %236 = vector.load %arg8[%c0_292, %c0_293] : memref<128x256xbf16, #tpu.memory_space<vmem>>, vector<128x256xbf16>
    %cst_294 = arith.constant dense<0.000000e+00> : vector<128x256xf32>
    %237 = tpu.matmul %235, %236, %cst_294 {dimension_numbers = #tpu.dot_dimension_numbers<[1], [0], [0], [1], [0, 0, 1, 1], [], []>} : vector<128x128xbf16>, vector<128x256xbf16>, vector<128x256xf32> -> vector<128x256xf32>
    %c0_295 = arith.constant 0 : index
    %c0_296 = arith.constant 0 : index
    %238 = vector.load %arg9[%c0_295, %c0_296] : memref<1x256xf32, #tpu.memory_space<vmem>>, vector<1x256xf32>
    %239 = vector.broadcast %238 : vector<1x256xf32> to vector<128x256xf32>
    %240 = arith.addf %237, %239 : vector<128x256xf32>
    %241 = vector.extract_strided_slice %240 {offsets = [0, 0], sizes = [16, 256], strides = [1, 1]} : vector<128x256xf32> to vector<16x256xf32>
    %c0_297 = arith.constant 0 : index
    %c0_298 = arith.constant 0 : index
    %c0_299 = arith.constant 0 : index
    %242 = vector.load %arg10[%c0_297, %c0_298, %c0_299] : memref<8x16x256xf32, #tpu.memory_space<vmem>>, vector<1x16x256xf32>
    %243 = vector.shape_cast %242 : vector<1x16x256xf32> to vector<16x256xf32>
    %244 = vector.shape_cast %241 : vector<16x256xf32> to vector<1x16x256xf32>
    tpu.vector_store %arg10[%c0_297, %c0_298, %c0_299], %244 {strides = array<i32>} : memref<8x16x256xf32, #tpu.memory_space<vmem>>, vector<1x16x256xf32>,
    %245 = vector.extract_strided_slice %240 {offsets = [16, 0], sizes = [16, 256], strides = [1, 1]} : vector<128x256xf32> to vector<16x256xf32>
    %c1_300 = arith.constant 1 : index
    %c0_301 = arith.constant 0 : index
    %c0_302 = arith.constant 0 : index
    %246 = vector.load %arg10[%c1_300, %c0_301, %c0_302] : memref<8x16x256xf32, #tpu.memory_space<vmem>>, vector<1x16x256xf32>
    %247 = vector.shape_cast %246 : vector<1x16x256xf32> to vector<16x256xf32>
    %248 = vector.shape_cast %245 : vector<16x256xf32> to vector<1x16x256xf32>
    tpu.vector_store %arg10[%c1_300, %c0_301, %c0_302], %248 {strides = array<i32>} : memref<8x16x256xf32, #tpu.memory_space<vmem>>, vector<1x16x256xf32>,
    %249 = vector.extract_strided_slice %240 {offsets = [32, 0], sizes = [16, 256], strides = [1, 1]} : vector<128x256xf32> to vector<16x256xf32>
    %c2_303 = arith.constant 2 : index
    %c0_304 = arith.constant 0 : index
    %c0_305 = arith.constant 0 : index
    %250 = vector.load %arg10[%c2_303, %c0_304, %c0_305] : memref<8x16x256xf32, #tpu.memory_space<vmem>>, vector<1x16x256xf32>
    %251 = vector.shape_cast %250 : vector<1x16x256xf32> to vector<16x256xf32>
    %252 = vector.shape_cast %249 : vector<16x256xf32> to vector<1x16x256xf32>
    tpu.vector_store %arg10[%c2_303, %c0_304, %c0_305], %252 {strides = array<i32>} : memref<8x16x256xf32, #tpu.memory_space<vmem>>, vector<1x16x256xf32>,
    %253 = vector.extract_strided_slice %240 {offsets = [48, 0], sizes = [16, 256], strides = [1, 1]} : vector<128x256xf32> to vector<16x256xf32>
    %c3_306 = arith.constant 3 : index
    %c0_307 = arith.constant 0 : index
    %c0_308 = arith.constant 0 : index
    %254 = vector.load %arg10[%c3_306, %c0_307, %c0_308] : memref<8x16x256xf32, #tpu.memory_space<vmem>>, vector<1x16x256xf32>
    %255 = vector.shape_cast %254 : vector<1x16x256xf32> to vector<16x256xf32>
    %256 = vector.shape_cast %253 : vector<16x256xf32> to vector<1x16x256xf32>
    tpu.vector_store %arg10[%c3_306, %c0_307, %c0_308], %256 {strides = array<i32>} : memref<8x16x256xf32, #tpu.memory_space<vmem>>, vector<1x16x256xf32>,
    %257 = vector.extract_strided_slice %240 {offsets = [64, 0], sizes = [16, 256], strides = [1, 1]} : vector<128x256xf32> to vector<16x256xf32>
    %c4_309 = arith.constant 4 : index
    %c0_310 = arith.constant 0 : index
    %c0_311 = arith.constant 0 : index
    %258 = vector.load %arg10[%c4_309, %c0_310, %c0_311] : memref<8x16x256xf32, #tpu.memory_space<vmem>>, vector<1x16x256xf32>
    %259 = vector.shape_cast %258 : vector<1x16x256xf32> to vector<16x256xf32>
    %260 = vector.shape_cast %257 : vector<16x256xf32> to vector<1x16x256xf32>
    tpu.vector_store %arg10[%c4_309, %c0_310, %c0_311], %260 {strides = array<i32>} : memref<8x16x256xf32, #tpu.memory_space<vmem>>, vector<1x16x256xf32>,
    %261 = vector.extract_strided_slice %240 {offsets = [80, 0], sizes = [16, 256], strides = [1, 1]} : vector<128x256xf32> to vector<16x256xf32>
    %c5_312 = arith.constant 5 : index
    %c0_313 = arith.constant 0 : index
    %c0_314 = arith.constant 0 : index
    %262 = vector.load %arg10[%c5_312, %c0_313, %c0_314] : memref<8x16x256xf32, #tpu.memory_space<vmem>>, vector<1x16x256xf32>
    %263 = vector.shape_cast %262 : vector<1x16x256xf32> to vector<16x256xf32>
    %264 = vector.shape_cast %261 : vector<16x256xf32> to vector<1x16x256xf32>
    tpu.vector_store %arg10[%c5_312, %c0_313, %c0_314], %264 {strides = array<i32>} : memref<8x16x256xf32, #tpu.memory_space<vmem>>, vector<1x16x256xf32>,
    %265 = vector.extract_strided_slice %240 {offsets = [96, 0], sizes = [16, 256], strides = [1, 1]} : vector<128x256xf32> to vector<16x256xf32>
    %c6_315 = arith.constant 6 : index
    %c0_316 = arith.constant 0 : index
    %c0_317 = arith.constant 0 : index
    %266 = vector.load %arg10[%c6_315, %c0_316, %c0_317] : memref<8x16x256xf32, #tpu.memory_space<vmem>>, vector<1x16x256xf32>
    %267 = vector.shape_cast %266 : vector<1x16x256xf32> to vector<16x256xf32>
    %268 = vector.shape_cast %265 : vector<16x256xf32> to vector<1x16x256xf32>
    tpu.vector_store %arg10[%c6_315, %c0_316, %c0_317], %268 {strides = array<i32>} : memref<8x16x256xf32, #tpu.memory_space<vmem>>, vector<1x16x256xf32>,
    %269 = vector.extract_strided_slice %240 {offsets = [112, 0], sizes = [16, 256], strides = [1, 1]} : vector<128x256xf32> to vector<16x256xf32>
    %c7_318 = arith.constant 7 : index
    %c0_319 = arith.constant 0 : index
    %c0_320 = arith.constant 0 : index
    %270 = vector.load %arg10[%c7_318, %c0_319, %c0_320] : memref<8x16x256xf32, #tpu.memory_space<vmem>>, vector<1x16x256xf32>
    %271 = vector.shape_cast %270 : vector<1x16x256xf32> to vector<16x256xf32>
    %272 = vector.shape_cast %269 : vector<16x256xf32> to vector<1x16x256xf32>
    tpu.vector_store %arg10[%c7_318, %c0_319, %c0_320], %272 {strides = array<i32>} : memref<8x16x256xf32, #tpu.memory_space<vmem>>, vector<1x16x256xf32>,
    return
  }
  func.func @transform_0(%arg0: i32) -> (i32, i32, i32) {
    %c0_i32 = arith.constant 0 : i32
    %c0_i32_0 = arith.constant 0 : i32
    %c0_i32_1 = arith.constant 0 : i32
    return %arg0, %c0_i32, %c0_i32_0 : i32, i32, i32
  }
  func.func @transform_1(%arg0: i32) -> (i32, i32) {
    %c0_i32 = arith.constant 0 : i32
    %c0_i32_0 = arith.constant 0 : i32
    %c0_i32_1 = arith.constant 0 : i32
    return %c0_i32, %c0_i32_0 : i32, i32
  }
  func.func @transform_2(%arg0: i32) -> (i32, i32) {
    %c0_i32 = arith.constant 0 : i32
    %c0_i32_0 = arith.constant 0 : i32
    %c0_i32_1 = arith.constant 0 : i32
    return %c0_i32, %c0_i32_0 : i32, i32
  }
  func.func @transform_3(%arg0: i32) -> (i32, i32) {
    %c0_i32 = arith.constant 0 : i32
    %c0_i32_0 = arith.constant 0 : i32
    %c0_i32_1 = arith.constant 0 : i32
    return %c0_i32, %c0_i32_0 : i32, i32
  }
  func.func @transform_4(%arg0: i32) -> (i32, i32) {
    %c0_i32 = arith.constant 0 : i32
    %c0_i32_0 = arith.constant 0 : i32
    %c0_i32_1 = arith.constant 0 : i32
    return %c0_i32, %c0_i32_0 : i32, i32
  }
  func.func @transform_5(%arg0: i32) -> (i32, i32) {
    %c0_i32 = arith.constant 0 : i32
    %c0_i32_0 = arith.constant 0 : i32
    %c0_i32_1 = arith.constant 0 : i32
    return %c0_i32, %c0_i32_0 : i32, i32
  }
  func.func @transform_6(%arg0: i32) -> (i32, i32) {
    %c0_i32 = arith.constant 0 : i32
    %c0_i32_0 = arith.constant 0 : i32
    %c0_i32_1 = arith.constant 0 : i32
    return %c0_i32, %c0_i32_0 : i32, i32
  }
  func.func @transform_7(%arg0: i32) -> (i32, i32) {
    %c0_i32 = arith.constant 0 : i32
    %c0_i32_0 = arith.constant 0 : i32
    %c0_i32_1 = arith.constant 0 : i32
    return %c0_i32, %c0_i32_0 : i32, i32
  }
  func.func @transform_8(%arg0: i32) -> (i32, i32) {
    %c0_i32 = arith.constant 0 : i32
    %c0_i32_0 = arith.constant 0 : i32
    %c0_i32_1 = arith.constant 0 : i32
    return %c0_i32, %c0_i32_0 : i32, i32
  }
  func.func @transform_9(%arg0: i32) -> (i32, i32, i32) {
    %c0_i32 = arith.constant 0 : i32
    %c0_i32_0 = arith.constant 0 : i32
    %c0_i32_1 = arith.constant 0 : i32
    return %arg0, %c0_i32, %c0_i32_0 : i32, i32, i32
  }
}

</mosaic_0001>

<llo_original>
// kernel: tpu_custom_call.1
$region0: #{tpu_custom_call.1}
  #allocation0 [shape = 'u32[]', space=smem, size = 0x4, offset = 0x4, fixed_abs, tag = 'smem constant byte address 0x4 - core index']
  #allocation1 [shape = 'u32[72,128]{1,0:T(1,128)}', space=vmem, size = 0x9000, scoped, tag = 'internal scratch']
  #allocation2 [shape = 'bf16[272,128]{1,0:T(8,128)(2,1)}', space=vmem, size = 0x11000, scoped, tag = 'scratch operand']
  %s0 = inlined_call_operand.hbm [shape: f32[16,16,128], index: 0, kind: input, shape index: {}]
  %s1 = inlined_call_operand.hbm [shape: bf16[640,128], index: 1, kind: input, shape index: {}]
  %s2 = inlined_call_operand.vmem [shape: f32[1,128], index: 2, kind: input, shape index: {}]
  %s3 = inlined_call_operand.hbm [shape: bf16[640,128], index: 3, kind: input, shape index: {}]
  %s4 = inlined_call_operand.hbm [shape: f32[1,128], index: 4, kind: input, shape index: {}]
  %s5 = inlined_call_operand.hbm [shape: bf16[640,128], index: 5, kind: input, shape index: {}]
  %s6 = inlined_call_operand.vmem [shape: f32[1,128], index: 6, kind: input, shape index: {}]
  %s7 = inlined_call_operand.hbm [shape: bf16[128,256], index: 7, kind: input, shape index: {}]
  %s8 = inlined_call_operand.vmem [shape: f32[1,256], index: 8, kind: input, shape index: {}]
  %s9 = inlined_call_operand.hbm [shape: f32[16,16,256], index: 9, kind: output, shape index: {}]
  %s10 = sld [smem:[#allocation0]]
  $region93: #{tpu_custom_call.1} parent=0
    _
  %s12 = ssub.s32 1, %s10
  %s13 = scalar_select 0, %s12, %s10
  $region1: #{tpu_custom_call.1} parent=0
    #allocation3 [shape = 'u8[131072]{0}', space=vmem, size = 0x20000, scoped, tag = 'input window, operand 0']
    #allocation4 [shape = 's32[2]{0}', space=sflag, size = 0x8, scoped, tag = 'scoped memory for tpu_custom_call.1']
    #allocation5 [shape = 's32[2]{0}', space=sflag, size = 0x8, scoped, tag = 'scoped memory for tpu_custom_call.1']
    #allocation6 [shape = 'u8[163840]{0}', space=vmem, size = 0x28000, scoped, tag = 'input window, operand 1, single buffered']
    #allocation7 [shape = 's32[1]{0}', space=sflag, size = 0x4, scoped, tag = 'scoped memory for tpu_custom_call.1']
    #allocation8 [shape = 'u8[163840]{0}', space=vmem, size = 0x28000, scoped, tag = 'input window, operand 3, single buffered']
    #allocation9 [shape = 'u8[512]{0}', space=vmem, size = 0x400, scoped, tag = 'input window, operand 4, single buffered']
    #allocation10 [shape = 's32[1]{0}', space=sflag, size = 0x4, scoped, tag = 'scoped memory for tpu_custom_call.1']
    #allocation11 [shape = 'u8[163840]{0}', space=vmem, size = 0x28000, scoped, tag = 'input window, operand 5, single buffered']
    #allocation12 [shape = 'u8[65536]{0}', space=vmem, size = 0x10000, scoped, tag = 'input window, operand 7, single buffered']
    #allocation13 [shape = 's32[1]{0}', space=sflag, size = 0x4, scoped, tag = 'scoped memory for tpu_custom_call.1']
    #allocation14 [shape = 'u8[262144]{0}', space=vmem, size = 0x40000, scoped, tag = 'output window, operand 0']
    %14 = vsyncpa [#allocation4], 0
    %s15 = scalar_lea.sflag [#allocation4], 1
    %16 = vsyncpa %s15, 0
    %17 = vsyncpa [#allocation7], 0
    %18 = vsyncpa [#allocation10], 0
    %19 = vsyncpa [#allocation13], 0
    %20 = vsyncpa [#allocation5], 0
    %s21 = scalar_lea.sflag [#allocation5], 1
    %22 = vsyncpa %s21, 0
    loop: start=0, step=1, limit=4
    $region2: #{tpu_custom_call.1} parent=1 // loop_pre_header
      _
    $region3: #{tpu_custom_call.1} parent=1 // loop_header
      %s24 = sphi 0, %s28
      %p25 = scmp.ge.s32.totalorder %s24, 4
      %s34 = sphi 0, %s36
      %s37 = sphi 0, %s34
      %s38 = sphi 0, %s37
      %s54 = sphi 0, %s38
      %s58 = sphi 0, %s58
      %s60 = sphi 0, %s58
      %s61 = sphi 0, %s60
      %s75 = sphi 0, %s61
      %s79 = sphi 0, %s79
      %s81 = sphi 0, %s79
      %s82 = sphi 0, %s81
      %s96 = sphi 0, %s82
      %s100 = sphi 0, %s100
      %s102 = sphi 0, %s100
      %s103 = sphi 0, %s102
      %s117 = sphi 0, %s103
      %s121 = sphi 0, %s121
      %s123 = sphi 0, %s121
      %s124 = sphi 0, %s123
      %s138 = sphi 0, %s124
      %s142 = sphi 0, %s142
      %s144 = sphi 0, %s142
      %s145 = sphi 0, %s144
      %s159 = sphi 0, %s145
      %s163 = sphi 0, %s163
      %s165 = sphi 0, %s163
      %s166 = sphi 0, %s165
      %s180 = sphi 0, %s166
      %s184 = sphi 0, %s184
      %s186 = sphi 0, %s184
      %s187 = sphi 0, %s186
      %s201 = sphi 0, %s187
      %s205 = sphi 0, %s205
      %s207 = sphi 0, %s205
      %s208 = sphi 0, %s207
      %s222 = sphi 0, %s208
      %s228 = sphi 0, %s230
      %s231 = sphi 0, %s228
      %s232 = sphi 0, %s231
      %s248 = sphi 0, %s232
    $region4: #{tpu_custom_call.1} parent=1 // loop_header_branch
      %27 = sbr.rel (%p25) target = $region8
    $region5: #{tpu_custom_call.1} parent=1 // loop_body
      %s29 = ssub.s32 %s24, 1
      %s30 = ssub.s32 %s24, 2
      %s31 = sadd.s32 %s24, 1
      %s32 = ssub.s32 %s24, %s31
      %p33 = scmp.eq.s32.totalorder %s32, 0
      %s35 = sadd.s32 %s34, 1
      %s36 = scalar_select %p33, %s34, %s35
      %p39 = pneg %p33
      %p40 = scmp.eq.s32.totalorder %s24, 1
      %p41 = por %p39, %p40
      %p42 = scmp.ne.s32.totalorder %s34, %s37
      %p43 = scmp.eq.s32.totalorder %s24, 0
      %p44 = por %p42, %p43
      %p45 = scmp.ne.s32.totalorder %s34, %s37
      %p46 = scmp.eq.s32.totalorder %s29, 1
      %p47 = por %p45, %p46
      %p48 = scmp.ne.s32.totalorder %s37, %s38
      %p49 = scmp.eq.s32.totalorder %s29, 0
      %p50 = por %p48, %p49
      %p51 = scmp.ne.s32.totalorder %s37, %s38
      %p52 = scmp.eq.s32.totalorder %s30, 1
      %p53 = por %p51, %p52
      %p55 = scmp.ne.s32.totalorder %s38, %s54
      %p56 = scmp.eq.s32.totalorder %s30, 0
      %p57 = por %p55, %p56
      %s59 = sadd.s32 %s58, 1
      %p62 = scmp.eq.s32.totalorder %s24, 1
      %p63 = scmp.ne.s32.totalorder %s58, %s60
      %p64 = scmp.eq.s32.totalorder %s24, 0
      %p65 = por %p63, %p64
      %p66 = scmp.ne.s32.totalorder %s58, %s60
      %p67 = scmp.eq.s32.totalorder %s29, 1
      %p68 = por %p66, %p67
      %p69 = scmp.ne.s32.totalorder %s60, %s61
      %p70 = scmp.eq.s32.totalorder %s29, 0
      %p71 = por %p69, %p70
      %p72 = scmp.ne.s32.totalorder %s60, %s61
      %p73 = scmp.eq.s32.totalorder %s30, 1
      %p74 = por %p72, %p73
      %p76 = scmp.ne.s32.totalorder %s61, %s75
      %p77 = scmp.eq.s32.totalorder %s30, 0
      %p78 = por %p76, %p77
      %s80 = sadd.s32 %s79, 1
      %p83 = scmp.eq.s32.totalorder %s24, 1
      %p84 = scmp.ne.s32.totalorder %s79, %s81
      %p85 = scmp.eq.s32.totalorder %s24, 0
      %p86 = por %p84, %p85
      %p87 = scmp.ne.s32.totalorder %s79, %s81
      %p88 = scmp.eq.s32.totalorder %s29, 1
      %p89 = por %p87, %p88
      %p90 = scmp.ne.s32.totalorder %s81, %s82
      %p91 = scmp.eq.s32.totalorder %s29, 0
      %p92 = por %p90, %p91
      %p93 = scmp.ne.s32.totalorder %s81, %s82
      %p94 = scmp.eq.s32.totalorder %s30, 1
      %p95 = por %p93, %p94
      %p97 = scmp.ne.s32.totalorder %s82, %s96
      %p98 = scmp.eq.s32.totalorder %s30, 0
      %p99 = por %p97, %p98
      %s101 = sadd.s32 %s100, 1
      %p104 = scmp.eq.s32.totalorder %s24, 1
      %p105 = scmp.ne.s32.totalorder %s100, %s102
      %p106 = scmp.eq.s32.totalorder %s24, 0
      %p107 = por %p105, %p106
      %p108 = scmp.ne.s32.totalorder %s100, %s102
      %p109 = scmp.eq.s32.totalorder %s29, 1
      %p110 = por %p108, %p109
      %p111 = scmp.ne.s32.totalorder %s102, %s103
      %p112 = scmp.eq.s32.totalorder %s29, 0
      %p113 = por %p111, %p112
      %p114 = scmp.ne.s32.totalorder %s102, %s103
      %p115 = scmp.eq.s32.totalorder %s30, 1
      %p116 = por %p114, %p115
      %p118 = scmp.ne.s32.totalorder %s103, %s117
      %p119 = scmp.eq.s32.totalorder %s30, 0
      %p120 = por %p118, %p119
      %s122 = sadd.s32 %s121, 1
      %p125 = scmp.eq.s32.totalorder %s24, 1
      %p126 = scmp.ne.s32.totalorder %s121, %s123
      %p127 = scmp.eq.s32.totalorder %s24, 0
      %p128 = por %p126, %p127
      %p129 = scmp.ne.s32.totalorder %s121, %s123
      %p130 = scmp.eq.s32.totalorder %s29, 1
      %p131 = por %p129, %p130
      %p132 = scmp.ne.s32.totalorder %s123, %s124
      %p133 = scmp.eq.s32.totalorder %s29, 0
      %p134 = por %p132, %p133
      %p135 = scmp.ne.s32.totalorder %s123, %s124
      %p136 = scmp.eq.s32.totalorder %s30, 1
      %p137 = por %p135, %p136
      %p139 = scmp.ne.s32.totalorder %s124, %s138
      %p140 = scmp.eq.s32.totalorder %s30, 0
      %p141 = por %p139, %p140
      %s143 = sadd.s32 %s142, 1
      %p146 = scmp.eq.s32.totalorder %s24, 1
      %p147 = scmp.ne.s32.totalorder %s142, %s144
      %p148 = scmp.eq.s32.totalorder %s24, 0
      %p149 = por %p147, %p148
      %p150 = scmp.ne.s32.totalorder %s142, %s144
      %p151 = scmp.eq.s32.totalorder %s29, 1
      %p152 = por %p150, %p151
      %p153 = scmp.ne.s32.totalorder %s144, %s145
      %p154 = scmp.eq.s32.totalorder %s29, 0
      %p155 = por %p153, %p154
      %p156 = scmp.ne.s32.totalorder %s144, %s145
      %p157 = scmp.eq.s32.totalorder %s30, 1
      %p158 = por %p156, %p157
      %p160 = scmp.ne.s32.totalorder %s145, %s159
      %p161 = scmp.eq.s32.totalorder %s30, 0
      %p162 = por %p160, %p161
      %s164 = sadd.s32 %s163, 1
      %p167 = scmp.eq.s32.totalorder %s24, 1
      %p168 = scmp.ne.s32.totalorder %s163, %s165
      %p169 = scmp.eq.s32.totalorder %s24, 0
      %p170 = por %p168, %p169
      %p171 = scmp.ne.s32.totalorder %s163, %s165
      %p172 = scmp.eq.s32.totalorder %s29, 1
      %p173 = por %p171, %p172
      %p174 = scmp.ne.s32.totalorder %s165, %s166
      %p175 = scmp.eq.s32.totalorder %s29, 0
      %p176 = por %p174, %p175
      %p177 = scmp.ne.s32.totalorder %s165, %s166
      %p178 = scmp.eq.s32.totalorder %s30, 1
      %p179 = por %p177, %p178
      %p181 = scmp.ne.s32.totalorder %s166, %s180
      %p182 = scmp.eq.s32.totalorder %s30, 0
      %p183 = por %p181, %p182
      %s185 = sadd.s32 %s184, 1
      %p188 = scmp.eq.s32.totalorder %s24, 1
      %p189 = scmp.ne.s32.totalorder %s184, %s186
      %p190 = scmp.eq.s32.totalorder %s24, 0
      %p191 = por %p189, %p190
      %p192 = scmp.ne.s32.totalorder %s184, %s186
      %p193 = scmp.eq.s32.totalorder %s29, 1
      %p194 = por %p192, %p193
      %p195 = scmp.ne.s32.totalorder %s186, %s187
      %p196 = scmp.eq.s32.totalorder %s29, 0
      %p197 = por %p195, %p196
      %p198 = scmp.ne.s32.totalorder %s186, %s187
      %p199 = scmp.eq.s32.totalorder %s30, 1
      %p200 = por %p198, %p199
      %p202 = scmp.ne.s32.totalorder %s187, %s201
      %p203 = scmp.eq.s32.totalorder %s30, 0
      %p204 = por %p202, %p203
      %s206 = sadd.s32 %s205, 1
      %p209 = scmp.eq.s32.totalorder %s24, 1
      %p210 = scmp.ne.s32.totalorder %s205, %s207
      %p211 = scmp.eq.s32.totalorder %s24, 0
      %p212 = por %p210, %p211
      %p213 = scmp.ne.s32.totalorder %s205, %s207
      %p214 = scmp.eq.s32.totalorder %s29, 1
      %p215 = por %p213, %p214
      %p216 = scmp.ne.s32.totalorder %s207, %s208
      %p217 = scmp.eq.s32.totalorder %s29, 0
      %p218 = por %p216, %p217
      %p219 = scmp.ne.s32.totalorder %s207, %s208
      %p220 = scmp.eq.s32.totalorder %s30, 1
      %p221 = por %p219, %p220
      %p223 = scmp.ne.s32.totalorder %s208, %s222
      %p224 = scmp.eq.s32.totalorder %s30, 0
      %p225 = por %p223, %p224
      %s226 = ssub.s32 %s24, %s31
      %p227 = scmp.eq.s32.totalorder %s226, 0
      %s229 = sadd.s32 %s228, 1
      %s230 = scalar_select %p227, %s228, %s229
      %p233 = pneg %p227
      %p234 = scmp.eq.s32.totalorder %s24, 1
      %p235 = por %p233, %p234
      %p236 = scmp.ne.s32.totalorder %s228, %s231
      %p237 = scmp.eq.s32.totalorder %s24, 0
      %p238 = por %p236, %p237
      %p239 = scmp.ne.s32.totalorder %s228, %s231
      %p240 = scmp.eq.s32.totalorder %s29, 1
      %p241 = por %p239, %p240
      %p242 = scmp.ne.s32.totalorder %s231, %s232
      %p243 = scmp.eq.s32.totalorder %s29, 0
      %p244 = por %p242, %p243
      %p245 = scmp.ne.s32.totalorder %s231, %s232
      %p246 = scmp.eq.s32.totalorder %s30, 1
      %p247 = por %p245, %p246
      %p249 = scmp.ne.s32.totalorder %s232, %s248
      %p250 = scmp.eq.s32.totalorder %s30, 0
      %p251 = por %p249, %p250
      %p252 = scmp.le.s32.totalorder 1, %s24
      %p253 = scmp.lt.s32.totalorder %s24, 3
      %p254 = pnand %p252, %p253
      %p255 = pneg %p254
      // Predicated region
      $region9: #{tpu_custom_call.1} parent=5 // pred_check
        _
      $region10: #{tpu_custom_call.1} parent=5 // pred_check_branch
        %257 = sbr.rel (%p254) target = $region12
      $region11: #{tpu_custom_call.1} parent=5 // pred_region
        %s258 = ssub.s32 %s24, 1
        // Predicated region
        $region13: #{tpu_custom_call.1} parent=11 // pred_check
          %p259 = pneg %p71
        $region14: #{tpu_custom_call.1} parent=11 // pred_check_branch
          %261 = sbr.rel (%p259) target = $region16
        $region15: #{tpu_custom_call.1} parent=11 // pred_region
          %263 = vsyncadd [#allocation7], 0
          %s264 = sshll.u32 %s1, 4
          %s265 = int_to_ptr.hbm [resolvable:$true] %s264
          %s266 = sshll.u32 [#allocation6], 4
          %s267 = int_to_ptr.vmem [resolvable:$true] %s266
          %272 = dma.hbm_to_vmem [thread:$0]  %s265, 5120, %s267, [#allocation7], 64, 64, 4
        $region16: #{tpu_custom_call.1} parent=11 // pred_fallthru
          _
        // Predicated region
        $region17: #{tpu_custom_call.1} parent=11 // pred_check
          %p273 = pneg %p92
        $region18: #{tpu_custom_call.1} parent=11 // pred_check_branch
          %275 = sbr.rel (%p273) target = $region20
        $region19: #{tpu_custom_call.1} parent=11 // pred_region
          _
        $region20: #{tpu_custom_call.1} parent=11 // pred_fallthru
          _
        // Predicated region
        $region21: #{tpu_custom_call.1} parent=11 // pred_check
          %p276 = pneg %p113
        $region22: #{tpu_custom_call.1} parent=11 // pred_check_branch
          %278 = sbr.rel (%p276) target = $region24
        $region23: #{tpu_custom_call.1} parent=11 // pred_region
          %280 = vsyncadd [#allocation7], 0
          %s281 = sshll.u32 %s3, 4
          %s282 = int_to_ptr.hbm [resolvable:$true] %s281
          %s283 = sshll.u32 [#allocation8], 4
          %s284 = int_to_ptr.vmem [resolvable:$true] %s283
          %289 = dma.hbm_to_vmem [thread:$0]  %s282, 5120, %s284, [#allocation7], 64, 64, 4
        $region24: #{tpu_custom_call.1} parent=11 // pred_fallthru
          _
        // Predicated region
        $region25: #{tpu_custom_call.1} parent=11 // pred_check
          %p290 = pneg %p134
        $region26: #{tpu_custom_call.1} parent=11 // pred_check_branch
          %292 = sbr.rel (%p290) target = $region28
        $region27: #{tpu_custom_call.1} parent=11 // pred_region
          %294 = vsyncadd [#allocation10], 0
          %s296 = sshll.u32 %s4, 4
          %s297 = int_to_ptr.hbm [resolvable:$true] %s296
          %s298 = sshll.u32 [#allocation9], 4
          %s299 = int_to_ptr.vmem [resolvable:$true] %s298
          %301 = dma.hbm_to_vmem [thread:$0]  %s297, 16, %s299, [#allocation10]
        $region28: #{tpu_custom_call.1} parent=11 // pred_fallthru
          _
        // Predicated region
        $region29: #{tpu_custom_call.1} parent=11 // pred_check
          %p302 = pneg %p155
        $region30: #{tpu_custom_call.1} parent=11 // pred_check_branch
          %304 = sbr.rel (%p302) target = $region32
        $region31: #{tpu_custom_call.1} parent=11 // pred_region
          %306 = vsyncadd [#allocation10], 0
          %s307 = sshll.u32 %s5, 4
          %s308 = int_to_ptr.hbm [resolvable:$true] %s307
          %s309 = sshll.u32 [#allocation11], 4
          %s310 = int_to_ptr.vmem [resolvable:$true] %s309
          %315 = dma.hbm_to_vmem [thread:$0]  %s308, 5120, %s310, [#allocation10], 64, 64, 4
        $region32: #{tpu_custom_call.1} parent=11 // pred_fallthru
          _
        // Predicated region
        $region33: #{tpu_custom_call.1} parent=11 // pred_check
          %p316 = pneg %p176
        $region34: #{tpu_custom_call.1} parent=11 // pred_check_branch
          %318 = sbr.rel (%p316) target = $region36
        $region35: #{tpu_custom_call.1} parent=11 // pred_region
          _
        $region36: #{tpu_custom_call.1} parent=11 // pred_fallthru
          _
        // Predicated region
        $region37: #{tpu_custom_call.1} parent=11 // pred_check
          %p319 = pneg %p197
        $region38: #{tpu_custom_call.1} parent=11 // pred_check_branch
          %321 = sbr.rel (%p319) target = $region40
        $region39: #{tpu_custom_call.1} parent=11 // pred_region
          %323 = vsyncadd [#allocation13], 0
          %s324 = sshll.u32 %s7, 4
          %s325 = int_to_ptr.hbm [resolvable:$true] %s324
          %s326 = sshll.u32 [#allocation12], 4
          %s327 = int_to_ptr.vmem [resolvable:$true] %s326
          %332 = dma.hbm_to_vmem [thread:$0]  %s325, 2048, %s327, [#allocation13], 128, 128, 8
        $region40: #{tpu_custom_call.1} parent=11 // pred_fallthru
          _
        // Predicated region
        $region41: #{tpu_custom_call.1} parent=11 // pred_check
          %p333 = pneg %p218
        $region42: #{tpu_custom_call.1} parent=11 // pred_check_branch
          %335 = sbr.rel (%p333) target = $region44
        $region43: #{tpu_custom_call.1} parent=11 // pred_region
          _
        $region44: #{tpu_custom_call.1} parent=11 // pred_fallthru
          _
      $region12: #{tpu_custom_call.1} parent=5 // pred_fallthru
        _
      %p336 = scmp.lt.s32.totalorder %s24, 2
      // Predicated region
      $region45: #{tpu_custom_call.1} parent=5 // pred_check
        %p337 = pneg %p336
      $region46: #{tpu_custom_call.1} parent=5 // pred_check_branch
        %339 = sbr.rel (%p337) target = $region48
      $region47: #{tpu_custom_call.1} parent=5 // pred_region
        // Predicated region
        $region49: #{tpu_custom_call.1} parent=47 // pred_check
          %p340 = pneg %p44
        $region50: #{tpu_custom_call.1} parent=47 // pred_check_branch
          %342 = sbr.rel (%p340) target = $region52
        $region51: #{tpu_custom_call.1} parent=47 // pred_region
          %s343 = sand.u32 %s34, 1
          %s344 = scalar_lea.sflag [#allocation4], %s343
          %s345 = sand.u32 %s34, 1
          %s346 = smul.addr %s345, 128
          %s347 = scalar_lea.vmem [#allocation3], %s346
          %s348 = smul.u32 8, %s24
          %350 = vsyncadd %s344, 0
          %s351 = smul.addr %s348, 2
          %s352 = smul.addr %s351, 8
          %s353 = scalar_lea.hbm %s0, %s352
          %s354 = sshll.u32 %s353, 4
          %s355 = int_to_ptr.hbm [resolvable:$true] %s354
          %s356 = sshll.u32 %s347, 4
          %s357 = int_to_ptr.vmem [resolvable:$true] %s356
          %362 = dma.hbm_to_vmem [thread:$0]  %s355, 2048, %s357, %s344, 128, 128, 8
        $region52: #{tpu_custom_call.1} parent=47 // pred_fallthru
          _
      $region48: #{tpu_custom_call.1} parent=5 // pred_fallthru
        _
      %p363 = scmp.le.s32.totalorder 1, %s24
      %p364 = scmp.lt.s32.totalorder %s24, 3
      %p365 = pnand %p363, %p364
      %p366 = pneg %p365
      // Predicated region
      $region53: #{tpu_custom_call.1} parent=5 // pred_check
        _
      $region54: #{tpu_custom_call.1} parent=5 // pred_check_branch
        %368 = sbr.rel (%p365) target = $region56
      $region55: #{tpu_custom_call.1} parent=5 // pred_region
        %s369 = ssub.s32 %s24, 1
        %s370 = sand.u32 %s37, 1
        %s371 = scalar_lea.sflag [#allocation4], %s370
        %s372 = sand.u32 %s37, 1
        %s373 = smul.addr %s372, 128
        %s374 = scalar_lea.vmem [#allocation3], %s373
        // Predicated region
        $region57: #{tpu_custom_call.1} parent=55 // pred_check
          %p375 = pneg %p50
        $region58: #{tpu_custom_call.1} parent=55 // pred_check_branch
          %377 = sbr.rel (%p375) target = $region60
        $region59: #{tpu_custom_call.1} parent=55 // pred_region
          %379 = dma.done %s371, 2048
        $region60: #{tpu_custom_call.1} parent=55 // pred_fallthru
          _
        // Predicated region
        $region61: #{tpu_custom_call.1} parent=55 // pred_check
          %p380 = pneg %p71
        $region62: #{tpu_custom_call.1} parent=55 // pred_check_branch
          %382 = sbr.rel (%p380) target = $region64
        $region63: #{tpu_custom_call.1} parent=55 // pred_region
          %384 = dma.done [#allocation7], 5120
        $region64: #{tpu_custom_call.1} parent=55 // pred_fallthru
          _
        // Predicated region
        $region65: #{tpu_custom_call.1} parent=55 // pred_check
          %p385 = pneg %p113
        $region66: #{tpu_custom_call.1} parent=55 // pred_check_branch
          %387 = sbr.rel (%p385) target = $region68
        $region67: #{tpu_custom_call.1} parent=55 // pred_region
          %389 = dma.done [#allocation7], 5120
        $region68: #{tpu_custom_call.1} parent=55 // pred_fallthru
          _
        // Predicated region
        $region69: #{tpu_custom_call.1} parent=55 // pred_check
          %p390 = pneg %p134
        $region70: #{tpu_custom_call.1} parent=55 // pred_check_branch
          %392 = sbr.rel (%p390) target = $region72
        $region71: #{tpu_custom_call.1} parent=55 // pred_region
          %394 = dma.done [#allocation10], 16
        $region72: #{tpu_custom_call.1} parent=55 // pred_fallthru
          _
        // Predicated region
        $region73: #{tpu_custom_call.1} parent=55 // pred_check
          %p395 = pneg %p155
        $region74: #{tpu_custom_call.1} parent=55 // pred_check_branch
          %397 = sbr.rel (%p395) target = $region76
        $region75: #{tpu_custom_call.1} parent=55 // pred_region
          %399 = dma.done [#allocation10], 5120
        $region76: #{tpu_custom_call.1} parent=55 // pred_fallthru
          _
        // Predicated region
        $region77: #{tpu_custom_call.1} parent=55 // pred_check
          %p400 = pneg %p197
        $region78: #{tpu_custom_call.1} parent=55 // pred_check_branch
          %402 = sbr.rel (%p400) target = $region80
        $region79: #{tpu_custom_call.1} parent=55 // pred_region
          %404 = dma.done [#allocation13], 2048
        $region80: #{tpu_custom_call.1} parent=55 // pred_fallthru
          _
        %s405 = sand.u32 %s37, 1
        %s406 = scalar_lea.sflag [#allocation4], %s405
        %s407 = sand.u32 %s37, 1
        %s408 = smul.addr %s407, 128
        %s409 = scalar_lea.vmem [#allocation3], %s408
        %p410 = pneg %p50
        %p411 = pneg %p47
        %p412 = pneg %p71
        %p413 = pneg %p68
        %p414 = pneg %p92
        %p415 = pneg %p89
        %p416 = pneg %p113
        %p417 = pneg %p110
        %p418 = pneg %p134
        %p419 = pneg %p131
        %p420 = pneg %p155
        %p421 = pneg %p152
        %p422 = pneg %p176
        %p423 = pneg %p173
        %p424 = pneg %p197
        %p425 = pneg %p194
        %p426 = pneg %p218
        %p427 = pneg %p215
        %p428 = pneg %p244
        %p429 = pneg %p241
        %s430 = sand.u32 %s231, 1
        %s431 = scalar_lea.sflag [#allocation5], %s430
        %s432 = sand.u32 %s231, 1
        %s433 = smul.addr %s432, 256
        %s434 = scalar_lea.vmem [#allocation14], %s433
        %s435 = smul.u32 8, %s29
        %s436 = smul.u32 8, %s29
        %438 = vst [vmem:[#allocation2] sm:$0xf] 0
        %439 = vst [vmem:[#allocation2 + $0x4] sm:$0xf] 0
        %440 = vst [vmem:[#allocation2 + $0x10] sm:$0xf] 0
        %441 = vst [vmem:[#allocation2 + $0x14] sm:$0xf] 0
        %442 = vst [vmem:[#allocation2 + $0x20] sm:$0xf] 0
        %443 = vst [vmem:[#allocation2 + $0x24] sm:$0xf] 0
        %444 = vst [vmem:[#allocation2 + $0x30] sm:$0xf] 0
        %445 = vst [vmem:[#allocation2 + $0x34] sm:$0xf] 0
        %446 = vst [vmem:[#allocation2 + $0x40] sm:$0xf] 0
        %447 = vst [vmem:[#allocation2 + $0x44] sm:$0xf] 0
        %448 = vst [vmem:[#allocation2 + $0x50] sm:$0xf] 0
        %449 = vst [vmem:[#allocation2 + $0x54] sm:$0xf] 0
        %450 = vst [vmem:[#allocation2 + $0x60] sm:$0xf] 0
        %451 = vst [vmem:[#allocation2 + $0x64] sm:$0xf] 0
        %452 = vst [vmem:[#allocation2 + $0x70] sm:$0xf] 0
        %453 = vst [vmem:[#allocation2 + $0x74] sm:$0xf] 0
        %454 = vst [vmem:[#allocation2 + $0x80] sm:$0xf] 0
        %455 = vst [vmem:[#allocation2 + $0x84] sm:$0xf] 0
        %v456 = vld [vmem:[%s374] sm:$0xff]
        %v457 = vld [vmem:[%s374 + $0x8] sm:$0xff]
        %v458 = vpack.c.bf16 %v456, %v456
        %v459 = vpack.c.bf16 %v457, %v457
        %460 = vst [vmem:[#allocation2 + $0x8] sm:$0xf] %v458
        %461 = vst [vmem:[#allocation2 + $0xc] sm:$0xf] %v459
        %s462 = scalar_lea.vmem %s374, 16 [#allocation3]
        %v463 = vld [vmem:[%s462] sm:$0xff]
        %v464 = vld [vmem:[%s462 + $0x8] sm:$0xff]
        %v465 = vpack.c.bf16 %v463, %v463
        %v466 = vpack.c.bf16 %v464, %v464
        %467 = vst [vmem:[#allocation2 + $0x18] sm:$0xf] %v465
        %468 = vst [vmem:[#allocation2 + $0x1c] sm:$0xf] %v466
        %s469 = scalar_lea.vmem %s374, 32 [#allocation3]
        %v470 = vld [vmem:[%s469] sm:$0xff]
        %v471 = vld [vmem:[%s469 + $0x8] sm:$0xff]
        %v472 = vpack.c.bf16 %v470, %v470
        %v473 = vpack.c.bf16 %v471, %v471
        %474 = vst [vmem:[#allocation2 + $0x28] sm:$0xf] %v472
        %475 = vst [vmem:[#allocation2 + $0x2c] sm:$0xf] %v473
        %s476 = scalar_lea.vmem %s374, 48 [#allocation3]
        %v477 = vld [vmem:[%s476] sm:$0xff]
        %v478 = vld [vmem:[%s476 + $0x8] sm:$0xff]
        %v479 = vpack.c.bf16 %v477, %v477
        %v480 = vpack.c.bf16 %v478, %v478
        %481 = vst [vmem:[#allocation2 + $0x38] sm:$0xf] %v479
        %482 = vst [vmem:[#allocation2 + $0x3c] sm:$0xf] %v480
        %s483 = scalar_lea.vmem %s374, 64 [#allocation3]
        %v484 = vld [vmem:[%s483] sm:$0xff]
        %v485 = vld [vmem:[%s483 + $0x8] sm:$0xff]
        %v486 = vpack.c.bf16 %v484, %v484
        %v487 = vpack.c.bf16 %v485, %v485
        %488 = vst [vmem:[#allocation2 + $0x48] sm:$0xf] %v486
        %489 = vst [vmem:[#allocation2 + $0x4c] sm:$0xf] %v487
        %s490 = scalar_lea.vmem %s374, 80 [#allocation3]
        %v491 = vld [vmem:[%s490] sm:$0xff]
        %v492 = vld [vmem:[%s490 + $0x8] sm:$0xff]
        %v493 = vpack.c.bf16 %v491, %v491
        %v494 = vpack.c.bf16 %v492, %v492
        %495 = vst [vmem:[#allocation2 + $0x58] sm:$0xf] %v493
        %496 = vst [vmem:[#allocation2 + $0x5c] sm:$0xf] %v494
        %s497 = scalar_lea.vmem %s374, 96 [#allocation3]
        %v498 = vld [vmem:[%s497] sm:$0xff]
        %v499 = vld [vmem:[%s497 + $0x8] sm:$0xff]
        %v500 = vpack.c.bf16 %v498, %v498
        %v501 = vpack.c.bf16 %v499, %v499
        %502 = vst [vmem:[#allocation2 + $0x68] sm:$0xf] %v500
        %503 = vst [vmem:[#allocation2 + $0x6c] sm:$0xf] %v501
        %s504 = scalar_lea.vmem %s374, 112 [#allocation3]
        %v505 = vld [vmem:[%s504] sm:$0xff]
        %v506 = vld [vmem:[%s504 + $0x8] sm:$0xff]
        %v507 = vpack.c.bf16 %v505, %v505
        %v508 = vpack.c.bf16 %v506, %v506
        %509 = vst [vmem:[#allocation2 + $0x78] sm:$0xf] %v507
        %510 = vst [vmem:[#allocation2 + $0x7c] sm:$0xf] %v508
        %v511 = vld [vmem:[#allocation2 + $0x4] sm:$0x8]
        %v512 = vld [vmem:[#allocation2 + $0x8] sm:$0xf]
        %v513 = vld [vmem:[#allocation2 + $0xc] sm:$0x7]
        %v514 = vld [vmem:[#allocation2 + $0x14] sm:$0x8]
        %v515 = vld [vmem:[#allocation2 + $0x18] sm:$0xf]
        %v516 = vld [vmem:[#allocation2 + $0x1c] sm:$0x7]
        %v517 = vld [vmem:[#allocation2 + $0x24] sm:$0x8]
        %v518 = vld [vmem:[#allocation2 + $0x28] sm:$0xf]
        %v519 = vld [vmem:[#allocation2 + $0x2c] sm:$0x7]
        %v520 = vld [vmem:[#allocation2 + $0x34] sm:$0x8]
        %v521 = vld [vmem:[#allocation2 + $0x38] sm:$0xf]
        %v522 = vld [vmem:[#allocation2 + $0x3c] sm:$0x7]
        %v523 = vld [vmem:[#allocation2 + $0x44] sm:$0x8]
        %v524 = vld [vmem:[#allocation2 + $0x48] sm:$0xf]
        %v525 = vld [vmem:[#allocation2 + $0x4c] sm:$0x7]
        %v526 = vld [vmem:[#allocation2 + $0x54] sm:$0x8]
        %v527 = vld [vmem:[#allocation2 + $0x58] sm:$0xf]
        %v528 = vld [vmem:[#allocation2 + $0x5c] sm:$0x7]
        %v529 = vld [vmem:[#allocation2 + $0x64] sm:$0x8]
        %v530 = vld [vmem:[#allocation2 + $0x68] sm:$0xf]
        %v531 = vld [vmem:[#allocation2 + $0x6c] sm:$0x7]
        %v532 = vld [vmem:[#allocation2 + $0x74] sm:$0x8]
        %v533 = vld [vmem:[#allocation2 + $0x78] sm:$0xf]
        %v534 = vld [vmem:[#allocation2 + $0x7c] sm:$0x7]
        %v538 = vunpack.c.l.b16 %v511
        %v539 = vunpack.c.l.b16 %v512
        %v540 = vunpack.c.l.b16 %v513
        %v541 = vpack.c.b16 %v539, %v538
        %v542 = vpack.c.b16 %v540, %v540
        %vm543 = vcmask 1044480
        %v544 = vrot.slane %v541, 3
        %v545 = vrot.slane %v542, 3
        %v546 = vsel %vm543, %v544, %v545
        %v551 = vunpack.c.l.b16 %v514
        %v552 = vunpack.c.l.b16 %v515
        %v553 = vunpack.c.l.b16 %v516
        %v554 = vpack.c.b16 %v552, %v551
        %v555 = vpack.c.b16 %v553, %v553
        %v556 = vrot.slane %v554, 3
        %v557 = vrot.slane %v555, 3
        %v558 = vsel %vm543, %v556, %v557
        %v563 = vunpack.c.l.b16 %v517
        %v564 = vunpack.c.l.b16 %v518
        %v565 = vunpack.c.l.b16 %v519
        %v566 = vpack.c.b16 %v564, %v563
        %v567 = vpack.c.b16 %v565, %v565
        %v568 = vrot.slane %v566, 3
        %v569 = vrot.slane %v567, 3
        %v570 = vsel %vm543, %v568, %v569
        %v575 = vunpack.c.l.b16 %v520
        %v576 = vunpack.c.l.b16 %v521
        %v577 = vunpack.c.l.b16 %v522
        %v578 = vpack.c.b16 %v576, %v575
        %v579 = vpack.c.b16 %v577, %v577
        %v580 = vrot.slane %v578, 3
        %v581 = vrot.slane %v579, 3
        %v582 = vsel %vm543, %v580, %v581
        %v587 = vunpack.c.l.b16 %v523
        %v588 = vunpack.c.l.b16 %v524
        %v589 = vunpack.c.l.b16 %v525
        %v590 = vpack.c.b16 %v588, %v587
        %v591 = vpack.c.b16 %v589, %v589
        %v592 = vrot.slane %v590, 3
        %v593 = vrot.slane %v591, 3
        %v594 = vsel %vm543, %v592, %v593
        %v599 = vunpack.c.l.b16 %v526
        %v600 = vunpack.c.l.b16 %v527
        %v601 = vunpack.c.l.b16 %v528
        %v602 = vpack.c.b16 %v600, %v599
        %v603 = vpack.c.b16 %v601, %v601
        %v604 = vrot.slane %v602, 3
        %v605 = vrot.slane %v603, 3
        %v606 = vsel %vm543, %v604, %v605
        %v611 = vunpack.c.l.b16 %v529
        %v612 = vunpack.c.l.b16 %v530
        %v613 = vunpack.c.l.b16 %v531
        %v614 = vpack.c.b16 %v612, %v611
        %v615 = vpack.c.b16 %v613, %v613
        %v616 = vrot.slane %v614, 3
        %v617 = vrot.slane %v615, 3
        %v618 = vsel %vm543, %v616, %v617
        %v623 = vunpack.c.l.b16 %v532
        %v624 = vunpack.c.l.b16 %v533
        %v625 = vunpack.c.l.b16 %v534
        %v626 = vpack.c.b16 %v624, %v623
        %v627 = vpack.c.b16 %v625, %v625
        %v628 = vrot.slane %v626, 3
        %v629 = vrot.slane %v627, 3
        %v630 = vsel %vm543, %v628, %v629
        %v632 = vld [vmem:[#allocation2 + $0xc] sm:$0xf]
        %v633 = vld [vmem:[#allocation2 + $0x1c] sm:$0xf]
        %v634 = vld [vmem:[#allocation2 + $0x2c] sm:$0xf]
        %v635 = vld [vmem:[#allocation2 + $0x3c] sm:$0xf]
        %v636 = vld [vmem:[#allocation2 + $0x4c] sm:$0xf]
        %v637 = vld [vmem:[#allocation2 + $0x5c] sm:$0xf]
        %v638 = vld [vmem:[#allocation2 + $0x6c] sm:$0xf]
        %v639 = vld [vmem:[#allocation2 + $0x7c] sm:$0xf]
        %v641 = vunpack.c.l.b16 %v632
        %v642 = vpack.c.b16 %v641, %v641
        %vm643 = vsmask.f32 4352
        %v645 = vshrl.u32 %v541, 16
        %v647 = vrot.slane %v645, 3
        %v648 = vshll.u32 %v541, 16
        %v650 = vrot.slane %v648, 4
        %v651 = vor.u32 %v647, %v650
        %v653 = vshrl.u32 %v642, 16
        %v655 = vrot.slane %v653, 3
        %v656 = vshll.u32 %v642, 16
        %v658 = vrot.slane %v656, 4
        %v659 = vor.u32 %v655, %v658
        %v660 = vsel %vm643, %v651, %v659
        %v663 = vunpack.c.l.b16 %v633
        %v664 = vpack.c.b16 %v663, %v663
        %v666 = vshrl.u32 %v554, 16
        %v668 = vrot.slane %v666, 3
        %v669 = vshll.u32 %v554, 16
        %v671 = vrot.slane %v669, 4
        %v672 = vor.u32 %v668, %v671
        %v674 = vshrl.u32 %v664, 16
        %v676 = vrot.slane %v674, 3
        %v677 = vshll.u32 %v664, 16
        %v679 = vrot.slane %v677, 4
        %v680 = vor.u32 %v676, %v679
        %v681 = vsel %vm643, %v672, %v680
        %v684 = vunpack.c.l.b16 %v634
        %v685 = vpack.c.b16 %v684, %v684
        %v687 = vshrl.u32 %v566, 16
        %v689 = vrot.slane %v687, 3
        %v690 = vshll.u32 %v566, 16
        %v692 = vrot.slane %v690, 4
        %v693 = vor.u32 %v689, %v692
        %v695 = vshrl.u32 %v685, 16
        %v697 = vrot.slane %v695, 3
        %v698 = vshll.u32 %v685, 16
        %v700 = vrot.slane %v698, 4
        %v701 = vor.u32 %v697, %v700
        %v702 = vsel %vm643, %v693, %v701
        %v705 = vunpack.c.l.b16 %v635
        %v706 = vpack.c.b16 %v705, %v705
        %v708 = vshrl.u32 %v578, 16
        %v710 = vrot.slane %v708, 3
        %v711 = vshll.u32 %v578, 16
        %v713 = vrot.slane %v711, 4
        %v714 = vor.u32 %v710, %v713
        %v716 = vshrl.u32 %v706, 16
        %v718 = vrot.slane %v716, 3
        %v719 = vshll.u32 %v706, 16
        %v721 = vrot.slane %v719, 4
        %v722 = vor.u32 %v718, %v721
        %v723 = vsel %vm643, %v714, %v722
        %v726 = vunpack.c.l.b16 %v636
        %v727 = vpack.c.b16 %v726, %v726
        %v729 = vshrl.u32 %v590, 16
        %v731 = vrot.slane %v729, 3
        %v732 = vshll.u32 %v590, 16
        %v734 = vrot.slane %v732, 4
        %v735 = vor.u32 %v731, %v734
        %v737 = vshrl.u32 %v727, 16
        %v739 = vrot.slane %v737, 3
        %v740 = vshll.u32 %v727, 16
        %v742 = vrot.slane %v740, 4
        %v743 = vor.u32 %v739, %v742
        %v744 = vsel %vm643, %v735, %v743
        %v747 = vunpack.c.l.b16 %v637
        %v748 = vpack.c.b16 %v747, %v747
        %v750 = vshrl.u32 %v602, 16
        %v752 = vrot.slane %v750, 3
        %v753 = vshll.u32 %v602, 16
        %v755 = vrot.slane %v753, 4
        %v756 = vor.u32 %v752, %v755
        %v758 = vshrl.u32 %v748, 16
        %v760 = vrot.slane %v758, 3
        %v761 = vshll.u32 %v748, 16
        %v763 = vrot.slane %v761, 4
        %v764 = vor.u32 %v760, %v763
        %v765 = vsel %vm643, %v756, %v764
        %v768 = vunpack.c.l.b16 %v638
        %v769 = vpack.c.b16 %v768, %v768
        %v771 = vshrl.u32 %v614, 16
        %v773 = vrot.slane %v771, 3
        %v774 = vshll.u32 %v614, 16
        %v776 = vrot.slane %v774, 4
        %v777 = vor.u32 %v773, %v776
        %v779 = vshrl.u32 %v769, 16
        %v781 = vrot.slane %v779, 3
        %v782 = vshll.u32 %v769, 16
        %v784 = vrot.slane %v782, 4
        %v785 = vor.u32 %v781, %v784
        %v786 = vsel %vm643, %v777, %v785
        %v789 = vunpack.c.l.b16 %v639
        %v790 = vpack.c.b16 %v789, %v789
        %v792 = vshrl.u32 %v626, 16
        %v794 = vrot.slane %v792, 3
        %v795 = vshll.u32 %v626, 16
        %v797 = vrot.slane %v795, 4
        %v798 = vor.u32 %v794, %v797
        %v800 = vshrl.u32 %v790, 16
        %v802 = vrot.slane %v800, 3
        %v803 = vshll.u32 %v790, 16
        %v805 = vrot.slane %v803, 4
        %v806 = vor.u32 %v802, %v805
        %v807 = vsel %vm643, %v798, %v806
        %v809 = vpack.c.b16 %v641, %v539
        %v811 = vpack.c.b16 %v663, %v552
        %v813 = vpack.c.b16 %v684, %v564
        %v815 = vpack.c.b16 %v705, %v576
        %v817 = vpack.c.b16 %v726, %v588
        %v819 = vpack.c.b16 %v747, %v600
        %v821 = vpack.c.b16 %v768, %v612
        %v823 = vpack.c.b16 %v789, %v624
        %v825 = vld [vmem:[#allocation2 + $0x10] sm:$0x1]
        %v826 = vld [vmem:[#allocation2 + $0x20] sm:$0x1]
        %v827 = vld [vmem:[#allocation2 + $0x30] sm:$0x1]
        %v828 = vld [vmem:[#allocation2 + $0x40] sm:$0x1]
        %v829 = vld [vmem:[#allocation2 + $0x50] sm:$0x1]
        %v830 = vld [vmem:[#allocation2 + $0x60] sm:$0x1]
        %v831 = vld [vmem:[#allocation2 + $0x70] sm:$0x1]
        %v832 = vld [vmem:[#allocation2 + $0x80] sm:$0x1]
        %v834 = vunpack.c.l.b16 %v825
        %v835 = vpack.c.b16 %v834, %v834
        %vm836 = vsmask.f32 7424
        %v838 = vshrl.u32 %v809, 16
        %v840 = vshll.u32 %v809, 16
        %v842 = vrot.slane %v840, 1
        %v843 = vor.u32 %v838, %v842
        %v845 = vshll.u32 %v835, 16
        %v847 = vrot.slane %v845, 1
        %v848 = vsel %vm836, %v843, %v847
        %v851 = vunpack.c.l.b16 %v826
        %v852 = vpack.c.b16 %v851, %v851
        %v854 = vshrl.u32 %v811, 16
        %v856 = vshll.u32 %v811, 16
        %v858 = vrot.slane %v856, 1
        %v859 = vor.u32 %v854, %v858
        %v861 = vshll.u32 %v852, 16
        %v863 = vrot.slane %v861, 1
        %v864 = vsel %vm836, %v859, %v863
        %v867 = vunpack.c.l.b16 %v827
        %v868 = vpack.c.b16 %v867, %v867
        %v870 = vshrl.u32 %v813, 16
        %v872 = vshll.u32 %v813, 16
        %v874 = vrot.slane %v872, 1
        %v875 = vor.u32 %v870, %v874
        %v877 = vshll.u32 %v868, 16
        %v879 = vrot.slane %v877, 1
        %v880 = vsel %vm836, %v875, %v879
        %v883 = vunpack.c.l.b16 %v828
        %v884 = vpack.c.b16 %v883, %v883
        %v886 = vshrl.u32 %v815, 16
        %v888 = vshll.u32 %v815, 16
        %v890 = vrot.slane %v888, 1
        %v891 = vor.u32 %v886, %v890
        %v893 = vshll.u32 %v884, 16
        %v895 = vrot.slane %v893, 1
        %v896 = vsel %vm836, %v891, %v895
        %v899 = vunpack.c.l.b16 %v829
        %v900 = vpack.c.b16 %v899, %v899
        %v902 = vshrl.u32 %v817, 16
        %v904 = vshll.u32 %v817, 16
        %v906 = vrot.slane %v904, 1
        %v907 = vor.u32 %v902, %v906
        %v909 = vshll.u32 %v900, 16
        %v911 = vrot.slane %v909, 1
        %v912 = vsel %vm836, %v907, %v911
        %v915 = vunpack.c.l.b16 %v830
        %v916 = vpack.c.b16 %v915, %v915
        %v918 = vshrl.u32 %v819, 16
        %v920 = vshll.u32 %v819, 16
        %v922 = vrot.slane %v920, 1
        %v923 = vor.u32 %v918, %v922
        %v925 = vshll.u32 %v916, 16
        %v927 = vrot.slane %v925, 1
        %v928 = vsel %vm836, %v923, %v927
        %v931 = vunpack.c.l.b16 %v831
        %v932 = vpack.c.b16 %v931, %v931
        %v934 = vshrl.u32 %v821, 16
        %v936 = vshll.u32 %v821, 16
        %v938 = vrot.slane %v936, 1
        %v939 = vor.u32 %v934, %v938
        %v941 = vshll.u32 %v932, 16
        %v943 = vrot.slane %v941, 1
        %v944 = vsel %vm836, %v939, %v943
        %v947 = vunpack.c.l.b16 %v832
        %v948 = vpack.c.b16 %v947, %v947
        %v950 = vshrl.u32 %v823, 16
        %v952 = vshll.u32 %v823, 16
        %v954 = vrot.slane %v952, 1
        %v955 = vor.u32 %v950, %v954
        %v957 = vshll.u32 %v948, 16
        %v959 = vrot.slane %v957, 1
        %v960 = vsel %vm836, %v955, %v959
        %v962 = vld [vmem:[#allocation2 + $0x8] sm:$0xe]
        %v963 = vld [vmem:[#allocation2 + $0x18] sm:$0xe]
        %v964 = vld [vmem:[#allocation2 + $0x28] sm:$0xe]
        %v965 = vld [vmem:[#allocation2 + $0x38] sm:$0xe]
        %v966 = vld [vmem:[#allocation2 + $0x48] sm:$0xe]
        %v967 = vld [vmem:[#allocation2 + $0x58] sm:$0xe]
        %v968 = vld [vmem:[#allocation2 + $0x68] sm:$0xe]
        %v969 = vld [vmem:[#allocation2 + $0x78] sm:$0xe]
        %v971 = vunpack.c.l.b16 %v962
        %v972 = vpack.c.b16 %v641, %v971
        %vm973 = vcmask 1046528
        %v974 = vrot.slane %v972, 1
        %v975 = vrot.slane %v835, 1
        %v976 = vsel %vm973, %v974, %v975
        %v979 = vunpack.c.l.b16 %v963
        %v980 = vpack.c.b16 %v663, %v979
        %v981 = vrot.slane %v980, 1
        %v982 = vrot.slane %v852, 1
        %v983 = vsel %vm973, %v981, %v982
        %v986 = vunpack.c.l.b16 %v964
        %v987 = vpack.c.b16 %v684, %v986
        %v988 = vrot.slane %v987, 1
        %v989 = vrot.slane %v868, 1
        %v990 = vsel %vm973, %v988, %v989
        %v993 = vunpack.c.l.b16 %v965
        %v994 = vpack.c.b16 %v705, %v993
        %v995 = vrot.slane %v994, 1
        %v996 = vrot.slane %v884, 1
        %v997 = vsel %vm973, %v995, %v996
        %v1000 = vunpack.c.l.b16 %v966
        %v1001 = vpack.c.b16 %v726, %v1000
        %v1002 = vrot.slane %v1001, 1
        %v1003 = vrot.slane %v900, 1
        %v1004 = vsel %vm973, %v1002, %v1003
        %v1007 = vunpack.c.l.b16 %v967
        %v1008 = vpack.c.b16 %v747, %v1007
        %v1009 = vrot.slane %v1008, 1
        %v1010 = vrot.slane %v916, 1
        %v1011 = vsel %vm973, %v1009, %v1010
        %v1014 = vunpack.c.l.b16 %v968
        %v1015 = vpack.c.b16 %v768, %v1014
        %v1016 = vrot.slane %v1015, 1
        %v1017 = vrot.slane %v932, 1
        %v1018 = vsel %vm973, %v1016, %v1017
        %v1021 = vunpack.c.l.b16 %v969
        %v1022 = vpack.c.b16 %v789, %v1021
        %v1023 = vrot.slane %v1022, 1
        %v1024 = vrot.slane %v948, 1
        %v1025 = vsel %vm973, %v1023, %v1024
        %v1027 = vld [vmem:[#allocation6] sm:$0xf]
        %v1028 = vld [vmem:[#allocation6 + $0x4] sm:$0xf]
        %v1029 = vld [vmem:[#allocation6 + $0x8] sm:$0xf]
        %v1030 = vld [vmem:[#allocation6 + $0xc] sm:$0xf]
        %v1031 = vld [vmem:[#allocation6 + $0x10] sm:$0xf]
        %v1032 = vld [vmem:[#allocation6 + $0x14] sm:$0xf]
        %v1033 = vld [vmem:[#allocation6 + $0x18] sm:$0xf]
        %v1034 = vld [vmem:[#allocation6 + $0x1c] sm:$0xf]
        %v1035 = vld [vmem:[#allocation6 + $0x20] sm:$0xf]
        %v1036 = vld [vmem:[#allocation6 + $0x24] sm:$0xf]
        %v1037 = vld [vmem:[#allocation6 + $0x28] sm:$0xf]
        %v1038 = vld [vmem:[#allocation6 + $0x2c] sm:$0xf]
        %v1039 = vld [vmem:[#allocation6 + $0x30] sm:$0xf]
        %v1040 = vld [vmem:[#allocation6 + $0x34] sm:$0xf]
        %v1041 = vld [vmem:[#allocation6 + $0x38] sm:$0xf]
        %v1042 = vld [vmem:[#allocation6 + $0x3c] sm:$0xf]
        %v1043 = vld [vmem:[#allocation6 + $0x40] sm:$0xf]
        %v1044 = vld [vmem:[#allocation6 + $0x44] sm:$0xf]
        %v1045 = vld [vmem:[#allocation6 + $0x48] sm:$0xf]
        %v1046 = vld [vmem:[#allocation6 + $0x4c] sm:$0xf]
        %v1047 = vld [vmem:[#allocation6 + $0x50] sm:$0xf]
        %v1048 = vld [vmem:[#allocation6 + $0x54] sm:$0xf]
        %v1049 = vld [vmem:[#allocation6 + $0x58] sm:$0xf]
        %v1050 = vld [vmem:[#allocation6 + $0x5c] sm:$0xf]
        %v1051 = vld [vmem:[#allocation6 + $0x60] sm:$0xf]
        %v1052 = vld [vmem:[#allocation6 + $0x64] sm:$0xf]
        %v1053 = vld [vmem:[#allocation6 + $0x68] sm:$0xf]
        %v1054 = vld [vmem:[#allocation6 + $0x6c] sm:$0xf]
        %v1055 = vld [vmem:[#allocation6 + $0x70] sm:$0xf]
        %v1056 = vld [vmem:[#allocation6 + $0x74] sm:$0xf]
        %v1057 = vld [vmem:[#allocation6 + $0x78] sm:$0xf]
        %v1058 = vld [vmem:[#allocation6 + $0x7c] sm:$0xf]
        %v1059 = vld [vmem:[#allocation6 + $0x80] sm:$0xf]
        %v1060 = vld [vmem:[#allocation6 + $0x84] sm:$0xf]
        %v1061 = vld [vmem:[#allocation6 + $0x88] sm:$0xf]
        %v1062 = vld [vmem:[#allocation6 + $0x8c] sm:$0xf]
        %v1063 = vld [vmem:[#allocation6 + $0x90] sm:$0xf]
        %v1064 = vld [vmem:[#allocation6 + $0x94] sm:$0xf]
        %v1065 = vld [vmem:[#allocation6 + $0x98] sm:$0xf]
        %v1066 = vld [vmem:[#allocation6 + $0x9c] sm:$0xf]
        %v1067 = vld [vmem:[#allocation6 + $0xa0] sm:$0xf]
        %v1068 = vld [vmem:[#allocation6 + $0xa4] sm:$0xf]
        %v1069 = vld [vmem:[#allocation6 + $0xa8] sm:$0xf]
        %v1070 = vld [vmem:[#allocation6 + $0xac] sm:$0xf]
        %v1071 = vld [vmem:[#allocation6 + $0xb0] sm:$0xf]
        %v1072 = vld [vmem:[#allocation6 + $0xb4] sm:$0xf]
        %v1073 = vld [vmem:[#allocation6 + $0xb8] sm:$0xf]
        %v1074 = vld [vmem:[#allocation6 + $0xbc] sm:$0xf]
        %v1075 = vld [vmem:[#allocation6 + $0xc0] sm:$0xf]
        %v1076 = vld [vmem:[#allocation6 + $0xc4] sm:$0xf]
        %v1077 = vld [vmem:[#allocation6 + $0xc8] sm:$0xf]
        %v1078 = vld [vmem:[#allocation6 + $0xcc] sm:$0xf]
        %v1079 = vld [vmem:[#allocation6 + $0xd0] sm:$0xf]
        %v1080 = vld [vmem:[#allocation6 + $0xd4] sm:$0xf]
        %v1081 = vld [vmem:[#allocation6 + $0xd8] sm:$0xf]
        %v1082 = vld [vmem:[#allocation6 + $0xdc] sm:$0xf]
        %v1083 = vld [vmem:[#allocation6 + $0xe0] sm:$0xf]
        %v1084 = vld [vmem:[#allocation6 + $0xe4] sm:$0xf]
        %v1085 = vld [vmem:[#allocation6 + $0xe8] sm:$0xf]
        %v1086 = vld [vmem:[#allocation6 + $0xec] sm:$0xf]
        %v1087 = vld [vmem:[#allocation6 + $0xf0] sm:$0xf]
        %v1088 = vld [vmem:[#allocation6 + $0xf4] sm:$0xf]
        %v1089 = vld [vmem:[#allocation6 + $0xf8] sm:$0xf]
        %v1090 = vld [vmem:[#allocation6 + $0xfc] sm:$0xf]
        %v1091 = vld [vmem:[#allocation6 + $0x100] sm:$0xf]
        %v1092 = vld [vmem:[#allocation6 + $0x104] sm:$0xf]
        %v1093 = vld [vmem:[#allocation6 + $0x108] sm:$0xf]
        %v1094 = vld [vmem:[#allocation6 + $0x10c] sm:$0xf]
        %v1095 = vld [vmem:[#allocation6 + $0x110] sm:$0xf]
        %v1096 = vld [vmem:[#allocation6 + $0x114] sm:$0xf]
        %v1097 = vld [vmem:[#allocation6 + $0x118] sm:$0xf]
        %v1098 = vld [vmem:[#allocation6 + $0x11c] sm:$0xf]
        %v1099 = vld [vmem:[#allocation6 + $0x120] sm:$0xf]
        %v1100 = vld [vmem:[#allocation6 + $0x124] sm:$0xf]
        %v1101 = vld [vmem:[#allocation6 + $0x128] sm:$0xf]
        %v1102 = vld [vmem:[#allocation6 + $0x12c] sm:$0xf]
        %v1103 = vld [vmem:[#allocation6 + $0x130] sm:$0xf]
        %v1104 = vld [vmem:[#allocation6 + $0x134] sm:$0xf]
        %v1105 = vld [vmem:[#allocation6 + $0x138] sm:$0xf]
        %v1106 = vld [vmem:[#allocation6 + $0x13c] sm:$0xf]
        %v1107 = vld [vmem:[%s2] sm:$0x1]
        %v1109 = vperm.slane %v1107, 0
        %v1191 = vunpack.c.l.b16 %v1027
        %v1192 = vunpack.c.l.b16 %v1028
        %v1193 = vunpack.c.l.b16 %v1029
        %v1194 = vunpack.c.l.b16 %v1030
        %v1195 = vunpack.c.l.b16 %v1031
        %v1196 = vunpack.c.l.b16 %v1032
        %v1197 = vunpack.c.l.b16 %v1033
        %v1198 = vunpack.c.l.b16 %v1034
        %v1199 = vunpack.c.l.b16 %v1035
        %v1200 = vunpack.c.l.b16 %v1036
        %v1201 = vunpack.c.l.b16 %v1037
        %v1202 = vunpack.c.l.b16 %v1038
        %v1203 = vunpack.c.l.b16 %v1039
        %v1204 = vunpack.c.l.b16 %v1040
        %v1205 = vunpack.c.l.b16 %v1041
        %v1206 = vunpack.c.l.b16 %v1042
        %v1207 = vunpack.c.l.b16 %v1043
        %v1208 = vunpack.c.l.b16 %v1044
        %v1209 = vunpack.c.l.b16 %v1045
        %v1210 = vunpack.c.l.b16 %v1046
        %v1211 = vunpack.c.l.b16 %v1047
        %v1212 = vunpack.c.l.b16 %v1048
        %v1213 = vunpack.c.l.b16 %v1049
        %v1214 = vunpack.c.l.b16 %v1050
        %v1215 = vunpack.c.l.b16 %v1051
        %v1216 = vunpack.c.l.b16 %v1052
        %v1217 = vunpack.c.l.b16 %v1053
        %v1218 = vunpack.c.l.b16 %v1054
        %v1219 = vunpack.c.l.b16 %v1055
        %v1220 = vunpack.c.l.b16 %v1056
        %v1221 = vunpack.c.l.b16 %v1057
        %v1222 = vunpack.c.l.b16 %v1058
        %v1223 = vunpack.c.l.b16 %v1059
        %v1224 = vunpack.c.l.b16 %v1060
        %v1225 = vunpack.c.l.b16 %v1061
        %v1226 = vunpack.c.l.b16 %v1062
        %v1227 = vunpack.c.l.b16 %v1063
        %v1228 = vunpack.c.l.b16 %v1064
        %v1229 = vunpack.c.l.b16 %v1065
        %v1230 = vunpack.c.l.b16 %v1066
        %v1231 = vunpack.c.l.b16 %v1067
        %v1232 = vunpack.c.l.b16 %v1068
        %v1233 = vunpack.c.l.b16 %v1069
        %v1234 = vunpack.c.l.b16 %v1070
        %v1235 = vunpack.c.l.b16 %v1071
        %v1236 = vunpack.c.l.b16 %v1072
        %v1237 = vunpack.c.l.b16 %v1073
        %v1238 = vunpack.c.l.b16 %v1074
        %v1239 = vunpack.c.l.b16 %v1075
        %v1240 = vunpack.c.l.b16 %v1076
        %v1241 = vunpack.c.l.b16 %v1077
        %v1242 = vunpack.c.l.b16 %v1078
        %v1243 = vunpack.c.l.b16 %v1079
        %v1244 = vunpack.c.l.b16 %v1080
        %v1245 = vunpack.c.l.b16 %v1081
        %v1246 = vunpack.c.l.b16 %v1082
        %v1247 = vunpack.c.l.b16 %v1083
        %v1248 = vunpack.c.l.b16 %v1084
        %v1249 = vunpack.c.l.b16 %v1085
        %v1250 = vunpack.c.l.b16 %v1086
        %v1251 = vunpack.c.l.b16 %v1087
        %v1252 = vunpack.c.l.b16 %v1088
        %v1253 = vunpack.c.l.b16 %v1089
        %v1254 = vunpack.c.l.b16 %v1090
        %v1255 = vunpack.c.l.b16 %v1091
        %v1256 = vunpack.c.l.b16 %v1092
        %v1257 = vunpack.c.l.b16 %v1093
        %v1258 = vunpack.c.l.b16 %v1094
        %v1259 = vunpack.c.l.b16 %v1095
        %v1260 = vunpack.c.l.b16 %v1096
        %v1261 = vunpack.c.l.b16 %v1097
        %v1262 = vunpack.c.l.b16 %v1098
        %v1263 = vunpack.c.l.b16 %v1099
        %v1264 = vunpack.c.l.b16 %v1100
        %v1265 = vunpack.c.l.b16 %v1101
        %v1266 = vunpack.c.l.b16 %v1102
        %v1267 = vunpack.c.l.b16 %v1103
        %v1268 = vunpack.c.l.b16 %v1104
        %v1269 = vunpack.c.l.b16 %v1105
        %v1270 = vunpack.c.l.b16 %v1106
        %v1271 = vpack.c.b16 %v1192, %v1191
        %v1272 = vpack.c.b16 %v1194, %v1193
        %v1273 = vpack.c.b16 %v1196, %v1195
        %v1274 = vpack.c.b16 %v1198, %v1197
        %v1275 = vpack.c.b16 %v1200, %v1199
        %v1276 = vpack.c.b16 %v1202, %v1201
        %v1277 = vpack.c.b16 %v1204, %v1203
        %v1278 = vpack.c.b16 %v1206, %v1205
        %v1279 = vpack.c.b16 %v1208, %v1207
        %v1280 = vpack.c.b16 %v1210, %v1209
        %v1281 = vpack.c.b16 %v1212, %v1211
        %v1282 = vpack.c.b16 %v1214, %v1213
        %v1283 = vpack.c.b16 %v1216, %v1215
        %v1284 = vpack.c.b16 %v1218, %v1217
        %v1285 = vpack.c.b16 %v1220, %v1219
        %v1286 = vpack.c.b16 %v1222, %v1221
        %v1287 = vpack.c.b16 %v1224, %v1223
        %v1288 = vpack.c.b16 %v1226, %v1225
        %v1289 = vpack.c.b16 %v1228, %v1227
        %v1290 = vpack.c.b16 %v1230, %v1229
        %v1291 = vpack.c.b16 %v1232, %v1231
        %v1292 = vpack.c.b16 %v1234, %v1233
        %v1293 = vpack.c.b16 %v1236, %v1235
        %v1294 = vpack.c.b16 %v1238, %v1237
        %v1295 = vpack.c.b16 %v1240, %v1239
        %v1296 = vpack.c.b16 %v1242, %v1241
        %v1297 = vpack.c.b16 %v1244, %v1243
        %v1298 = vpack.c.b16 %v1246, %v1245
        %v1299 = vpack.c.b16 %v1248, %v1247
        %v1300 = vpack.c.b16 %v1250, %v1249
        %v1301 = vpack.c.b16 %v1252, %v1251
        %v1302 = vpack.c.b16 %v1254, %v1253
        %v1303 = vpack.c.b16 %v1256, %v1255
        %v1304 = vpack.c.b16 %v1258, %v1257
        %v1305 = vpack.c.b16 %v1260, %v1259
        %v1306 = vpack.c.b16 %v1262, %v1261
        %v1307 = vpack.c.b16 %v1264, %v1263
        %v1308 = vpack.c.b16 %v1266, %v1265
        %v1309 = vpack.c.b16 %v1268, %v1267
        %v1310 = vpack.c.b16 %v1270, %v1269
        %1351 = vmatpush.bf16.msra.mxu0 %v1278
        %1352 = vmatpush.bf16.msra.mxu0 %v1277
        %1353 = vmatpush.bf16.msra.mxu0 %v1276
        %1354 = vmatpush.bf16.msra.mxu0 %v1275
        %1355 = vmatpush.bf16.msra.mxu0 %v1274
        %1356 = vmatpush.bf16.msra.mxu0 %v1273
        %1357 = vmatpush.bf16.msra.mxu0 %v1272
        %1358 = vmatpush.bf16.msra.mxu0 %v1271
        %1359 = vmatmul.bf16.gmra.mxu0 %v546
        %v1360 = vpop.f32.mrf.mxu0
        %v1361 = vadd.f32 %v1109, %v1360
        %v1362 = vpop.f32.mrf.mxu0
        %v1363 = vadd.f32 %v1109, %v1362
        %1364 = vmatmul.bf16.gmra.mxu0 %v558
        %v1365 = vpop.f32.mrf.mxu0
        %v1366 = vadd.f32 %v1109, %v1365
        %v1367 = vpop.f32.mrf.mxu0
        %v1368 = vadd.f32 %v1109, %v1367
        %1369 = vmatmul.bf16.gmra.mxu0 %v570
        %v1370 = vpop.f32.mrf.mxu0
        %v1371 = vadd.f32 %v1109, %v1370
        %v1372 = vpop.f32.mrf.mxu0
        %v1373 = vadd.f32 %v1109, %v1372
        %1374 = vmatmul.bf16.gmra.mxu0 %v582
        %v1375 = vpop.f32.mrf.mxu0
        %v1376 = vadd.f32 %v1109, %v1375
        %v1377 = vpop.f32.mrf.mxu0
        %v1378 = vadd.f32 %v1109, %v1377
        %1379 = vmatmul.bf16.gmra.mxu0 %v594
        %v1380 = vpop.f32.mrf.mxu0
        %v1381 = vadd.f32 %v1109, %v1380
        %v1382 = vpop.f32.mrf.mxu0
        %v1383 = vadd.f32 %v1109, %v1382
        %1384 = vmatmul.bf16.gmra.mxu0 %v606
        %v1385 = vpop.f32.mrf.mxu0
        %v1386 = vadd.f32 %v1109, %v1385
        %v1387 = vpop.f32.mrf.mxu0
        %v1388 = vadd.f32 %v1109, %v1387
        %1389 = vmatmul.bf16.gmra.mxu0 %v618
        %v1390 = vpop.f32.mrf.mxu0
        %v1391 = vadd.f32 %v1109, %v1390
        %v1392 = vpop.f32.mrf.mxu0
        %v1393 = vadd.f32 %v1109, %v1392
        %1394 = vmatmul.bf16.gmra.mxu0 %v630
        %v1395 = vpop.f32.mrf.mxu0
        %v1396 = vadd.f32 %v1109, %v1395
        %v1397 = vpop.f32.mrf.mxu0
        %v1398 = vadd.f32 %v1109, %v1397
        %1399 = vdwg.mxu0
        %1400 = vmatpush.bf16.msra.mxu0 %v1286
        %1401 = vmatpush.bf16.msra.mxu0 %v1285
        %1402 = vmatpush.bf16.msra.mxu0 %v1284
        %1403 = vmatpush.bf16.msra.mxu0 %v1283
        %1404 = vmatpush.bf16.msra.mxu0 %v1282
        %1405 = vmatpush.bf16.msra.mxu0 %v1281
        %1406 = vmatpush.bf16.msra.mxu0 %v1280
        %1407 = vmatpush.bf16.msra.mxu0 %v1279
        %1408 = vmatmul.bf16.gmra.mxu0 %v660
        %v1409 = vpop.f32.mrf.mxu0
        %v1410 = vadd.f32 %v1361, %v1409
        %v1411 = vpop.f32.mrf.mxu0
        %v1412 = vadd.f32 %v1363, %v1411
        %1413 = vmatmul.bf16.gmra.mxu0 %v681
        %v1414 = vpop.f32.mrf.mxu0
        %v1415 = vadd.f32 %v1366, %v1414
        %v1416 = vpop.f32.mrf.mxu0
        %v1417 = vadd.f32 %v1368, %v1416
        %1418 = vmatmul.bf16.gmra.mxu0 %v702
        %v1419 = vpop.f32.mrf.mxu0
        %v1420 = vadd.f32 %v1371, %v1419
        %v1421 = vpop.f32.mrf.mxu0
        %v1422 = vadd.f32 %v1373, %v1421
        %1423 = vmatmul.bf16.gmra.mxu0 %v723
        %v1424 = vpop.f32.mrf.mxu0
        %v1425 = vadd.f32 %v1376, %v1424
        %v1426 = vpop.f32.mrf.mxu0
        %v1427 = vadd.f32 %v1378, %v1426
        %1428 = vmatmul.bf16.gmra.mxu0 %v744
        %v1429 = vpop.f32.mrf.mxu0
        %v1430 = vadd.f32 %v1381, %v1429
        %v1431 = vpop.f32.mrf.mxu0
        %v1432 = vadd.f32 %v1383, %v1431
        %1433 = vmatmul.bf16.gmra.mxu0 %v765
        %v1434 = vpop.f32.mrf.mxu0
        %v1435 = vadd.f32 %v1386, %v1434
        %v1436 = vpop.f32.mrf.mxu0
        %v1437 = vadd.f32 %v1388, %v1436
        %1438 = vmatmul.bf16.gmra.mxu0 %v786
        %v1439 = vpop.f32.mrf.mxu0
        %v1440 = vadd.f32 %v1391, %v1439
        %v1441 = vpop.f32.mrf.mxu0
        %v1442 = vadd.f32 %v1393, %v1441
        %1443 = vmatmul.bf16.gmra.mxu0 %v807
        %v1444 = vpop.f32.mrf.mxu0
        %v1445 = vadd.f32 %v1396, %v1444
        %v1446 = vpop.f32.mrf.mxu0
        %v1447 = vadd.f32 %v1398, %v1446
        %1448 = vdwg.mxu0
        %1449 = vmatpush.bf16.msra.mxu0 %v1294
        %1450 = vmatpush.bf16.msra.mxu0 %v1293
        %1451 = vmatpush.bf16.msra.mxu0 %v1292
        %1452 = vmatpush.bf16.msra.mxu0 %v1291
        %1453 = vmatpush.bf16.msra.mxu0 %v1290
        %1454 = vmatpush.bf16.msra.mxu0 %v1289
        %1455 = vmatpush.bf16.msra.mxu0 %v1288
        %1456 = vmatpush.bf16.msra.mxu0 %v1287
        %1457 = vmatmul.bf16.gmra.mxu0 %v809
        %v1458 = vpop.f32.mrf.mxu0
        %v1459 = vadd.f32 %v1410, %v1458
        %v1460 = vpop.f32.mrf.mxu0
        %v1461 = vadd.f32 %v1412, %v1460
        %1462 = vmatmul.bf16.gmra.mxu0 %v811
        %v1463 = vpop.f32.mrf.mxu0
        %v1464 = vadd.f32 %v1415, %v1463
        %v1465 = vpop.f32.mrf.mxu0
        %v1466 = vadd.f32 %v1417, %v1465
        %1467 = vmatmul.bf16.gmra.mxu0 %v813
        %v1468 = vpop.f32.mrf.mxu0
        %v1469 = vadd.f32 %v1420, %v1468
        %v1470 = vpop.f32.mrf.mxu0
        %v1471 = vadd.f32 %v1422, %v1470
        %1472 = vmatmul.bf16.gmra.mxu0 %v815
        %v1473 = vpop.f32.mrf.mxu0
        %v1474 = vadd.f32 %v1425, %v1473
        %v1475 = vpop.f32.mrf.mxu0
        %v1476 = vadd.f32 %v1427, %v1475
        %1477 = vmatmul.bf16.gmra.mxu0 %v817
        %v1478 = vpop.f32.mrf.mxu0
        %v1479 = vadd.f32 %v1430, %v1478
        %v1480 = vpop.f32.mrf.mxu0
        %v1481 = vadd.f32 %v1432, %v1480
        %1482 = vmatmul.bf16.gmra.mxu0 %v819
        %v1483 = vpop.f32.mrf.mxu0
        %v1484 = vadd.f32 %v1435, %v1483
        %v1485 = vpop.f32.mrf.mxu0
        %v1486 = vadd.f32 %v1437, %v1485
        %1487 = vmatmul.bf16.gmra.mxu0 %v821
        %v1488 = vpop.f32.mrf.mxu0
        %v1489 = vadd.f32 %v1440, %v1488
        %v1490 = vpop.f32.mrf.mxu0
        %v1491 = vadd.f32 %v1442, %v1490
        %1492 = vmatmul.bf16.gmra.mxu0 %v823
        %v1493 = vpop.f32.mrf.mxu0
        %v1494 = vadd.f32 %v1445, %v1493
        %v1495 = vpop.f32.mrf.mxu0
        %v1496 = vadd.f32 %v1447, %v1495
        %1497 = vdwg.mxu0
        %1498 = vmatpush.bf16.msra.mxu0 %v1302
        %1499 = vmatpush.bf16.msra.mxu0 %v1301
        %1500 = vmatpush.bf16.msra.mxu0 %v1300
        %1501 = vmatpush.bf16.msra.mxu0 %v1299
        %1502 = vmatpush.bf16.msra.mxu0 %v1298
        %1503 = vmatpush.bf16.msra.mxu0 %v1297
        %1504 = vmatpush.bf16.msra.mxu0 %v1296
        %1505 = vmatpush.bf16.msra.mxu0 %v1295
        %1506 = vmatmul.bf16.gmra.mxu0 %v848
        %v1507 = vpop.f32.mrf.mxu0
        %v1508 = vadd.f32 %v1459, %v1507
        %v1509 = vpop.f32.mrf.mxu0
        %v1510 = vadd.f32 %v1461, %v1509
        %1511 = vmatmul.bf16.gmra.mxu0 %v864
        %v1512 = vpop.f32.mrf.mxu0
        %v1513 = vadd.f32 %v1464, %v1512
        %v1514 = vpop.f32.mrf.mxu0
        %v1515 = vadd.f32 %v1466, %v1514
        %1516 = vmatmul.bf16.gmra.mxu0 %v880
        %v1517 = vpop.f32.mrf.mxu0
        %v1518 = vadd.f32 %v1469, %v1517
        %v1519 = vpop.f32.mrf.mxu0
        %v1520 = vadd.f32 %v1471, %v1519
        %1521 = vmatmul.bf16.gmra.mxu0 %v896
        %v1522 = vpop.f32.mrf.mxu0
        %v1523 = vadd.f32 %v1474, %v1522
        %v1524 = vpop.f32.mrf.mxu0
        %v1525 = vadd.f32 %v1476, %v1524
        %1526 = vmatmul.bf16.gmra.mxu0 %v912
        %v1527 = vpop.f32.mrf.mxu0
        %v1528 = vadd.f32 %v1479, %v1527
        %v1529 = vpop.f32.mrf.mxu0
        %v1530 = vadd.f32 %v1481, %v1529
        %1531 = vmatmul.bf16.gmra.mxu0 %v928
        %v1532 = vpop.f32.mrf.mxu0
        %v1533 = vadd.f32 %v1484, %v1532
        %v1534 = vpop.f32.mrf.mxu0
        %v1535 = vadd.f32 %v1486, %v1534
        %1536 = vmatmul.bf16.gmra.mxu0 %v944
        %v1537 = vpop.f32.mrf.mxu0
        %v1538 = vadd.f32 %v1489, %v1537
        %v1539 = vpop.f32.mrf.mxu0
        %v1540 = vadd.f32 %v1491, %v1539
        %1541 = vmatmul.bf16.gmra.mxu0 %v960
        %v1542 = vpop.f32.mrf.mxu0
        %v1543 = vadd.f32 %v1494, %v1542
        %v1544 = vpop.f32.mrf.mxu0
        %v1545 = vadd.f32 %v1496, %v1544
        %1546 = vdwg.mxu0
        %1547 = vmatpush.bf16.msra.mxu0 %v1310
        %1548 = vmatpush.bf16.msra.mxu0 %v1309
        %1549 = vmatpush.bf16.msra.mxu0 %v1308
        %1550 = vmatpush.bf16.msra.mxu0 %v1307
        %1551 = vmatpush.bf16.msra.mxu0 %v1306
        %1552 = vmatpush.bf16.msra.mxu0 %v1305
        %1553 = vmatpush.bf16.msra.mxu0 %v1304
        %1554 = vmatpush.bf16.msra.mxu0 %v1303
        %1555 = vmatmul.bf16.gmra.mxu0 %v976
        %v1556 = vpop.f32.mrf.mxu0
        %v1557 = vadd.f32 %v1508, %v1556
        %v1558 = vpop.f32.mrf.mxu0
        %v1559 = vadd.f32 %v1510, %v1558
        %1560 = vmatmul.bf16.gmra.mxu0 %v983
        %v1561 = vpop.f32.mrf.mxu0
        %v1562 = vadd.f32 %v1513, %v1561
        %v1563 = vpop.f32.mrf.mxu0
        %v1564 = vadd.f32 %v1515, %v1563
        %1565 = vmatmul.bf16.gmra.mxu0 %v990
        %v1566 = vpop.f32.mrf.mxu0
        %v1567 = vadd.f32 %v1518, %v1566
        %v1568 = vpop.f32.mrf.mxu0
        %v1569 = vadd.f32 %v1520, %v1568
        %1570 = vmatmul.bf16.gmra.mxu0 %v997
        %v1571 = vpop.f32.mrf.mxu0
        %v1572 = vadd.f32 %v1523, %v1571
        %v1573 = vpop.f32.mrf.mxu0
        %v1574 = vadd.f32 %v1525, %v1573
        %1575 = vmatmul.bf16.gmra.mxu0 %v1004
        %v1576 = vpop.f32.mrf.mxu0
        %v1577 = vadd.f32 %v1528, %v1576
        %v1578 = vpop.f32.mrf.mxu0
        %v1579 = vadd.f32 %v1530, %v1578
        %1580 = vmatmul.bf16.gmra.mxu0 %v1011
        %v1581 = vpop.f32.mrf.mxu0
        %v1582 = vadd.f32 %v1533, %v1581
        %v1583 = vpop.f32.mrf.mxu0
        %v1584 = vadd.f32 %v1535, %v1583
        %1585 = vmatmul.bf16.gmra.mxu0 %v1018
        %v1586 = vpop.f32.mrf.mxu0
        %v1587 = vadd.f32 %v1538, %v1586
        %v1588 = vpop.f32.mrf.mxu0
        %v1589 = vadd.f32 %v1540, %v1588
        %1590 = vmatmul.bf16.gmra.mxu0 %v1025
        %v1591 = vpop.f32.mrf.mxu0
        %v1592 = vadd.f32 %v1543, %v1591
        %v1593 = vpop.f32.mrf.mxu0
        %v1594 = vadd.f32 %v1545, %v1593
        %1595 = vdwg.mxu0
        %v1596 = vmax.f32 %v1557, 0.0
        %v1597 = vmax.f32 %v1559, 0.0
        %v1598 = vmax.f32 %v1562, 0.0
        %v1599 = vmax.f32 %v1564, 0.0
        %v1600 = vmax.f32 %v1567, 0.0
        %v1601 = vmax.f32 %v1569, 0.0
        %v1602 = vmax.f32 %v1572, 0.0
        %v1603 = vmax.f32 %v1574, 0.0
        %v1604 = vmax.f32 %v1577, 0.0
        %v1605 = vmax.f32 %v1579, 0.0
        %v1606 = vmax.f32 %v1582, 0.0
        %v1607 = vmax.f32 %v1584, 0.0
        %v1608 = vmax.f32 %v1587, 0.0
        %v1609 = vmax.f32 %v1589, 0.0
        %v1610 = vmax.f32 %v1592, 0.0
        %v1611 = vmax.f32 %v1594, 0.0
        %v1612 = vpack.c.bf16 %v1596, %v1596
        %v1613 = vpack.c.bf16 %v1597, %v1597
        %v1614 = vpack.c.bf16 %v1598, %v1598
        %v1615 = vpack.c.bf16 %v1599, %v1599
        %v1616 = vpack.c.bf16 %v1600, %v1600
        %v1617 = vpack.c.bf16 %v1601, %v1601
        %v1618 = vpack.c.bf16 %v1602, %v1602
        %v1619 = vpack.c.bf16 %v1603, %v1603
        %v1620 = vpack.c.bf16 %v1604, %v1604
        %v1621 = vpack.c.bf16 %v1605, %v1605
        %v1622 = vpack.c.bf16 %v1606, %v1606
        %v1623 = vpack.c.bf16 %v1607, %v1607
        %v1624 = vpack.c.bf16 %v1608, %v1608
        %v1625 = vpack.c.bf16 %v1609, %v1609
        %v1626 = vpack.c.bf16 %v1610, %v1610
        %v1627 = vpack.c.bf16 %v1611, %v1611
        %1628 = vst [vmem:[#allocation2 + $0x8] sm:$0xf] %v1612
        %1629 = vst [vmem:[#allocation2 + $0xc] sm:$0xf] %v1613
        %1630 = vst [vmem:[#allocation2 + $0x18] sm:$0xf] %v1614
        %1631 = vst [vmem:[#allocation2 + $0x1c] sm:$0xf] %v1615
        %1632 = vst [vmem:[#allocation2 + $0x28] sm:$0xf] %v1616
        %1633 = vst [vmem:[#allocation2 + $0x2c] sm:$0xf] %v1617
        %1634 = vst [vmem:[#allocation2 + $0x38] sm:$0xf] %v1618
        %1635 = vst [vmem:[#allocation2 + $0x3c] sm:$0xf] %v1619
        %1636 = vst [vmem:[#allocation2 + $0x48] sm:$0xf] %v1620
        %1637 = vst [vmem:[#allocation2 + $0x4c] sm:$0xf] %v1621
        %1638 = vst [vmem:[#allocation2 + $0x58] sm:$0xf] %v1622
        %1639 = vst [vmem:[#allocation2 + $0x5c] sm:$0xf] %v1623
        %1640 = vst [vmem:[#allocation2 + $0x68] sm:$0xf] %v1624
        %1641 = vst [vmem:[#allocation2 + $0x6c] sm:$0xf] %v1625
        %1642 = vst [vmem:[#allocation2 + $0x78] sm:$0xf] %v1626
        %1643 = vst [vmem:[#allocation2 + $0x7c] sm:$0xf] %v1627
        %v1644 = vld [vmem:[#allocation2 + $0x4] sm:$0x8]
        %v1645 = vld [vmem:[#allocation2 + $0x8] sm:$0xf]
        %v1646 = vld [vmem:[#allocation2 + $0xc] sm:$0x7]
        %v1647 = vld [vmem:[#allocation2 + $0x14] sm:$0x8]
        %v1648 = vld [vmem:[#allocation2 + $0x18] sm:$0xf]
        %v1649 = vld [vmem:[#allocation2 + $0x1c] sm:$0x7]
        %v1650 = vld [vmem:[#allocation2 + $0x24] sm:$0x8]
        %v1651 = vld [vmem:[#allocation2 + $0x28] sm:$0xf]
        %v1652 = vld [vmem:[#allocation2 + $0x2c] sm:$0x7]
        %v1653 = vld [vmem:[#allocation2 + $0x34] sm:$0x8]
        %v1654 = vld [vmem:[#allocation2 + $0x38] sm:$0xf]
        %v1655 = vld [vmem:[#allocation2 + $0x3c] sm:$0x7]
        %v1656 = vld [vmem:[#allocation2 + $0x44] sm:$0x8]
        %v1657 = vld [vmem:[#allocation2 + $0x48] sm:$0xf]
        %v1658 = vld [vmem:[#allocation2 + $0x4c] sm:$0x7]
        %v1659 = vld [vmem:[#allocation2 + $0x54] sm:$0x8]
        %v1660 = vld [vmem:[#allocation2 + $0x58] sm:$0xf]
        %v1661 = vld [vmem:[#allocation2 + $0x5c] sm:$0x7]
        %v1662 = vld [vmem:[#allocation2 + $0x64] sm:$0x8]
        %v1663 = vld [vmem:[#allocation2 + $0x68] sm:$0xf]
        %v1664 = vld [vmem:[#allocation2 + $0x6c] sm:$0x7]
        %v1665 = vld [vmem:[#allocation2 + $0x74] sm:$0x8]
        %v1666 = vld [vmem:[#allocation2 + $0x78] sm:$0xf]
        %v1667 = vld [vmem:[#allocation2 + $0x7c] sm:$0x7]
        %v1671 = vunpack.c.l.b16 %v1644
        %v1672 = vunpack.c.l.b16 %v1645
        %v1673 = vunpack.c.l.b16 %v1646
        %v1674 = vpack.c.b16 %v1672, %v1671
        %v1675 = vpack.c.b16 %v1673, %v1673
        %v1676 = vrot.slane %v1674, 3
        %v1677 = vrot.slane %v1675, 3
        %v1678 = vsel %vm543, %v1676, %v1677
        %v1683 = vunpack.c.l.b16 %v1647
        %v1684 = vunpack.c.l.b16 %v1648
        %v1685 = vunpack.c.l.b16 %v1649
        %v1686 = vpack.c.b16 %v1684, %v1683
        %v1687 = vpack.c.b16 %v1685, %v1685
        %v1688 = vrot.slane %v1686, 3
        %v1689 = vrot.slane %v1687, 3
        %v1690 = vsel %vm543, %v1688, %v1689
        %v1695 = vunpack.c.l.b16 %v1650
        %v1696 = vunpack.c.l.b16 %v1651
        %v1697 = vunpack.c.l.b16 %v1652
        %v1698 = vpack.c.b16 %v1696, %v1695
        %v1699 = vpack.c.b16 %v1697, %v1697
        %v1700 = vrot.slane %v1698, 3
        %v1701 = vrot.slane %v1699, 3
        %v1702 = vsel %vm543, %v1700, %v1701
        %v1707 = vunpack.c.l.b16 %v1653
        %v1708 = vunpack.c.l.b16 %v1654
        %v1709 = vunpack.c.l.b16 %v1655
        %v1710 = vpack.c.b16 %v1708, %v1707
        %v1711 = vpack.c.b16 %v1709, %v1709
        %v1712 = vrot.slane %v1710, 3
        %v1713 = vrot.slane %v1711, 3
        %v1714 = vsel %vm543, %v1712, %v1713
        %v1719 = vunpack.c.l.b16 %v1656
        %v1720 = vunpack.c.l.b16 %v1657
        %v1721 = vunpack.c.l.b16 %v1658
        %v1722 = vpack.c.b16 %v1720, %v1719
        %v1723 = vpack.c.b16 %v1721, %v1721
        %v1724 = vrot.slane %v1722, 3
        %v1725 = vrot.slane %v1723, 3
        %v1726 = vsel %vm543, %v1724, %v1725
        %v1731 = vunpack.c.l.b16 %v1659
        %v1732 = vunpack.c.l.b16 %v1660
        %v1733 = vunpack.c.l.b16 %v1661
        %v1734 = vpack.c.b16 %v1732, %v1731
        %v1735 = vpack.c.b16 %v1733, %v1733
        %v1736 = vrot.slane %v1734, 3
        %v1737 = vrot.slane %v1735, 3
        %v1738 = vsel %vm543, %v1736, %v1737
        %v1743 = vunpack.c.l.b16 %v1662
        %v1744 = vunpack.c.l.b16 %v1663
        %v1745 = vunpack.c.l.b16 %v1664
        %v1746 = vpack.c.b16 %v1744, %v1743
        %v1747 = vpack.c.b16 %v1745, %v1745
        %v1748 = vrot.slane %v1746, 3
        %v1749 = vrot.slane %v1747, 3
        %v1750 = vsel %vm543, %v1748, %v1749
        %v1755 = vunpack.c.l.b16 %v1665
        %v1756 = vunpack.c.l.b16 %v1666
        %v1757 = vunpack.c.l.b16 %v1667
        %v1758 = vpack.c.b16 %v1756, %v1755
        %v1759 = vpack.c.b16 %v1757, %v1757
        %v1760 = vrot.slane %v1758, 3
        %v1761 = vrot.slane %v1759, 3
        %v1762 = vsel %vm543, %v1760, %v1761
        %v1764 = vld [vmem:[#allocation2 + $0xc] sm:$0xf]
        %v1765 = vld [vmem:[#allocation2 + $0x1c] sm:$0xf]
        %v1766 = vld [vmem:[#allocation2 + $0x2c] sm:$0xf]
        %v1767 = vld [vmem:[#allocation2 + $0x3c] sm:$0xf]
        %v1768 = vld [vmem:[#allocation2 + $0x4c] sm:$0xf]
        %v1769 = vld [vmem:[#allocation2 + $0x5c] sm:$0xf]
        %v1770 = vld [vmem:[#allocation2 + $0x6c] sm:$0xf]
        %v1771 = vld [vmem:[#allocation2 + $0x7c] sm:$0xf]
        %v1773 = vunpack.c.l.b16 %v1764
        %v1774 = vpack.c.b16 %v1773, %v1773
        %v1776 = vshrl.u32 %v1674, 16
        %v1778 = vrot.slane %v1776, 3
        %v1779 = vshll.u32 %v1674, 16
        %v1781 = vrot.slane %v1779, 4
        %v1782 = vor.u32 %v1778, %v1781
        %v1784 = vshrl.u32 %v1774, 16
        %v1786 = vrot.slane %v1784, 3
        %v1787 = vshll.u32 %v1774, 16
        %v1789 = vrot.slane %v1787, 4
        %v1790 = vor.u32 %v1786, %v1789
        %v1791 = vsel %vm643, %v1782, %v1790
        %v1794 = vunpack.c.l.b16 %v1765
        %v1795 = vpack.c.b16 %v1794, %v1794
        %v1797 = vshrl.u32 %v1686, 16
        %v1799 = vrot.slane %v1797, 3
        %v1800 = vshll.u32 %v1686, 16
        %v1802 = vrot.slane %v1800, 4
        %v1803 = vor.u32 %v1799, %v1802
        %v1805 = vshrl.u32 %v1795, 16
        %v1807 = vrot.slane %v1805, 3
        %v1808 = vshll.u32 %v1795, 16
        %v1810 = vrot.slane %v1808, 4
        %v1811 = vor.u32 %v1807, %v1810
        %v1812 = vsel %vm643, %v1803, %v1811
        %v1815 = vunpack.c.l.b16 %v1766
        %v1816 = vpack.c.b16 %v1815, %v1815
        %v1818 = vshrl.u32 %v1698, 16
        %v1820 = vrot.slane %v1818, 3
        %v1821 = vshll.u32 %v1698, 16
        %v1823 = vrot.slane %v1821, 4
        %v1824 = vor.u32 %v1820, %v1823
        %v1826 = vshrl.u32 %v1816, 16
        %v1828 = vrot.slane %v1826, 3
        %v1829 = vshll.u32 %v1816, 16
        %v1831 = vrot.slane %v1829, 4
        %v1832 = vor.u32 %v1828, %v1831
        %v1833 = vsel %vm643, %v1824, %v1832
        %v1836 = vunpack.c.l.b16 %v1767
        %v1837 = vpack.c.b16 %v1836, %v1836
        %v1839 = vshrl.u32 %v1710, 16
        %v1841 = vrot.slane %v1839, 3
        %v1842 = vshll.u32 %v1710, 16
        %v1844 = vrot.slane %v1842, 4
        %v1845 = vor.u32 %v1841, %v1844
        %v1847 = vshrl.u32 %v1837, 16
        %v1849 = vrot.slane %v1847, 3
        %v1850 = vshll.u32 %v1837, 16
        %v1852 = vrot.slane %v1850, 4
        %v1853 = vor.u32 %v1849, %v1852
        %v1854 = vsel %vm643, %v1845, %v1853
        %v1857 = vunpack.c.l.b16 %v1768
        %v1858 = vpack.c.b16 %v1857, %v1857
        %v1860 = vshrl.u32 %v1722, 16
        %v1862 = vrot.slane %v1860, 3
        %v1863 = vshll.u32 %v1722, 16
        %v1865 = vrot.slane %v1863, 4
        %v1866 = vor.u32 %v1862, %v1865
        %v1868 = vshrl.u32 %v1858, 16
        %v1870 = vrot.slane %v1868, 3
        %v1871 = vshll.u32 %v1858, 16
        %v1873 = vrot.slane %v1871, 4
        %v1874 = vor.u32 %v1870, %v1873
        %v1875 = vsel %vm643, %v1866, %v1874
        %v1878 = vunpack.c.l.b16 %v1769
        %v1879 = vpack.c.b16 %v1878, %v1878
        %v1881 = vshrl.u32 %v1734, 16
        %v1883 = vrot.slane %v1881, 3
        %v1884 = vshll.u32 %v1734, 16
        %v1886 = vrot.slane %v1884, 4
        %v1887 = vor.u32 %v1883, %v1886
        %v1889 = vshrl.u32 %v1879, 16
        %v1891 = vrot.slane %v1889, 3
        %v1892 = vshll.u32 %v1879, 16
        %v1894 = vrot.slane %v1892, 4
        %v1895 = vor.u32 %v1891, %v1894
        %v1896 = vsel %vm643, %v1887, %v1895
        %v1899 = vunpack.c.l.b16 %v1770
        %v1900 = vpack.c.b16 %v1899, %v1899
        %v1902 = vshrl.u32 %v1746, 16
        %v1904 = vrot.slane %v1902, 3
        %v1905 = vshll.u32 %v1746, 16
        %v1907 = vrot.slane %v1905, 4
        %v1908 = vor.u32 %v1904, %v1907
        %v1910 = vshrl.u32 %v1900, 16
        %v1912 = vrot.slane %v1910, 3
        %v1913 = vshll.u32 %v1900, 16
        %v1915 = vrot.slane %v1913, 4
        %v1916 = vor.u32 %v1912, %v1915
        %v1917 = vsel %vm643, %v1908, %v1916
        %v1920 = vunpack.c.l.b16 %v1771
        %v1921 = vpack.c.b16 %v1920, %v1920
        %v1923 = vshrl.u32 %v1758, 16
        %v1925 = vrot.slane %v1923, 3
        %v1926 = vshll.u32 %v1758, 16
        %v1928 = vrot.slane %v1926, 4
        %v1929 = vor.u32 %v1925, %v1928
        %v1931 = vshrl.u32 %v1921, 16
        %v1933 = vrot.slane %v1931, 3
        %v1934 = vshll.u32 %v1921, 16
        %v1936 = vrot.slane %v1934, 4
        %v1937 = vor.u32 %v1933, %v1936
        %v1938 = vsel %vm643, %v1929, %v1937
        %v1940 = vpack.c.b16 %v1773, %v1672
        %v1942 = vpack.c.b16 %v1794, %v1684
        %v1944 = vpack.c.b16 %v1815, %v1696
        %v1946 = vpack.c.b16 %v1836, %v1708
        %v1948 = vpack.c.b16 %v1857, %v1720
        %v1950 = vpack.c.b16 %v1878, %v1732
        %v1952 = vpack.c.b16 %v1899, %v1744
        %v1954 = vpack.c.b16 %v1920, %v1756
        %v1956 = vld [vmem:[#allocation2 + $0x10] sm:$0x1]
        %v1957 = vld [vmem:[#allocation2 + $0x20] sm:$0x1]
        %v1958 = vld [vmem:[#allocation2 + $0x30] sm:$0x1]
        %v1959 = vld [vmem:[#allocation2 + $0x40] sm:$0x1]
        %v1960 = vld [vmem:[#allocation2 + $0x50] sm:$0x1]
        %v1961 = vld [vmem:[#allocation2 + $0x60] sm:$0x1]
        %v1962 = vld [vmem:[#allocation2 + $0x70] sm:$0x1]
        %v1963 = vld [vmem:[#allocation2 + $0x80] sm:$0x1]
        %v1965 = vunpack.c.l.b16 %v1956
        %v1966 = vpack.c.b16 %v1965, %v1965
        %v1968 = vshrl.u32 %v1940, 16
        %v1970 = vshll.u32 %v1940, 16
        %v1972 = vrot.slane %v1970, 1
        %v1973 = vor.u32 %v1968, %v1972
        %v1975 = vshll.u32 %v1966, 16
        %v1977 = vrot.slane %v1975, 1
        %v1978 = vsel %vm836, %v1973, %v1977
        %v1981 = vunpack.c.l.b16 %v1957
        %v1982 = vpack.c.b16 %v1981, %v1981
        %v1984 = vshrl.u32 %v1942, 16
        %v1986 = vshll.u32 %v1942, 16
        %v1988 = vrot.slane %v1986, 1
        %v1989 = vor.u32 %v1984, %v1988
        %v1991 = vshll.u32 %v1982, 16
        %v1993 = vrot.slane %v1991, 1
        %v1994 = vsel %vm836, %v1989, %v1993
        %v1997 = vunpack.c.l.b16 %v1958
        %v1998 = vpack.c.b16 %v1997, %v1997
        %v2000 = vshrl.u32 %v1944, 16
        %v2002 = vshll.u32 %v1944, 16
        %v2004 = vrot.slane %v2002, 1
        %v2005 = vor.u32 %v2000, %v2004
        %v2007 = vshll.u32 %v1998, 16
        %v2009 = vrot.slane %v2007, 1
        %v2010 = vsel %vm836, %v2005, %v2009
        %v2013 = vunpack.c.l.b16 %v1959
        %v2014 = vpack.c.b16 %v2013, %v2013
        %v2016 = vshrl.u32 %v1946, 16
        %v2018 = vshll.u32 %v1946, 16
        %v2020 = vrot.slane %v2018, 1
        %v2021 = vor.u32 %v2016, %v2020
        %v2023 = vshll.u32 %v2014, 16
        %v2025 = vrot.slane %v2023, 1
        %v2026 = vsel %vm836, %v2021, %v2025
        %v2029 = vunpack.c.l.b16 %v1960
        %v2030 = vpack.c.b16 %v2029, %v2029
        %v2032 = vshrl.u32 %v1948, 16
        %v2034 = vshll.u32 %v1948, 16
        %v2036 = vrot.slane %v2034, 1
        %v2037 = vor.u32 %v2032, %v2036
        %v2039 = vshll.u32 %v2030, 16
        %v2041 = vrot.slane %v2039, 1
        %v2042 = vsel %vm836, %v2037, %v2041
        %v2045 = vunpack.c.l.b16 %v1961
        %v2046 = vpack.c.b16 %v2045, %v2045
        %v2048 = vshrl.u32 %v1950, 16
        %v2050 = vshll.u32 %v1950, 16
        %v2052 = vrot.slane %v2050, 1
        %v2053 = vor.u32 %v2048, %v2052
        %v2055 = vshll.u32 %v2046, 16
        %v2057 = vrot.slane %v2055, 1
        %v2058 = vsel %vm836, %v2053, %v2057
        %v2061 = vunpack.c.l.b16 %v1962
        %v2062 = vpack.c.b16 %v2061, %v2061
        %v2064 = vshrl.u32 %v1952, 16
        %v2066 = vshll.u32 %v1952, 16
        %v2068 = vrot.slane %v2066, 1
        %v2069 = vor.u32 %v2064, %v2068
        %v2071 = vshll.u32 %v2062, 16
        %v2073 = vrot.slane %v2071, 1
        %v2074 = vsel %vm836, %v2069, %v2073
        %v2077 = vunpack.c.l.b16 %v1963
        %v2078 = vpack.c.b16 %v2077, %v2077
        %v2080 = vshrl.u32 %v1954, 16
        %v2082 = vshll.u32 %v1954, 16
        %v2084 = vrot.slane %v2082, 1
        %v2085 = vor.u32 %v2080, %v2084
        %v2087 = vshll.u32 %v2078, 16
        %v2089 = vrot.slane %v2087, 1
        %v2090 = vsel %vm836, %v2085, %v2089
        %v2092 = vld [vmem:[#allocation2 + $0x8] sm:$0xe]
        %v2093 = vld [vmem:[#allocation2 + $0x18] sm:$0xe]
        %v2094 = vld [vmem:[#allocation2 + $0x28] sm:$0xe]
        %v2095 = vld [vmem:[#allocation2 + $0x38] sm:$0xe]
        %v2096 = vld [vmem:[#allocation2 + $0x48] sm:$0xe]
        %v2097 = vld [vmem:[#allocation2 + $0x58] sm:$0xe]
        %v2098 = vld [vmem:[#allocation2 + $0x68] sm:$0xe]
        %v2099 = vld [vmem:[#allocation2 + $0x78] sm:$0xe]
        %v2101 = vunpack.c.l.b16 %v2092
        %v2102 = vpack.c.b16 %v1773, %v2101
        %v2103 = vrot.slane %v2102, 1
        %v2104 = vrot.slane %v1966, 1
        %v2105 = vsel %vm973, %v2103, %v2104
        %v2108 = vunpack.c.l.b16 %v2093
        %v2109 = vpack.c.b16 %v1794, %v2108
        %v2110 = vrot.slane %v2109, 1
        %v2111 = vrot.slane %v1982, 1
        %v2112 = vsel %vm973, %v2110, %v2111
        %v2115 = vunpack.c.l.b16 %v2094
        %v2116 = vpack.c.b16 %v1815, %v2115
        %v2117 = vrot.slane %v2116, 1
        %v2118 = vrot.slane %v1998, 1
        %v2119 = vsel %vm973, %v2117, %v2118
        %v2122 = vunpack.c.l.b16 %v2095
        %v2123 = vpack.c.b16 %v1836, %v2122
        %v2124 = vrot.slane %v2123, 1
        %v2125 = vrot.slane %v2014, 1
        %v2126 = vsel %vm973, %v2124, %v2125
        %v2129 = vunpack.c.l.b16 %v2096
        %v2130 = vpack.c.b16 %v1857, %v2129
        %v2131 = vrot.slane %v2130, 1
        %v2132 = vrot.slane %v2030, 1
        %v2133 = vsel %vm973, %v2131, %v2132
        %v2136 = vunpack.c.l.b16 %v2097
        %v2137 = vpack.c.b16 %v1878, %v2136
        %v2138 = vrot.slane %v2137, 1
        %v2139 = vrot.slane %v2046, 1
        %v2140 = vsel %vm973, %v2138, %v2139
        %v2143 = vunpack.c.l.b16 %v2098
        %v2144 = vpack.c.b16 %v1899, %v2143
        %v2145 = vrot.slane %v2144, 1
        %v2146 = vrot.slane %v2062, 1
        %v2147 = vsel %vm973, %v2145, %v2146
        %v2150 = vunpack.c.l.b16 %v2099
        %v2151 = vpack.c.b16 %v1920, %v2150
        %v2152 = vrot.slane %v2151, 1
        %v2153 = vrot.slane %v2078, 1
        %v2154 = vsel %vm973, %v2152, %v2153
        %v2156 = vld [vmem:[#allocation8] sm:$0xf]
        %v2157 = vld [vmem:[#allocation8 + $0x4] sm:$0xf]
        %v2158 = vld [vmem:[#allocation8 + $0x8] sm:$0xf]
        %v2159 = vld [vmem:[#allocation8 + $0xc] sm:$0xf]
        %v2160 = vld [vmem:[#allocation8 + $0x10] sm:$0xf]
        %v2161 = vld [vmem:[#allocation8 + $0x14] sm:$0xf]
        %v2162 = vld [vmem:[#allocation8 + $0x18] sm:$0xf]
        %v2163 = vld [vmem:[#allocation8 + $0x1c] sm:$0xf]
        %v2164 = vld [vmem:[#allocation8 + $0x20] sm:$0xf]
        %v2165 = vld [vmem:[#allocation8 + $0x24] sm:$0xf]
        %v2166 = vld [vmem:[#allocation8 + $0x28] sm:$0xf]
        %v2167 = vld [vmem:[#allocation8 + $0x2c] sm:$0xf]
        %v2168 = vld [vmem:[#allocation8 + $0x30] sm:$0xf]
        %v2169 = vld [vmem:[#allocation8 + $0x34] sm:$0xf]
        %v2170 = vld [vmem:[#allocation8 + $0x38] sm:$0xf]
        %v2171 = vld [vmem:[#allocation8 + $0x3c] sm:$0xf]
        %v2172 = vld [vmem:[#allocation8 + $0x40] sm:$0xf]
        %v2173 = vld [vmem:[#allocation8 + $0x44] sm:$0xf]
        %v2174 = vld [vmem:[#allocation8 + $0x48] sm:$0xf]
        %v2175 = vld [vmem:[#allocation8 + $0x4c] sm:$0xf]
        %v2176 = vld [vmem:[#allocation8 + $0x50] sm:$0xf]
        %v2177 = vld [vmem:[#allocation8 + $0x54] sm:$0xf]
        %v2178 = vld [vmem:[#allocation8 + $0x58] sm:$0xf]
        %v2179 = vld [vmem:[#allocation8 + $0x5c] sm:$0xf]
        %v2180 = vld [vmem:[#allocation8 + $0x60] sm:$0xf]
        %v2181 = vld [vmem:[#allocation8 + $0x64] sm:$0xf]
        %v2182 = vld [vmem:[#allocation8 + $0x68] sm:$0xf]
        %v2183 = vld [vmem:[#allocation8 + $0x6c] sm:$0xf]
        %v2184 = vld [vmem:[#allocation8 + $0x70] sm:$0xf]
        %v2185 = vld [vmem:[#allocation8 + $0x74] sm:$0xf]
        %v2186 = vld [vmem:[#allocation8 + $0x78] sm:$0xf]
        %v2187 = vld [vmem:[#allocation8 + $0x7c] sm:$0xf]
        %v2188 = vld [vmem:[#allocation8 + $0x80] sm:$0xf]
        %v2189 = vld [vmem:[#allocation8 + $0x84] sm:$0xf]
        %v2190 = vld [vmem:[#allocation8 + $0x88] sm:$0xf]
        %v2191 = vld [vmem:[#allocation8 + $0x8c] sm:$0xf]
        %v2192 = vld [vmem:[#allocation8 + $0x90] sm:$0xf]
        %v2193 = vld [vmem:[#allocation8 + $0x94] sm:$0xf]
        %v2194 = vld [vmem:[#allocation8 + $0x98] sm:$0xf]
        %v2195 = vld [vmem:[#allocation8 + $0x9c] sm:$0xf]
        %v2196 = vld [vmem:[#allocation8 + $0xa0] sm:$0xf]
        %v2197 = vld [vmem:[#allocation8 + $0xa4] sm:$0xf]
        %v2198 = vld [vmem:[#allocation8 + $0xa8] sm:$0xf]
        %v2199 = vld [vmem:[#allocation8 + $0xac] sm:$0xf]
        %v2200 = vld [vmem:[#allocation8 + $0xb0] sm:$0xf]
        %v2201 = vld [vmem:[#allocation8 + $0xb4] sm:$0xf]
        %v2202 = vld [vmem:[#allocation8 + $0xb8] sm:$0xf]
        %v2203 = vld [vmem:[#allocation8 + $0xbc] sm:$0xf]
        %v2204 = vld [vmem:[#allocation8 + $0xc0] sm:$0xf]
        %v2205 = vld [vmem:[#allocation8 + $0xc4] sm:$0xf]
        %v2206 = vld [vmem:[#allocation8 + $0xc8] sm:$0xf]
        %v2207 = vld [vmem:[#allocation8 + $0xcc] sm:$0xf]
        %v2208 = vld [vmem:[#allocation8 + $0xd0] sm:$0xf]
        %v2209 = vld [vmem:[#allocation8 + $0xd4] sm:$0xf]
        %v2210 = vld [vmem:[#allocation8 + $0xd8] sm:$0xf]
        %v2211 = vld [vmem:[#allocation8 + $0xdc] sm:$0xf]
        %v2212 = vld [vmem:[#allocation8 + $0xe0] sm:$0xf]
        %v2213 = vld [vmem:[#allocation8 + $0xe4] sm:$0xf]
        %v2214 = vld [vmem:[#allocation8 + $0xe8] sm:$0xf]
        %v2215 = vld [vmem:[#allocation8 + $0xec] sm:$0xf]
        %v2216 = vld [vmem:[#allocation8 + $0xf0] sm:$0xf]
        %v2217 = vld [vmem:[#allocation8 + $0xf4] sm:$0xf]
        %v2218 = vld [vmem:[#allocation8 + $0xf8] sm:$0xf]
        %v2219 = vld [vmem:[#allocation8 + $0xfc] sm:$0xf]
        %v2220 = vld [vmem:[#allocation8 + $0x100] sm:$0xf]
        %v2221 = vld [vmem:[#allocation8 + $0x104] sm:$0xf]
        %v2222 = vld [vmem:[#allocation8 + $0x108] sm:$0xf]
        %v2223 = vld [vmem:[#allocation8 + $0x10c] sm:$0xf]
        %v2224 = vld [vmem:[#allocation8 + $0x110] sm:$0xf]
        %v2225 = vld [vmem:[#allocation8 + $0x114] sm:$0xf]
        %v2226 = vld [vmem:[#allocation8 + $0x118] sm:$0xf]
        %v2227 = vld [vmem:[#allocation8 + $0x11c] sm:$0xf]
        %v2228 = vld [vmem:[#allocation8 + $0x120] sm:$0xf]
        %v2229 = vld [vmem:[#allocation8 + $0x124] sm:$0xf]
        %v2230 = vld [vmem:[#allocation8 + $0x128] sm:$0xf]
        %v2231 = vld [vmem:[#allocation8 + $0x12c] sm:$0xf]
        %v2232 = vld [vmem:[#allocation8 + $0x130] sm:$0xf]
        %v2233 = vld [vmem:[#allocation8 + $0x134] sm:$0xf]
        %v2234 = vld [vmem:[#allocation8 + $0x138] sm:$0xf]
        %v2235 = vld [vmem:[#allocation8 + $0x13c] sm:$0xf]
        %v2236 = vld [vmem:[#allocation9] sm:$0x1]
        %v2238 = vperm.slane %v2236, 0
        %v2320 = vunpack.c.l.b16 %v2156
        %v2321 = vunpack.c.l.b16 %v2157
        %v2322 = vunpack.c.l.b16 %v2158
        %v2323 = vunpack.c.l.b16 %v2159
        %v2324 = vunpack.c.l.b16 %v2160
        %v2325 = vunpack.c.l.b16 %v2161
        %v2326 = vunpack.c.l.b16 %v2162
        %v2327 = vunpack.c.l.b16 %v2163
        %v2328 = vunpack.c.l.b16 %v2164
        %v2329 = vunpack.c.l.b16 %v2165
        %v2330 = vunpack.c.l.b16 %v2166
        %v2331 = vunpack.c.l.b16 %v2167
        %v2332 = vunpack.c.l.b16 %v2168
        %v2333 = vunpack.c.l.b16 %v2169
        %v2334 = vunpack.c.l.b16 %v2170
        %v2335 = vunpack.c.l.b16 %v2171
        %v2336 = vunpack.c.l.b16 %v2172
        %v2337 = vunpack.c.l.b16 %v2173
        %v2338 = vunpack.c.l.b16 %v2174
        %v2339 = vunpack.c.l.b16 %v2175
        %v2340 = vunpack.c.l.b16 %v2176
        %v2341 = vunpack.c.l.b16 %v2177
        %v2342 = vunpack.c.l.b16 %v2178
        %v2343 = vunpack.c.l.b16 %v2179
        %v2344 = vunpack.c.l.b16 %v2180
        %v2345 = vunpack.c.l.b16 %v2181
        %v2346 = vunpack.c.l.b16 %v2182
        %v2347 = vunpack.c.l.b16 %v2183
        %v2348 = vunpack.c.l.b16 %v2184
        %v2349 = vunpack.c.l.b16 %v2185
        %v2350 = vunpack.c.l.b16 %v2186
        %v2351 = vunpack.c.l.b16 %v2187
        %v2352 = vunpack.c.l.b16 %v2188
        %v2353 = vunpack.c.l.b16 %v2189
        %v2354 = vunpack.c.l.b16 %v2190
        %v2355 = vunpack.c.l.b16 %v2191
        %v2356 = vunpack.c.l.b16 %v2192
        %v2357 = vunpack.c.l.b16 %v2193
        %v2358 = vunpack.c.l.b16 %v2194
        %v2359 = vunpack.c.l.b16 %v2195
        %v2360 = vunpack.c.l.b16 %v2196
        %v2361 = vunpack.c.l.b16 %v2197
        %v2362 = vunpack.c.l.b16 %v2198
        %v2363 = vunpack.c.l.b16 %v2199
        %v2364 = vunpack.c.l.b16 %v2200
        %v2365 = vunpack.c.l.b16 %v2201
        %v2366 = vunpack.c.l.b16 %v2202
        %v2367 = vunpack.c.l.b16 %v2203
        %v2368 = vunpack.c.l.b16 %v2204
        %v2369 = vunpack.c.l.b16 %v2205
        %v2370 = vunpack.c.l.b16 %v2206
        %v2371 = vunpack.c.l.b16 %v2207
        %v2372 = vunpack.c.l.b16 %v2208
        %v2373 = vunpack.c.l.b16 %v2209
        %v2374 = vunpack.c.l.b16 %v2210
        %v2375 = vunpack.c.l.b16 %v2211
        %v2376 = vunpack.c.l.b16 %v2212
        %v2377 = vunpack.c.l.b16 %v2213
        %v2378 = vunpack.c.l.b16 %v2214
        %v2379 = vunpack.c.l.b16 %v2215
        %v2380 = vunpack.c.l.b16 %v2216
        %v2381 = vunpack.c.l.b16 %v2217
        %v2382 = vunpack.c.l.b16 %v2218
        %v2383 = vunpack.c.l.b16 %v2219
        %v2384 = vunpack.c.l.b16 %v2220
        %v2385 = vunpack.c.l.b16 %v2221
        %v2386 = vunpack.c.l.b16 %v2222
        %v2387 = vunpack.c.l.b16 %v2223
        %v2388 = vunpack.c.l.b16 %v2224
        %v2389 = vunpack.c.l.b16 %v2225
        %v2390 = vunpack.c.l.b16 %v2226
        %v2391 = vunpack.c.l.b16 %v2227
        %v2392 = vunpack.c.l.b16 %v2228
        %v2393 = vunpack.c.l.b16 %v2229
        %v2394 = vunpack.c.l.b16 %v2230
        %v2395 = vunpack.c.l.b16 %v2231
        %v2396 = vunpack.c.l.b16 %v2232
        %v2397 = vunpack.c.l.b16 %v2233
        %v2398 = vunpack.c.l.b16 %v2234
        %v2399 = vunpack.c.l.b16 %v2235
        %v2400 = vpack.c.b16 %v2321, %v2320
        %v2401 = vpack.c.b16 %v2323, %v2322
        %v2402 = vpack.c.b16 %v2325, %v2324
        %v2403 = vpack.c.b16 %v2327, %v2326
        %v2404 = vpack.c.b16 %v2329, %v2328
        %v2405 = vpack.c.b16 %v2331, %v2330
        %v2406 = vpack.c.b16 %v2333, %v2332
        %v2407 = vpack.c.b16 %v2335, %v2334
        %v2408 = vpack.c.b16 %v2337, %v2336
        %v2409 = vpack.c.b16 %v2339, %v2338
        %v2410 = vpack.c.b16 %v2341, %v2340
        %v2411 = vpack.c.b16 %v2343, %v2342
        %v2412 = vpack.c.b16 %v2345, %v2344
        %v2413 = vpack.c.b16 %v2347, %v2346
        %v2414 = vpack.c.b16 %v2349, %v2348
        %v2415 = vpack.c.b16 %v2351, %v2350
        %v2416 = vpack.c.b16 %v2353, %v2352
        %v2417 = vpack.c.b16 %v2355, %v2354
        %v2418 = vpack.c.b16 %v2357, %v2356
        %v2419 = vpack.c.b16 %v2359, %v2358
        %v2420 = vpack.c.b16 %v2361, %v2360
        %v2421 = vpack.c.b16 %v2363, %v2362
        %v2422 = vpack.c.b16 %v2365, %v2364
        %v2423 = vpack.c.b16 %v2367, %v2366
        %v2424 = vpack.c.b16 %v2369, %v2368
        %v2425 = vpack.c.b16 %v2371, %v2370
        %v2426 = vpack.c.b16 %v2373, %v2372
        %v2427 = vpack.c.b16 %v2375, %v2374
        %v2428 = vpack.c.b16 %v2377, %v2376
        %v2429 = vpack.c.b16 %v2379, %v2378
        %v2430 = vpack.c.b16 %v2381, %v2380
        %v2431 = vpack.c.b16 %v2383, %v2382
        %v2432 = vpack.c.b16 %v2385, %v2384
        %v2433 = vpack.c.b16 %v2387, %v2386
        %v2434 = vpack.c.b16 %v2389, %v2388
        %v2435 = vpack.c.b16 %v2391, %v2390
        %v2436 = vpack.c.b16 %v2393, %v2392
        %v2437 = vpack.c.b16 %v2395, %v2394
        %v2438 = vpack.c.b16 %v2397, %v2396
        %v2439 = vpack.c.b16 %v2399, %v2398
        %2480 = vmatpush.bf16.msra.mxu0 %v2407
        %2481 = vmatpush.bf16.msra.mxu0 %v2406
        %2482 = vmatpush.bf16.msra.mxu0 %v2405
        %2483 = vmatpush.bf16.msra.mxu0 %v2404
        %2484 = vmatpush.bf16.msra.mxu0 %v2403
        %2485 = vmatpush.bf16.msra.mxu0 %v2402
        %2486 = vmatpush.bf16.msra.mxu0 %v2401
        %2487 = vmatpush.bf16.msra.mxu0 %v2400
        %2488 = vmatmul.bf16.gmra.mxu0 %v1678
        %v2489 = vpop.f32.mrf.mxu0
        %v2490 = vadd.f32 %v2238, %v2489
        %v2491 = vpop.f32.mrf.mxu0
        %v2492 = vadd.f32 %v2238, %v2491
        %2493 = vmatmul.bf16.gmra.mxu0 %v1690
        %v2494 = vpop.f32.mrf.mxu0
        %v2495 = vadd.f32 %v2238, %v2494
        %v2496 = vpop.f32.mrf.mxu0
        %v2497 = vadd.f32 %v2238, %v2496
        %2498 = vmatmul.bf16.gmra.mxu0 %v1702
        %v2499 = vpop.f32.mrf.mxu0
        %v2500 = vadd.f32 %v2238, %v2499
        %v2501 = vpop.f32.mrf.mxu0
        %v2502 = vadd.f32 %v2238, %v2501
        %2503 = vmatmul.bf16.gmra.mxu0 %v1714
        %v2504 = vpop.f32.mrf.mxu0
        %v2505 = vadd.f32 %v2238, %v2504
        %v2506 = vpop.f32.mrf.mxu0
        %v2507 = vadd.f32 %v2238, %v2506
        %2508 = vmatmul.bf16.gmra.mxu0 %v1726
        %v2509 = vpop.f32.mrf.mxu0
        %v2510 = vadd.f32 %v2238, %v2509
        %v2511 = vpop.f32.mrf.mxu0
        %v2512 = vadd.f32 %v2238, %v2511
        %2513 = vmatmul.bf16.gmra.mxu0 %v1738
        %v2514 = vpop.f32.mrf.mxu0
        %v2515 = vadd.f32 %v2238, %v2514
        %v2516 = vpop.f32.mrf.mxu0
        %v2517 = vadd.f32 %v2238, %v2516
        %2518 = vmatmul.bf16.gmra.mxu0 %v1750
        %v2519 = vpop.f32.mrf.mxu0
        %v2520 = vadd.f32 %v2238, %v2519
        %v2521 = vpop.f32.mrf.mxu0
        %v2522 = vadd.f32 %v2238, %v2521
        %2523 = vmatmul.bf16.gmra.mxu0 %v1762
        %v2524 = vpop.f32.mrf.mxu0
        %v2525 = vadd.f32 %v2238, %v2524
        %v2526 = vpop.f32.mrf.mxu0
        %v2527 = vadd.f32 %v2238, %v2526
        %2528 = vdwg.mxu0
        %2529 = vmatpush.bf16.msra.mxu0 %v2415
        %2530 = vmatpush.bf16.msra.mxu0 %v2414
        %2531 = vmatpush.bf16.msra.mxu0 %v2413
        %2532 = vmatpush.bf16.msra.mxu0 %v2412
        %2533 = vmatpush.bf16.msra.mxu0 %v2411
        %2534 = vmatpush.bf16.msra.mxu0 %v2410
        %2535 = vmatpush.bf16.msra.mxu0 %v2409
        %2536 = vmatpush.bf16.msra.mxu0 %v2408
        %2537 = vmatmul.bf16.gmra.mxu0 %v1791
        %v2538 = vpop.f32.mrf.mxu0
        %v2539 = vadd.f32 %v2490, %v2538
        %v2540 = vpop.f32.mrf.mxu0
        %v2541 = vadd.f32 %v2492, %v2540
        %2542 = vmatmul.bf16.gmra.mxu0 %v1812
        %v2543 = vpop.f32.mrf.mxu0
        %v2544 = vadd.f32 %v2495, %v2543
        %v2545 = vpop.f32.mrf.mxu0
        %v2546 = vadd.f32 %v2497, %v2545
        %2547 = vmatmul.bf16.gmra.mxu0 %v1833
        %v2548 = vpop.f32.mrf.mxu0
        %v2549 = vadd.f32 %v2500, %v2548
        %v2550 = vpop.f32.mrf.mxu0
        %v2551 = vadd.f32 %v2502, %v2550
        %2552 = vmatmul.bf16.gmra.mxu0 %v1854
        %v2553 = vpop.f32.mrf.mxu0
        %v2554 = vadd.f32 %v2505, %v2553
        %v2555 = vpop.f32.mrf.mxu0
        %v2556 = vadd.f32 %v2507, %v2555
        %2557 = vmatmul.bf16.gmra.mxu0 %v1875
        %v2558 = vpop.f32.mrf.mxu0
        %v2559 = vadd.f32 %v2510, %v2558
        %v2560 = vpop.f32.mrf.mxu0
        %v2561 = vadd.f32 %v2512, %v2560
        %2562 = vmatmul.bf16.gmra.mxu0 %v1896
        %v2563 = vpop.f32.mrf.mxu0
        %v2564 = vadd.f32 %v2515, %v2563
        %v2565 = vpop.f32.mrf.mxu0
        %v2566 = vadd.f32 %v2517, %v2565
        %2567 = vmatmul.bf16.gmra.mxu0 %v1917
        %v2568 = vpop.f32.mrf.mxu0
        %v2569 = vadd.f32 %v2520, %v2568
        %v2570 = vpop.f32.mrf.mxu0
        %v2571 = vadd.f32 %v2522, %v2570
        %2572 = vmatmul.bf16.gmra.mxu0 %v1938
        %v2573 = vpop.f32.mrf.mxu0
        %v2574 = vadd.f32 %v2525, %v2573
        %v2575 = vpop.f32.mrf.mxu0
        %v2576 = vadd.f32 %v2527, %v2575
        %2577 = vdwg.mxu0
        %2578 = vmatpush.bf16.msra.mxu0 %v2423
        %2579 = vmatpush.bf16.msra.mxu0 %v2422
        %2580 = vmatpush.bf16.msra.mxu0 %v2421
        %2581 = vmatpush.bf16.msra.mxu0 %v2420
        %2582 = vmatpush.bf16.msra.mxu0 %v2419
        %2583 = vmatpush.bf16.msra.mxu0 %v2418
        %2584 = vmatpush.bf16.msra.mxu0 %v2417
        %2585 = vmatpush.bf16.msra.mxu0 %v2416
        %2586 = vmatmul.bf16.gmra.mxu0 %v1940
        %v2587 = vpop.f32.mrf.mxu0
        %v2588 = vadd.f32 %v2539, %v2587
        %v2589 = vpop.f32.mrf.mxu0
        %v2590 = vadd.f32 %v2541, %v2589
        %2591 = vmatmul.bf16.gmra.mxu0 %v1942
        %v2592 = vpop.f32.mrf.mxu0
        %v2593 = vadd.f32 %v2544, %v2592
        %v2594 = vpop.f32.mrf.mxu0
        %v2595 = vadd.f32 %v2546, %v2594
        %2596 = vmatmul.bf16.gmra.mxu0 %v1944
        %v2597 = vpop.f32.mrf.mxu0
        %v2598 = vadd.f32 %v2549, %v2597
        %v2599 = vpop.f32.mrf.mxu0
        %v2600 = vadd.f32 %v2551, %v2599
        %2601 = vmatmul.bf16.gmra.mxu0 %v1946
        %v2602 = vpop.f32.mrf.mxu0
        %v2603 = vadd.f32 %v2554, %v2602
        %v2604 = vpop.f32.mrf.mxu0
        %v2605 = vadd.f32 %v2556, %v2604
        %2606 = vmatmul.bf16.gmra.mxu0 %v1948
        %v2607 = vpop.f32.mrf.mxu0
        %v2608 = vadd.f32 %v2559, %v2607
        %v2609 = vpop.f32.mrf.mxu0
        %v2610 = vadd.f32 %v2561, %v2609
        %2611 = vmatmul.bf16.gmra.mxu0 %v1950
        %v2612 = vpop.f32.mrf.mxu0
        %v2613 = vadd.f32 %v2564, %v2612
        %v2614 = vpop.f32.mrf.mxu0
        %v2615 = vadd.f32 %v2566, %v2614
        %2616 = vmatmul.bf16.gmra.mxu0 %v1952
        %v2617 = vpop.f32.mrf.mxu0
        %v2618 = vadd.f32 %v2569, %v2617
        %v2619 = vpop.f32.mrf.mxu0
        %v2620 = vadd.f32 %v2571, %v2619
        %2621 = vmatmul.bf16.gmra.mxu0 %v1954
        %v2622 = vpop.f32.mrf.mxu0
        %v2623 = vadd.f32 %v2574, %v2622
        %v2624 = vpop.f32.mrf.mxu0
        %v2625 = vadd.f32 %v2576, %v2624
        %2626 = vdwg.mxu0
        %2627 = vmatpush.bf16.msra.mxu0 %v2431
        %2628 = vmatpush.bf16.msra.mxu0 %v2430
        %2629 = vmatpush.bf16.msra.mxu0 %v2429
        %2630 = vmatpush.bf16.msra.mxu0 %v2428
        %2631 = vmatpush.bf16.msra.mxu0 %v2427
        %2632 = vmatpush.bf16.msra.mxu0 %v2426
        %2633 = vmatpush.bf16.msra.mxu0 %v2425
        %2634 = vmatpush.bf16.msra.mxu0 %v2424
        %2635 = vmatmul.bf16.gmra.mxu0 %v1978
        %v2636 = vpop.f32.mrf.mxu0
        %v2637 = vadd.f32 %v2588, %v2636
        %v2638 = vpop.f32.mrf.mxu0
        %v2639 = vadd.f32 %v2590, %v2638
        %2640 = vmatmul.bf16.gmra.mxu0 %v1994
        %v2641 = vpop.f32.mrf.mxu0
        %v2642 = vadd.f32 %v2593, %v2641
        %v2643 = vpop.f32.mrf.mxu0
        %v2644 = vadd.f32 %v2595, %v2643
        %2645 = vmatmul.bf16.gmra.mxu0 %v2010
        %v2646 = vpop.f32.mrf.mxu0
        %v2647 = vadd.f32 %v2598, %v2646
        %v2648 = vpop.f32.mrf.mxu0
        %v2649 = vadd.f32 %v2600, %v2648
        %2650 = vmatmul.bf16.gmra.mxu0 %v2026
        %v2651 = vpop.f32.mrf.mxu0
        %v2652 = vadd.f32 %v2603, %v2651
        %v2653 = vpop.f32.mrf.mxu0
        %v2654 = vadd.f32 %v2605, %v2653
        %2655 = vmatmul.bf16.gmra.mxu0 %v2042
        %v2656 = vpop.f32.mrf.mxu0
        %v2657 = vadd.f32 %v2608, %v2656
        %v2658 = vpop.f32.mrf.mxu0
        %v2659 = vadd.f32 %v2610, %v2658
        %2660 = vmatmul.bf16.gmra.mxu0 %v2058
        %v2661 = vpop.f32.mrf.mxu0
        %v2662 = vadd.f32 %v2613, %v2661
        %v2663 = vpop.f32.mrf.mxu0
        %v2664 = vadd.f32 %v2615, %v2663
        %2665 = vmatmul.bf16.gmra.mxu0 %v2074
        %v2666 = vpop.f32.mrf.mxu0
        %v2667 = vadd.f32 %v2618, %v2666
        %v2668 = vpop.f32.mrf.mxu0
        %v2669 = vadd.f32 %v2620, %v2668
        %2670 = vmatmul.bf16.gmra.mxu0 %v2090
        %v2671 = vpop.f32.mrf.mxu0
        %v2672 = vadd.f32 %v2623, %v2671
        %v2673 = vpop.f32.mrf.mxu0
        %v2674 = vadd.f32 %v2625, %v2673
        %2675 = vdwg.mxu0
        %2676 = vmatpush.bf16.msra.mxu0 %v2439
        %2677 = vmatpush.bf16.msra.mxu0 %v2438
        %2678 = vmatpush.bf16.msra.mxu0 %v2437
        %2679 = vmatpush.bf16.msra.mxu0 %v2436
        %2680 = vmatpush.bf16.msra.mxu0 %v2435
        %2681 = vmatpush.bf16.msra.mxu0 %v2434
        %2682 = vmatpush.bf16.msra.mxu0 %v2433
        %2683 = vmatpush.bf16.msra.mxu0 %v2432
        %2684 = vmatmul.bf16.gmra.mxu0 %v2105
        %v2685 = vpop.f32.mrf.mxu0
        %v2686 = vadd.f32 %v2637, %v2685
        %v2687 = vpop.f32.mrf.mxu0
        %v2688 = vadd.f32 %v2639, %v2687
        %2689 = vmatmul.bf16.gmra.mxu0 %v2112
        %v2690 = vpop.f32.mrf.mxu0
        %v2691 = vadd.f32 %v2642, %v2690
        %v2692 = vpop.f32.mrf.mxu0
        %v2693 = vadd.f32 %v2644, %v2692
        %2694 = vmatmul.bf16.gmra.mxu0 %v2119
        %v2695 = vpop.f32.mrf.mxu0
        %v2696 = vadd.f32 %v2647, %v2695
        %v2697 = vpop.f32.mrf.mxu0
        %v2698 = vadd.f32 %v2649, %v2697
        %2699 = vmatmul.bf16.gmra.mxu0 %v2126
        %v2700 = vpop.f32.mrf.mxu0
        %v2701 = vadd.f32 %v2652, %v2700
        %v2702 = vpop.f32.mrf.mxu0
        %v2703 = vadd.f32 %v2654, %v2702
        %2704 = vmatmul.bf16.gmra.mxu0 %v2133
        %v2705 = vpop.f32.mrf.mxu0
        %v2706 = vadd.f32 %v2657, %v2705
        %v2707 = vpop.f32.mrf.mxu0
        %v2708 = vadd.f32 %v2659, %v2707
        %2709 = vmatmul.bf16.gmra.mxu0 %v2140
        %v2710 = vpop.f32.mrf.mxu0
        %v2711 = vadd.f32 %v2662, %v2710
        %v2712 = vpop.f32.mrf.mxu0
        %v2713 = vadd.f32 %v2664, %v2712
        %2714 = vmatmul.bf16.gmra.mxu0 %v2147
        %v2715 = vpop.f32.mrf.mxu0
        %v2716 = vadd.f32 %v2667, %v2715
        %v2717 = vpop.f32.mrf.mxu0
        %v2718 = vadd.f32 %v2669, %v2717
        %2719 = vmatmul.bf16.gmra.mxu0 %v2154
        %v2720 = vpop.f32.mrf.mxu0
        %v2721 = vadd.f32 %v2672, %v2720
        %v2722 = vpop.f32.mrf.mxu0
        %v2723 = vadd.f32 %v2674, %v2722
        %2724 = vdwg.mxu0
        %v2725 = vmax.f32 %v2686, 0.0
        %v2726 = vmax.f32 %v2688, 0.0
        %v2727 = vmax.f32 %v2691, 0.0
        %v2728 = vmax.f32 %v2693, 0.0
        %v2729 = vmax.f32 %v2696, 0.0
        %v2730 = vmax.f32 %v2698, 0.0
        %v2731 = vmax.f32 %v2701, 0.0
        %v2732 = vmax.f32 %v2703, 0.0
        %v2733 = vmax.f32 %v2706, 0.0
        %v2734 = vmax.f32 %v2708, 0.0
        %v2735 = vmax.f32 %v2711, 0.0
        %v2736 = vmax.f32 %v2713, 0.0
        %v2737 = vmax.f32 %v2716, 0.0
        %v2738 = vmax.f32 %v2718, 0.0
        %v2739 = vmax.f32 %v2721, 0.0
        %v2740 = vmax.f32 %v2723, 0.0
        %v2741 = vpack.c.bf16 %v2725, %v2725
        %v2742 = vpack.c.bf16 %v2726, %v2726
        %v2743 = vpack.c.bf16 %v2727, %v2727
        %v2744 = vpack.c.bf16 %v2728, %v2728
        %v2745 = vpack.c.bf16 %v2729, %v2729
        %v2746 = vpack.c.bf16 %v2730, %v2730
        %v2747 = vpack.c.bf16 %v2731, %v2731
        %v2748 = vpack.c.bf16 %v2732, %v2732
        %v2749 = vpack.c.bf16 %v2733, %v2733
        %v2750 = vpack.c.bf16 %v2734, %v2734
        %v2751 = vpack.c.bf16 %v2735, %v2735
        %v2752 = vpack.c.bf16 %v2736, %v2736
        %v2753 = vpack.c.bf16 %v2737, %v2737
        %v2754 = vpack.c.bf16 %v2738, %v2738
        %v2755 = vpack.c.bf16 %v2739, %v2739
        %v2756 = vpack.c.bf16 %v2740, %v2740
        %2757 = vst [vmem:[#allocation2 + $0x8] sm:$0xf] %v2741
        %2758 = vst [vmem:[#allocation2 + $0xc] sm:$0xf] %v2742
        %2759 = vst [vmem:[#allocation2 + $0x18] sm:$0xf] %v2743
        %2760 = vst [vmem:[#allocation2 + $0x1c] sm:$0xf] %v2744
        %2761 = vst [vmem:[#allocation2 + $0x28] sm:$0xf] %v2745
        %2762 = vst [vmem:[#allocation2 + $0x2c] sm:$0xf] %v2746
        %2763 = vst [vmem:[#allocation2 + $0x38] sm:$0xf] %v2747
        %2764 = vst [vmem:[#allocation2 + $0x3c] sm:$0xf] %v2748
        %2765 = vst [vmem:[#allocation2 + $0x48] sm:$0xf] %v2749
        %2766 = vst [vmem:[#allocation2 + $0x4c] sm:$0xf] %v2750
        %2767 = vst [vmem:[#allocation2 + $0x58] sm:$0xf] %v2751
        %2768 = vst [vmem:[#allocation2 + $0x5c] sm:$0xf] %v2752
        %2769 = vst [vmem:[#allocation2 + $0x68] sm:$0xf] %v2753
        %2770 = vst [vmem:[#allocation2 + $0x6c] sm:$0xf] %v2754
        %2771 = vst [vmem:[#allocation2 + $0x78] sm:$0xf] %v2755
        %2772 = vst [vmem:[#allocation2 + $0x7c] sm:$0xf] %v2756
        %v2773 = vld [vmem:[#allocation2 + $0x4] sm:$0x8]
        %v2774 = vld [vmem:[#allocation2 + $0x8] sm:$0xf]
        %v2775 = vld [vmem:[#allocation2 + $0xc] sm:$0x7]
        %v2776 = vld [vmem:[#allocation2 + $0x14] sm:$0x8]
        %v2777 = vld [vmem:[#allocation2 + $0x18] sm:$0xf]
        %v2778 = vld [vmem:[#allocation2 + $0x1c] sm:$0x7]
        %v2779 = vld [vmem:[#allocation2 + $0x24] sm:$0x8]
        %v2780 = vld [vmem:[#allocation2 + $0x28] sm:$0xf]
        %v2781 = vld [vmem:[#allocation2 + $0x2c] sm:$0x7]
        %v2782 = vld [vmem:[#allocation2 + $0x34] sm:$0x8]
        %v2783 = vld [vmem:[#allocation2 + $0x38] sm:$0xf]
        %v2784 = vld [vmem:[#allocation2 + $0x3c] sm:$0x7]
        %v2785 = vld [vmem:[#allocation2 + $0x44] sm:$0x8]
        %v2786 = vld [vmem:[#allocation2 + $0x48] sm:$0xf]
        %v2787 = vld [vmem:[#allocation2 + $0x4c] sm:$0x7]
        %v2788 = vld [vmem:[#allocation2 + $0x54] sm:$0x8]
        %v2789 = vld [vmem:[#allocation2 + $0x58] sm:$0xf]
        %v2790 = vld [vmem:[#allocation2 + $0x5c] sm:$0x7]
        %v2791 = vld [vmem:[#allocation2 + $0x64] sm:$0x8]
        %v2792 = vld [vmem:[#allocation2 + $0x68] sm:$0xf]
        %v2793 = vld [vmem:[#allocation2 + $0x6c] sm:$0x7]
        %v2794 = vld [vmem:[#allocation2 + $0x74] sm:$0x8]
        %v2795 = vld [vmem:[#allocation2 + $0x78] sm:$0xf]
        %v2796 = vld [vmem:[#allocation2 + $0x7c] sm:$0x7]
        %v2800 = vunpack.c.l.b16 %v2773
        %v2801 = vunpack.c.l.b16 %v2774
        %v2802 = vunpack.c.l.b16 %v2775
        %v2803 = vpack.c.b16 %v2801, %v2800
        %v2804 = vpack.c.b16 %v2802, %v2802
        %v2805 = vrot.slane %v2803, 3
        %v2806 = vrot.slane %v2804, 3
        %v2807 = vsel %vm543, %v2805, %v2806
        %v2812 = vunpack.c.l.b16 %v2776
        %v2813 = vunpack.c.l.b16 %v2777
        %v2814 = vunpack.c.l.b16 %v2778
        %v2815 = vpack.c.b16 %v2813, %v2812
        %v2816 = vpack.c.b16 %v2814, %v2814
        %v2817 = vrot.slane %v2815, 3
        %v2818 = vrot.slane %v2816, 3
        %v2819 = vsel %vm543, %v2817, %v2818
        %v2824 = vunpack.c.l.b16 %v2779
        %v2825 = vunpack.c.l.b16 %v2780
        %v2826 = vunpack.c.l.b16 %v2781
        %v2827 = vpack.c.b16 %v2825, %v2824
        %v2828 = vpack.c.b16 %v2826, %v2826
        %v2829 = vrot.slane %v2827, 3
        %v2830 = vrot.slane %v2828, 3
        %v2831 = vsel %vm543, %v2829, %v2830
        %v2836 = vunpack.c.l.b16 %v2782
        %v2837 = vunpack.c.l.b16 %v2783
        %v2838 = vunpack.c.l.b16 %v2784
        %v2839 = vpack.c.b16 %v2837, %v2836
        %v2840 = vpack.c.b16 %v2838, %v2838
        %v2841 = vrot.slane %v2839, 3
        %v2842 = vrot.slane %v2840, 3
        %v2843 = vsel %vm543, %v2841, %v2842
        %v2848 = vunpack.c.l.b16 %v2785
        %v2849 = vunpack.c.l.b16 %v2786
        %v2850 = vunpack.c.l.b16 %v2787
        %v2851 = vpack.c.b16 %v2849, %v2848
        %v2852 = vpack.c.b16 %v2850, %v2850
        %v2853 = vrot.slane %v2851, 3
        %v2854 = vrot.slane %v2852, 3
        %v2855 = vsel %vm543, %v2853, %v2854
        %v2860 = vunpack.c.l.b16 %v2788
        %v2861 = vunpack.c.l.b16 %v2789
        %v2862 = vunpack.c.l.b16 %v2790
        %v2863 = vpack.c.b16 %v2861, %v2860
        %v2864 = vpack.c.b16 %v2862, %v2862
        %v2865 = vrot.slane %v2863, 3
        %v2866 = vrot.slane %v2864, 3
        %v2867 = vsel %vm543, %v2865, %v2866
        %v2872 = vunpack.c.l.b16 %v2791
        %v2873 = vunpack.c.l.b16 %v2792
        %v2874 = vunpack.c.l.b16 %v2793
        %v2875 = vpack.c.b16 %v2873, %v2872
        %v2876 = vpack.c.b16 %v2874, %v2874
        %v2877 = vrot.slane %v2875, 3
        %v2878 = vrot.slane %v2876, 3
        %v2879 = vsel %vm543, %v2877, %v2878
        %v2884 = vunpack.c.l.b16 %v2794
        %v2885 = vunpack.c.l.b16 %v2795
        %v2886 = vunpack.c.l.b16 %v2796
        %v2887 = vpack.c.b16 %v2885, %v2884
        %v2888 = vpack.c.b16 %v2886, %v2886
        %v2889 = vrot.slane %v2887, 3
        %v2890 = vrot.slane %v2888, 3
        %v2891 = vsel %vm543, %v2889, %v2890
        %v2893 = vld [vmem:[#allocation2 + $0xc] sm:$0xf]
        %v2894 = vld [vmem:[#allocation2 + $0x1c] sm:$0xf]
        %v2895 = vld [vmem:[#allocation2 + $0x2c] sm:$0xf]
        %v2896 = vld [vmem:[#allocation2 + $0x3c] sm:$0xf]
        %v2897 = vld [vmem:[#allocation2 + $0x4c] sm:$0xf]
        %v2898 = vld [vmem:[#allocation2 + $0x5c] sm:$0xf]
        %v2899 = vld [vmem:[#allocation2 + $0x6c] sm:$0xf]
        %v2900 = vld [vmem:[#allocation2 + $0x7c] sm:$0xf]
        %v2902 = vunpack.c.l.b16 %v2893
        %v2903 = vpack.c.b16 %v2902, %v2902
        %v2905 = vshrl.u32 %v2803, 16
        %v2907 = vrot.slane %v2905, 3
        %v2908 = vshll.u32 %v2803, 16
        %v2910 = vrot.slane %v2908, 4
        %v2911 = vor.u32 %v2907, %v2910
        %v2913 = vshrl.u32 %v2903, 16
        %v2915 = vrot.slane %v2913, 3
        %v2916 = vshll.u32 %v2903, 16
        %v2918 = vrot.slane %v2916, 4
        %v2919 = vor.u32 %v2915, %v2918
        %v2920 = vsel %vm643, %v2911, %v2919
        %v2923 = vunpack.c.l.b16 %v2894
        %v2924 = vpack.c.b16 %v2923, %v2923
        %v2926 = vshrl.u32 %v2815, 16
        %v2928 = vrot.slane %v2926, 3
        %v2929 = vshll.u32 %v2815, 16
        %v2931 = vrot.slane %v2929, 4
        %v2932 = vor.u32 %v2928, %v2931
        %v2934 = vshrl.u32 %v2924, 16
        %v2936 = vrot.slane %v2934, 3
        %v2937 = vshll.u32 %v2924, 16
        %v2939 = vrot.slane %v2937, 4
        %v2940 = vor.u32 %v2936, %v2939
        %v2941 = vsel %vm643, %v2932, %v2940
        %v2944 = vunpack.c.l.b16 %v2895
        %v2945 = vpack.c.b16 %v2944, %v2944
        %v2947 = vshrl.u32 %v2827, 16
        %v2949 = vrot.slane %v2947, 3
        %v2950 = vshll.u32 %v2827, 16
        %v2952 = vrot.slane %v2950, 4
        %v2953 = vor.u32 %v2949, %v2952
        %v2955 = vshrl.u32 %v2945, 16
        %v2957 = vrot.slane %v2955, 3
        %v2958 = vshll.u32 %v2945, 16
        %v2960 = vrot.slane %v2958, 4
        %v2961 = vor.u32 %v2957, %v2960
        %v2962 = vsel %vm643, %v2953, %v2961
        %v2965 = vunpack.c.l.b16 %v2896
        %v2966 = vpack.c.b16 %v2965, %v2965
        %v2968 = vshrl.u32 %v2839, 16
        %v2970 = vrot.slane %v2968, 3
        %v2971 = vshll.u32 %v2839, 16
        %v2973 = vrot.slane %v2971, 4
        %v2974 = vor.u32 %v2970, %v2973
        %v2976 = vshrl.u32 %v2966, 16
        %v2978 = vrot.slane %v2976, 3
        %v2979 = vshll.u32 %v2966, 16
        %v2981 = vrot.slane %v2979, 4
        %v2982 = vor.u32 %v2978, %v2981
        %v2983 = vsel %vm643, %v2974, %v2982
        %v2986 = vunpack.c.l.b16 %v2897
        %v2987 = vpack.c.b16 %v2986, %v2986
        %v2989 = vshrl.u32 %v2851, 16
        %v2991 = vrot.slane %v2989, 3
        %v2992 = vshll.u32 %v2851, 16
        %v2994 = vrot.slane %v2992, 4
        %v2995 = vor.u32 %v2991, %v2994
        %v2997 = vshrl.u32 %v2987, 16
        %v2999 = vrot.slane %v2997, 3
        %v3000 = vshll.u32 %v2987, 16
        %v3002 = vrot.slane %v3000, 4
        %v3003 = vor.u32 %v2999, %v3002
        %v3004 = vsel %vm643, %v2995, %v3003
        %v3007 = vunpack.c.l.b16 %v2898
        %v3008 = vpack.c.b16 %v3007, %v3007
        %v3010 = vshrl.u32 %v2863, 16
        %v3012 = vrot.slane %v3010, 3
        %v3013 = vshll.u32 %v2863, 16
        %v3015 = vrot.slane %v3013, 4
        %v3016 = vor.u32 %v3012, %v3015
        %v3018 = vshrl.u32 %v3008, 16
        %v3020 = vrot.slane %v3018, 3
        %v3021 = vshll.u32 %v3008, 16
        %v3023 = vrot.slane %v3021, 4
        %v3024 = vor.u32 %v3020, %v3023
        %v3025 = vsel %vm643, %v3016, %v3024
        %v3028 = vunpack.c.l.b16 %v2899
        %v3029 = vpack.c.b16 %v3028, %v3028
        %v3031 = vshrl.u32 %v2875, 16
        %v3033 = vrot.slane %v3031, 3
        %v3034 = vshll.u32 %v2875, 16
        %v3036 = vrot.slane %v3034, 4
        %v3037 = vor.u32 %v3033, %v3036
        %v3039 = vshrl.u32 %v3029, 16
        %v3041 = vrot.slane %v3039, 3
        %v3042 = vshll.u32 %v3029, 16
        %v3044 = vrot.slane %v3042, 4
        %v3045 = vor.u32 %v3041, %v3044
        %v3046 = vsel %vm643, %v3037, %v3045
        %v3049 = vunpack.c.l.b16 %v2900
        %v3050 = vpack.c.b16 %v3049, %v3049
        %v3052 = vshrl.u32 %v2887, 16
        %v3054 = vrot.slane %v3052, 3
        %v3055 = vshll.u32 %v2887, 16
        %v3057 = vrot.slane %v3055, 4
        %v3058 = vor.u32 %v3054, %v3057
        %v3060 = vshrl.u32 %v3050, 16
        %v3062 = vrot.slane %v3060, 3
        %v3063 = vshll.u32 %v3050, 16
        %v3065 = vrot.slane %v3063, 4
        %v3066 = vor.u32 %v3062, %v3065
        %v3067 = vsel %vm643, %v3058, %v3066
        %v3069 = vpack.c.b16 %v2902, %v2801
        %v3071 = vpack.c.b16 %v2923, %v2813
        %v3073 = vpack.c.b16 %v2944, %v2825
        %v3075 = vpack.c.b16 %v2965, %v2837
        %v3077 = vpack.c.b16 %v2986, %v2849
        %v3079 = vpack.c.b16 %v3007, %v2861
        %v3081 = vpack.c.b16 %v3028, %v2873
        %v3083 = vpack.c.b16 %v3049, %v2885
        %v3085 = vld [vmem:[#allocation2 + $0x10] sm:$0x1]
        %v3086 = vld [vmem:[#allocation2 + $0x20] sm:$0x1]
        %v3087 = vld [vmem:[#allocation2 + $0x30] sm:$0x1]
        %v3088 = vld [vmem:[#allocation2 + $0x40] sm:$0x1]
        %v3089 = vld [vmem:[#allocation2 + $0x50] sm:$0x1]
        %v3090 = vld [vmem:[#allocation2 + $0x60] sm:$0x1]
        %v3091 = vld [vmem:[#allocation2 + $0x70] sm:$0x1]
        %v3092 = vld [vmem:[#allocation2 + $0x80] sm:$0x1]
        %v3094 = vunpack.c.l.b16 %v3085
        %v3095 = vpack.c.b16 %v3094, %v3094
        %v3097 = vshrl.u32 %v3069, 16
        %v3099 = vshll.u32 %v3069, 16
        %v3101 = vrot.slane %v3099, 1
        %v3102 = vor.u32 %v3097, %v3101
        %v3104 = vshll.u32 %v3095, 16
        %v3106 = vrot.slane %v3104, 1
        %v3107 = vsel %vm836, %v3102, %v3106
        %v3110 = vunpack.c.l.b16 %v3086
        %v3111 = vpack.c.b16 %v3110, %v3110
        %v3113 = vshrl.u32 %v3071, 16
        %v3115 = vshll.u32 %v3071, 16
        %v3117 = vrot.slane %v3115, 1
        %v3118 = vor.u32 %v3113, %v3117
        %v3120 = vshll.u32 %v3111, 16
        %v3122 = vrot.slane %v3120, 1
        %v3123 = vsel %vm836, %v3118, %v3122
        %v3126 = vunpack.c.l.b16 %v3087
        %v3127 = vpack.c.b16 %v3126, %v3126
        %v3129 = vshrl.u32 %v3073, 16
        %v3131 = vshll.u32 %v3073, 16
        %v3133 = vrot.slane %v3131, 1
        %v3134 = vor.u32 %v3129, %v3133
        %v3136 = vshll.u32 %v3127, 16
        %v3138 = vrot.slane %v3136, 1
        %v3139 = vsel %vm836, %v3134, %v3138
        %v3142 = vunpack.c.l.b16 %v3088
        %v3143 = vpack.c.b16 %v3142, %v3142
        %v3145 = vshrl.u32 %v3075, 16
        %v3147 = vshll.u32 %v3075, 16
        %v3149 = vrot.slane %v3147, 1
        %v3150 = vor.u32 %v3145, %v3149
        %v3152 = vshll.u32 %v3143, 16
        %v3154 = vrot.slane %v3152, 1
        %v3155 = vsel %vm836, %v3150, %v3154
        %v3158 = vunpack.c.l.b16 %v3089
        %v3159 = vpack.c.b16 %v3158, %v3158
        %v3161 = vshrl.u32 %v3077, 16
        %v3163 = vshll.u32 %v3077, 16
        %v3165 = vrot.slane %v3163, 1
        %v3166 = vor.u32 %v3161, %v3165
        %v3168 = vshll.u32 %v3159, 16
        %v3170 = vrot.slane %v3168, 1
        %v3171 = vsel %vm836, %v3166, %v3170
        %v3174 = vunpack.c.l.b16 %v3090
        %v3175 = vpack.c.b16 %v3174, %v3174
        %v3177 = vshrl.u32 %v3079, 16
        %v3179 = vshll.u32 %v3079, 16
        %v3181 = vrot.slane %v3179, 1
        %v3182 = vor.u32 %v3177, %v3181
        %v3184 = vshll.u32 %v3175, 16
        %v3186 = vrot.slane %v3184, 1
        %v3187 = vsel %vm836, %v3182, %v3186
        %v3190 = vunpack.c.l.b16 %v3091
        %v3191 = vpack.c.b16 %v3190, %v3190
        %v3193 = vshrl.u32 %v3081, 16
        %v3195 = vshll.u32 %v3081, 16
        %v3197 = vrot.slane %v3195, 1
        %v3198 = vor.u32 %v3193, %v3197
        %v3200 = vshll.u32 %v3191, 16
        %v3202 = vrot.slane %v3200, 1
        %v3203 = vsel %vm836, %v3198, %v3202
        %v3206 = vunpack.c.l.b16 %v3092
        %v3207 = vpack.c.b16 %v3206, %v3206
        %v3209 = vshrl.u32 %v3083, 16
        %v3211 = vshll.u32 %v3083, 16
        %v3213 = vrot.slane %v3211, 1
        %v3214 = vor.u32 %v3209, %v3213
        %v3216 = vshll.u32 %v3207, 16
        %v3218 = vrot.slane %v3216, 1
        %v3219 = vsel %vm836, %v3214, %v3218
        %v3221 = vld [vmem:[#allocation2 + $0x8] sm:$0xe]
        %v3222 = vld [vmem:[#allocation2 + $0x18] sm:$0xe]
        %v3223 = vld [vmem:[#allocation2 + $0x28] sm:$0xe]
        %v3224 = vld [vmem:[#allocation2 + $0x38] sm:$0xe]
        %v3225 = vld [vmem:[#allocation2 + $0x48] sm:$0xe]
        %v3226 = vld [vmem:[#allocation2 + $0x58] sm:$0xe]
        %v3227 = vld [vmem:[#allocation2 + $0x68] sm:$0xe]
        %v3228 = vld [vmem:[#allocation2 + $0x78] sm:$0xe]
        %v3230 = vunpack.c.l.b16 %v3221
        %v3231 = vpack.c.b16 %v2902, %v3230
        %v3232 = vrot.slane %v3231, 1
        %v3233 = vrot.slane %v3095, 1
        %v3234 = vsel %vm973, %v3232, %v3233
        %v3237 = vunpack.c.l.b16 %v3222
        %v3238 = vpack.c.b16 %v2923, %v3237
        %v3239 = vrot.slane %v3238, 1
        %v3240 = vrot.slane %v3111, 1
        %v3241 = vsel %vm973, %v3239, %v3240
        %v3244 = vunpack.c.l.b16 %v3223
        %v3245 = vpack.c.b16 %v2944, %v3244
        %v3246 = vrot.slane %v3245, 1
        %v3247 = vrot.slane %v3127, 1
        %v3248 = vsel %vm973, %v3246, %v3247
        %v3251 = vunpack.c.l.b16 %v3224
        %v3252 = vpack.c.b16 %v2965, %v3251
        %v3253 = vrot.slane %v3252, 1
        %v3254 = vrot.slane %v3143, 1
        %v3255 = vsel %vm973, %v3253, %v3254
        %v3258 = vunpack.c.l.b16 %v3225
        %v3259 = vpack.c.b16 %v2986, %v3258
        %v3260 = vrot.slane %v3259, 1
        %v3261 = vrot.slane %v3159, 1
        %v3262 = vsel %vm973, %v3260, %v3261
        %v3265 = vunpack.c.l.b16 %v3226
        %v3266 = vpack.c.b16 %v3007, %v3265
        %v3267 = vrot.slane %v3266, 1
        %v3268 = vrot.slane %v3175, 1
        %v3269 = vsel %vm973, %v3267, %v3268
        %v3272 = vunpack.c.l.b16 %v3227
        %v3273 = vpack.c.b16 %v3028, %v3272
        %v3274 = vrot.slane %v3273, 1
        %v3275 = vrot.slane %v3191, 1
        %v3276 = vsel %vm973, %v3274, %v3275
        %v3279 = vunpack.c.l.b16 %v3228
        %v3280 = vpack.c.b16 %v3049, %v3279
        %v3281 = vrot.slane %v3280, 1
        %v3282 = vrot.slane %v3207, 1
        %v3283 = vsel %vm973, %v3281, %v3282
        %v3285 = vld [vmem:[#allocation11] sm:$0xf]
        %v3286 = vld [vmem:[#allocation11 + $0x4] sm:$0xf]
        %v3287 = vld [vmem:[#allocation11 + $0x8] sm:$0xf]
        %v3288 = vld [vmem:[#allocation11 + $0xc] sm:$0xf]
        %v3289 = vld [vmem:[#allocation11 + $0x10] sm:$0xf]
        %v3290 = vld [vmem:[#allocation11 + $0x14] sm:$0xf]
        %v3291 = vld [vmem:[#allocation11 + $0x18] sm:$0xf]
        %v3292 = vld [vmem:[#allocation11 + $0x1c] sm:$0xf]
        %v3293 = vld [vmem:[#allocation11 + $0x20] sm:$0xf]
        %v3294 = vld [vmem:[#allocation11 + $0x24] sm:$0xf]
        %v3295 = vld [vmem:[#allocation11 + $0x28] sm:$0xf]
        %v3296 = vld [vmem:[#allocation11 + $0x2c] sm:$0xf]
        %v3297 = vld [vmem:[#allocation11 + $0x30] sm:$0xf]
        %v3298 = vld [vmem:[#allocation11 + $0x34] sm:$0xf]
        %v3299 = vld [vmem:[#allocation11 + $0x38] sm:$0xf]
        %v3300 = vld [vmem:[#allocation11 + $0x3c] sm:$0xf]
        %v3301 = vld [vmem:[#allocation11 + $0x40] sm:$0xf]
        %v3302 = vld [vmem:[#allocation11 + $0x44] sm:$0xf]
        %v3303 = vld [vmem:[#allocation11 + $0x48] sm:$0xf]
        %v3304 = vld [vmem:[#allocation11 + $0x4c] sm:$0xf]
        %v3305 = vld [vmem:[#allocation11 + $0x50] sm:$0xf]
        %v3306 = vld [vmem:[#allocation11 + $0x54] sm:$0xf]
        %v3307 = vld [vmem:[#allocation11 + $0x58] sm:$0xf]
        %v3308 = vld [vmem:[#allocation11 + $0x5c] sm:$0xf]
        %v3309 = vld [vmem:[#allocation11 + $0x60] sm:$0xf]
        %v3310 = vld [vmem:[#allocation11 + $0x64] sm:$0xf]
        %v3311 = vld [vmem:[#allocation11 + $0x68] sm:$0xf]
        %v3312 = vld [vmem:[#allocation11 + $0x6c] sm:$0xf]
        %v3313 = vld [vmem:[#allocation11 + $0x70] sm:$0xf]
        %v3314 = vld [vmem:[#allocation11 + $0x74] sm:$0xf]
        %v3315 = vld [vmem:[#allocation11 + $0x78] sm:$0xf]
        %v3316 = vld [vmem:[#allocation11 + $0x7c] sm:$0xf]
        %v3317 = vld [vmem:[#allocation11 + $0x80] sm:$0xf]
        %v3318 = vld [vmem:[#allocation11 + $0x84] sm:$0xf]
        %v3319 = vld [vmem:[#allocation11 + $0x88] sm:$0xf]
        %v3320 = vld [vmem:[#allocation11 + $0x8c] sm:$0xf]
        %v3321 = vld [vmem:[#allocation11 + $0x90] sm:$0xf]
        %v3322 = vld [vmem:[#allocation11 + $0x94] sm:$0xf]
        %v3323 = vld [vmem:[#allocation11 + $0x98] sm:$0xf]
        %v3324 = vld [vmem:[#allocation11 + $0x9c] sm:$0xf]
        %v3325 = vld [vmem:[#allocation11 + $0xa0] sm:$0xf]
        %v3326 = vld [vmem:[#allocation11 + $0xa4] sm:$0xf]
        %v3327 = vld [vmem:[#allocation11 + $0xa8] sm:$0xf]
        %v3328 = vld [vmem:[#allocation11 + $0xac] sm:$0xf]
        %v3329 = vld [vmem:[#allocation11 + $0xb0] sm:$0xf]
        %v3330 = vld [vmem:[#allocation11 + $0xb4] sm:$0xf]
        %v3331 = vld [vmem:[#allocation11 + $0xb8] sm:$0xf]
        %v3332 = vld [vmem:[#allocation11 + $0xbc] sm:$0xf]
        %v3333 = vld [vmem:[#allocation11 + $0xc0] sm:$0xf]
        %v3334 = vld [vmem:[#allocation11 + $0xc4] sm:$0xf]
        %v3335 = vld [vmem:[#allocation11 + $0xc8] sm:$0xf]
        %v3336 = vld [vmem:[#allocation11 + $0xcc] sm:$0xf]
        %v3337 = vld [vmem:[#allocation11 + $0xd0] sm:$0xf]
        %v3338 = vld [vmem:[#allocation11 + $0xd4] sm:$0xf]
        %v3339 = vld [vmem:[#allocation11 + $0xd8] sm:$0xf]
        %v3340 = vld [vmem:[#allocation11 + $0xdc] sm:$0xf]
        %v3341 = vld [vmem:[#allocation11 + $0xe0] sm:$0xf]
        %v3342 = vld [vmem:[#allocation11 + $0xe4] sm:$0xf]
        %v3343 = vld [vmem:[#allocation11 + $0xe8] sm:$0xf]
        %v3344 = vld [vmem:[#allocation11 + $0xec] sm:$0xf]
        %v3345 = vld [vmem:[#allocation11 + $0xf0] sm:$0xf]
        %v3346 = vld [vmem:[#allocation11 + $0xf4] sm:$0xf]
        %v3347 = vld [vmem:[#allocation11 + $0xf8] sm:$0xf]
        %v3348 = vld [vmem:[#allocation11 + $0xfc] sm:$0xf]
        %v3349 = vld [vmem:[#allocation11 + $0x100] sm:$0xf]
        %v3350 = vld [vmem:[#allocation11 + $0x104] sm:$0xf]
        %v3351 = vld [vmem:[#allocation11 + $0x108] sm:$0xf]
        %v3352 = vld [vmem:[#allocation11 + $0x10c] sm:$0xf]
        %v3353 = vld [vmem:[#allocation11 + $0x110] sm:$0xf]
        %v3354 = vld [vmem:[#allocation11 + $0x114] sm:$0xf]
        %v3355 = vld [vmem:[#allocation11 + $0x118] sm:$0xf]
        %v3356 = vld [vmem:[#allocation11 + $0x11c] sm:$0xf]
        %v3357 = vld [vmem:[#allocation11 + $0x120] sm:$0xf]
        %v3358 = vld [vmem:[#allocation11 + $0x124] sm:$0xf]
        %v3359 = vld [vmem:[#allocation11 + $0x128] sm:$0xf]
        %v3360 = vld [vmem:[#allocation11 + $0x12c] sm:$0xf]
        %v3361 = vld [vmem:[#allocation11 + $0x130] sm:$0xf]
        %v3362 = vld [vmem:[#allocation11 + $0x134] sm:$0xf]
        %v3363 = vld [vmem:[#allocation11 + $0x138] sm:$0xf]
        %v3364 = vld [vmem:[#allocation11 + $0x13c] sm:$0xf]
        %v3365 = vld [vmem:[%s6] sm:$0x1]
        %v3367 = vperm.slane %v3365, 0
        %v3449 = vunpack.c.l.b16 %v3285
        %v3450 = vunpack.c.l.b16 %v3286
        %v3451 = vunpack.c.l.b16 %v3287
        %v3452 = vunpack.c.l.b16 %v3288
        %v3453 = vunpack.c.l.b16 %v3289
        %v3454 = vunpack.c.l.b16 %v3290
        %v3455 = vunpack.c.l.b16 %v3291
        %v3456 = vunpack.c.l.b16 %v3292
        %v3457 = vunpack.c.l.b16 %v3293
        %v3458 = vunpack.c.l.b16 %v3294
        %v3459 = vunpack.c.l.b16 %v3295
        %v3460 = vunpack.c.l.b16 %v3296
        %v3461 = vunpack.c.l.b16 %v3297
        %v3462 = vunpack.c.l.b16 %v3298
        %v3463 = vunpack.c.l.b16 %v3299
        %v3464 = vunpack.c.l.b16 %v3300
        %v3465 = vunpack.c.l.b16 %v3301
        %v3466 = vunpack.c.l.b16 %v3302
        %v3467 = vunpack.c.l.b16 %v3303
        %v3468 = vunpack.c.l.b16 %v3304
        %v3469 = vunpack.c.l.b16 %v3305
        %v3470 = vunpack.c.l.b16 %v3306
        %v3471 = vunpack.c.l.b16 %v3307
        %v3472 = vunpack.c.l.b16 %v3308
        %v3473 = vunpack.c.l.b16 %v3309
        %v3474 = vunpack.c.l.b16 %v3310
        %v3475 = vunpack.c.l.b16 %v3311
        %v3476 = vunpack.c.l.b16 %v3312
        %v3477 = vunpack.c.l.b16 %v3313
        %v3478 = vunpack.c.l.b16 %v3314
        %v3479 = vunpack.c.l.b16 %v3315
        %v3480 = vunpack.c.l.b16 %v3316
        %v3481 = vunpack.c.l.b16 %v3317
        %v3482 = vunpack.c.l.b16 %v3318
        %v3483 = vunpack.c.l.b16 %v3319
        %v3484 = vunpack.c.l.b16 %v3320
        %v3485 = vunpack.c.l.b16 %v3321
        %v3486 = vunpack.c.l.b16 %v3322
        %v3487 = vunpack.c.l.b16 %v3323
        %v3488 = vunpack.c.l.b16 %v3324
        %v3489 = vunpack.c.l.b16 %v3325
        %v3490 = vunpack.c.l.b16 %v3326
        %v3491 = vunpack.c.l.b16 %v3327
        %v3492 = vunpack.c.l.b16 %v3328
        %v3493 = vunpack.c.l.b16 %v3329
        %v3494 = vunpack.c.l.b16 %v3330
        %v3495 = vunpack.c.l.b16 %v3331
        %v3496 = vunpack.c.l.b16 %v3332
        %v3497 = vunpack.c.l.b16 %v3333
        %v3498 = vunpack.c.l.b16 %v3334
        %v3499 = vunpack.c.l.b16 %v3335
        %v3500 = vunpack.c.l.b16 %v3336
        %v3501 = vunpack.c.l.b16 %v3337
        %v3502 = vunpack.c.l.b16 %v3338
        %v3503 = vunpack.c.l.b16 %v3339
        %v3504 = vunpack.c.l.b16 %v3340
        %v3505 = vunpack.c.l.b16 %v3341
        %v3506 = vunpack.c.l.b16 %v3342
        %v3507 = vunpack.c.l.b16 %v3343
        %v3508 = vunpack.c.l.b16 %v3344
        %v3509 = vunpack.c.l.b16 %v3345
        %v3510 = vunpack.c.l.b16 %v3346
        %v3511 = vunpack.c.l.b16 %v3347
        %v3512 = vunpack.c.l.b16 %v3348
        %v3513 = vunpack.c.l.b16 %v3349
        %v3514 = vunpack.c.l.b16 %v3350
        %v3515 = vunpack.c.l.b16 %v3351
        %v3516 = vunpack.c.l.b16 %v3352
        %v3517 = vunpack.c.l.b16 %v3353
        %v3518 = vunpack.c.l.b16 %v3354
        %v3519 = vunpack.c.l.b16 %v3355
        %v3520 = vunpack.c.l.b16 %v3356
        %v3521 = vunpack.c.l.b16 %v3357
        %v3522 = vunpack.c.l.b16 %v3358
        %v3523 = vunpack.c.l.b16 %v3359
        %v3524 = vunpack.c.l.b16 %v3360
        %v3525 = vunpack.c.l.b16 %v3361
        %v3526 = vunpack.c.l.b16 %v3362
        %v3527 = vunpack.c.l.b16 %v3363
        %v3528 = vunpack.c.l.b16 %v3364
        %v3529 = vpack.c.b16 %v3450, %v3449
        %v3530 = vpack.c.b16 %v3452, %v3451
        %v3531 = vpack.c.b16 %v3454, %v3453
        %v3532 = vpack.c.b16 %v3456, %v3455
        %v3533 = vpack.c.b16 %v3458, %v3457
        %v3534 = vpack.c.b16 %v3460, %v3459
        %v3535 = vpack.c.b16 %v3462, %v3461
        %v3536 = vpack.c.b16 %v3464, %v3463
        %v3537 = vpack.c.b16 %v3466, %v3465
        %v3538 = vpack.c.b16 %v3468, %v3467
        %v3539 = vpack.c.b16 %v3470, %v3469
        %v3540 = vpack.c.b16 %v3472, %v3471
        %v3541 = vpack.c.b16 %v3474, %v3473
        %v3542 = vpack.c.b16 %v3476, %v3475
        %v3543 = vpack.c.b16 %v3478, %v3477
        %v3544 = vpack.c.b16 %v3480, %v3479
        %v3545 = vpack.c.b16 %v3482, %v3481
        %v3546 = vpack.c.b16 %v3484, %v3483
        %v3547 = vpack.c.b16 %v3486, %v3485
        %v3548 = vpack.c.b16 %v3488, %v3487
        %v3549 = vpack.c.b16 %v3490, %v3489
        %v3550 = vpack.c.b16 %v3492, %v3491
        %v3551 = vpack.c.b16 %v3494, %v3493
        %v3552 = vpack.c.b16 %v3496, %v3495
        %v3553 = vpack.c.b16 %v3498, %v3497
        %v3554 = vpack.c.b16 %v3500, %v3499
        %v3555 = vpack.c.b16 %v3502, %v3501
        %v3556 = vpack.c.b16 %v3504, %v3503
        %v3557 = vpack.c.b16 %v3506, %v3505
        %v3558 = vpack.c.b16 %v3508, %v3507
        %v3559 = vpack.c.b16 %v3510, %v3509
        %v3560 = vpack.c.b16 %v3512, %v3511
        %v3561 = vpack.c.b16 %v3514, %v3513
        %v3562 = vpack.c.b16 %v3516, %v3515
        %v3563 = vpack.c.b16 %v3518, %v3517
        %v3564 = vpack.c.b16 %v3520, %v3519
        %v3565 = vpack.c.b16 %v3522, %v3521
        %v3566 = vpack.c.b16 %v3524, %v3523
        %v3567 = vpack.c.b16 %v3526, %v3525
        %v3568 = vpack.c.b16 %v3528, %v3527
        %3609 = vmatpush.bf16.msra.mxu0 %v3536
        %3610 = vmatpush.bf16.msra.mxu0 %v3535
        %3611 = vmatpush.bf16.msra.mxu0 %v3534
        %3612 = vmatpush.bf16.msra.mxu0 %v3533
        %3613 = vmatpush.bf16.msra.mxu0 %v3532
        %3614 = vmatpush.bf16.msra.mxu0 %v3531
        %3615 = vmatpush.bf16.msra.mxu0 %v3530
        %3616 = vmatpush.bf16.msra.mxu0 %v3529
        %3617 = vmatmul.bf16.gmra.mxu0 %v2807
        %v3618 = vpop.f32.mrf.mxu0
        %v3619 = vadd.f32 %v3367, %v3618
        %v3620 = vpop.f32.mrf.mxu0
        %v3621 = vadd.f32 %v3367, %v3620
        %3622 = vmatmul.bf16.gmra.mxu0 %v2819
        %v3623 = vpop.f32.mrf.mxu0
        %v3624 = vadd.f32 %v3367, %v3623
        %v3625 = vpop.f32.mrf.mxu0
        %v3626 = vadd.f32 %v3367, %v3625
        %3627 = vmatmul.bf16.gmra.mxu0 %v2831
        %v3628 = vpop.f32.mrf.mxu0
        %v3629 = vadd.f32 %v3367, %v3628
        %v3630 = vpop.f32.mrf.mxu0
        %v3631 = vadd.f32 %v3367, %v3630
        %3632 = vmatmul.bf16.gmra.mxu0 %v2843
        %v3633 = vpop.f32.mrf.mxu0
        %v3634 = vadd.f32 %v3367, %v3633
        %v3635 = vpop.f32.mrf.mxu0
        %v3636 = vadd.f32 %v3367, %v3635
        %3637 = vmatmul.bf16.gmra.mxu0 %v2855
        %v3638 = vpop.f32.mrf.mxu0
        %v3639 = vadd.f32 %v3367, %v3638
        %v3640 = vpop.f32.mrf.mxu0
        %v3641 = vadd.f32 %v3367, %v3640
        %3642 = vmatmul.bf16.gmra.mxu0 %v2867
        %v3643 = vpop.f32.mrf.mxu0
        %v3644 = vadd.f32 %v3367, %v3643
        %v3645 = vpop.f32.mrf.mxu0
        %v3646 = vadd.f32 %v3367, %v3645
        %3647 = vmatmul.bf16.gmra.mxu0 %v2879
        %v3648 = vpop.f32.mrf.mxu0
        %v3649 = vadd.f32 %v3367, %v3648
        %v3650 = vpop.f32.mrf.mxu0
        %v3651 = vadd.f32 %v3367, %v3650
        %3652 = vmatmul.bf16.gmra.mxu0 %v2891
        %v3653 = vpop.f32.mrf.mxu0
        %v3654 = vadd.f32 %v3367, %v3653
        %v3655 = vpop.f32.mrf.mxu0
        %v3656 = vadd.f32 %v3367, %v3655
        %3657 = vdwg.mxu0
        %3658 = vmatpush.bf16.msra.mxu0 %v3544
        %3659 = vmatpush.bf16.msra.mxu0 %v3543
        %3660 = vmatpush.bf16.msra.mxu0 %v3542
        %3661 = vmatpush.bf16.msra.mxu0 %v3541
        %3662 = vmatpush.bf16.msra.mxu0 %v3540
        %3663 = vmatpush.bf16.msra.mxu0 %v3539
        %3664 = vmatpush.bf16.msra.mxu0 %v3538
        %3665 = vmatpush.bf16.msra.mxu0 %v3537
        %3666 = vmatmul.bf16.gmra.mxu0 %v2920
        %v3667 = vpop.f32.mrf.mxu0
        %v3668 = vadd.f32 %v3619, %v3667
        %v3669 = vpop.f32.mrf.mxu0
        %v3670 = vadd.f32 %v3621, %v3669
        %3671 = vmatmul.bf16.gmra.mxu0 %v2941
        %v3672 = vpop.f32.mrf.mxu0
        %v3673 = vadd.f32 %v3624, %v3672
        %v3674 = vpop.f32.mrf.mxu0
        %v3675 = vadd.f32 %v3626, %v3674
        %3676 = vmatmul.bf16.gmra.mxu0 %v2962
        %v3677 = vpop.f32.mrf.mxu0
        %v3678 = vadd.f32 %v3629, %v3677
        %v3679 = vpop.f32.mrf.mxu0
        %v3680 = vadd.f32 %v3631, %v3679
        %3681 = vmatmul.bf16.gmra.mxu0 %v2983
        %v3682 = vpop.f32.mrf.mxu0
        %v3683 = vadd.f32 %v3634, %v3682
        %v3684 = vpop.f32.mrf.mxu0
        %v3685 = vadd.f32 %v3636, %v3684
        %3686 = vmatmul.bf16.gmra.mxu0 %v3004
        %v3687 = vpop.f32.mrf.mxu0
        %v3688 = vadd.f32 %v3639, %v3687
        %v3689 = vpop.f32.mrf.mxu0
        %v3690 = vadd.f32 %v3641, %v3689
        %3691 = vmatmul.bf16.gmra.mxu0 %v3025
        %v3692 = vpop.f32.mrf.mxu0
        %v3693 = vadd.f32 %v3644, %v3692
        %v3694 = vpop.f32.mrf.mxu0
        %v3695 = vadd.f32 %v3646, %v3694
        %3696 = vmatmul.bf16.gmra.mxu0 %v3046
        %v3697 = vpop.f32.mrf.mxu0
        %v3698 = vadd.f32 %v3649, %v3697
        %v3699 = vpop.f32.mrf.mxu0
        %v3700 = vadd.f32 %v3651, %v3699
        %3701 = vmatmul.bf16.gmra.mxu0 %v3067
        %v3702 = vpop.f32.mrf.mxu0
        %v3703 = vadd.f32 %v3654, %v3702
        %v3704 = vpop.f32.mrf.mxu0
        %v3705 = vadd.f32 %v3656, %v3704
        %3706 = vdwg.mxu0
        %3707 = vmatpush.bf16.msra.mxu0 %v3552
        %3708 = vmatpush.bf16.msra.mxu0 %v3551
        %3709 = vmatpush.bf16.msra.mxu0 %v3550
        %3710 = vmatpush.bf16.msra.mxu0 %v3549
        %3711 = vmatpush.bf16.msra.mxu0 %v3548
        %3712 = vmatpush.bf16.msra.mxu0 %v3547
        %3713 = vmatpush.bf16.msra.mxu0 %v3546
        %3714 = vmatpush.bf16.msra.mxu0 %v3545
        %3715 = vmatmul.bf16.gmra.mxu0 %v3069
        %v3716 = vpop.f32.mrf.mxu0
        %v3717 = vadd.f32 %v3668, %v3716
        %v3718 = vpop.f32.mrf.mxu0
        %v3719 = vadd.f32 %v3670, %v3718
        %3720 = vmatmul.bf16.gmra.mxu0 %v3071
        %v3721 = vpop.f32.mrf.mxu0
        %v3722 = vadd.f32 %v3673, %v3721
        %v3723 = vpop.f32.mrf.mxu0
        %v3724 = vadd.f32 %v3675, %v3723
        %3725 = vmatmul.bf16.gmra.mxu0 %v3073
        %v3726 = vpop.f32.mrf.mxu0
        %v3727 = vadd.f32 %v3678, %v3726
        %v3728 = vpop.f32.mrf.mxu0
        %v3729 = vadd.f32 %v3680, %v3728
        %3730 = vmatmul.bf16.gmra.mxu0 %v3075
        %v3731 = vpop.f32.mrf.mxu0
        %v3732 = vadd.f32 %v3683, %v3731
        %v3733 = vpop.f32.mrf.mxu0
        %v3734 = vadd.f32 %v3685, %v3733
        %3735 = vmatmul.bf16.gmra.mxu0 %v3077
        %v3736 = vpop.f32.mrf.mxu0
        %v3737 = vadd.f32 %v3688, %v3736
        %v3738 = vpop.f32.mrf.mxu0
        %v3739 = vadd.f32 %v3690, %v3738
        %3740 = vmatmul.bf16.gmra.mxu0 %v3079
        %v3741 = vpop.f32.mrf.mxu0
        %v3742 = vadd.f32 %v3693, %v3741
        %v3743 = vpop.f32.mrf.mxu0
        %v3744 = vadd.f32 %v3695, %v3743
        %3745 = vmatmul.bf16.gmra.mxu0 %v3081
        %v3746 = vpop.f32.mrf.mxu0
        %v3747 = vadd.f32 %v3698, %v3746
        %v3748 = vpop.f32.mrf.mxu0
        %v3749 = vadd.f32 %v3700, %v3748
        %3750 = vmatmul.bf16.gmra.mxu0 %v3083
        %v3751 = vpop.f32.mrf.mxu0
        %v3752 = vadd.f32 %v3703, %v3751
        %v3753 = vpop.f32.mrf.mxu0
        %v3754 = vadd.f32 %v3705, %v3753
        %3755 = vdwg.mxu0
        %3756 = vmatpush.bf16.msra.mxu0 %v3560
        %3757 = vmatpush.bf16.msra.mxu0 %v3559
        %3758 = vmatpush.bf16.msra.mxu0 %v3558
        %3759 = vmatpush.bf16.msra.mxu0 %v3557
        %3760 = vmatpush.bf16.msra.mxu0 %v3556
        %3761 = vmatpush.bf16.msra.mxu0 %v3555
        %3762 = vmatpush.bf16.msra.mxu0 %v3554
        %3763 = vmatpush.bf16.msra.mxu0 %v3553
        %3764 = vmatmul.bf16.gmra.mxu0 %v3107
        %v3765 = vpop.f32.mrf.mxu0
        %v3766 = vadd.f32 %v3717, %v3765
        %v3767 = vpop.f32.mrf.mxu0
        %v3768 = vadd.f32 %v3719, %v3767
        %3769 = vmatmul.bf16.gmra.mxu0 %v3123
        %v3770 = vpop.f32.mrf.mxu0
        %v3771 = vadd.f32 %v3722, %v3770
        %v3772 = vpop.f32.mrf.mxu0
        %v3773 = vadd.f32 %v3724, %v3772
        %3774 = vmatmul.bf16.gmra.mxu0 %v3139
        %v3775 = vpop.f32.mrf.mxu0
        %v3776 = vadd.f32 %v3727, %v3775
        %v3777 = vpop.f32.mrf.mxu0
        %v3778 = vadd.f32 %v3729, %v3777
        %3779 = vmatmul.bf16.gmra.mxu0 %v3155
        %v3780 = vpop.f32.mrf.mxu0
        %v3781 = vadd.f32 %v3732, %v3780
        %v3782 = vpop.f32.mrf.mxu0
        %v3783 = vadd.f32 %v3734, %v3782
        %3784 = vmatmul.bf16.gmra.mxu0 %v3171
        %v3785 = vpop.f32.mrf.mxu0
        %v3786 = vadd.f32 %v3737, %v3785
        %v3787 = vpop.f32.mrf.mxu0
        %v3788 = vadd.f32 %v3739, %v3787
        %3789 = vmatmul.bf16.gmra.mxu0 %v3187
        %v3790 = vpop.f32.mrf.mxu0
        %v3791 = vadd.f32 %v3742, %v3790
        %v3792 = vpop.f32.mrf.mxu0
        %v3793 = vadd.f32 %v3744, %v3792
        %3794 = vmatmul.bf16.gmra.mxu0 %v3203
        %v3795 = vpop.f32.mrf.mxu0
        %v3796 = vadd.f32 %v3747, %v3795
        %v3797 = vpop.f32.mrf.mxu0
        %v3798 = vadd.f32 %v3749, %v3797
        %3799 = vmatmul.bf16.gmra.mxu0 %v3219
        %v3800 = vpop.f32.mrf.mxu0
        %v3801 = vadd.f32 %v3752, %v3800
        %v3802 = vpop.f32.mrf.mxu0
        %v3803 = vadd.f32 %v3754, %v3802
        %3804 = vdwg.mxu0
        %3805 = vmatpush.bf16.msra.mxu0 %v3568
        %3806 = vmatpush.bf16.msra.mxu0 %v3567
        %3807 = vmatpush.bf16.msra.mxu0 %v3566
        %3808 = vmatpush.bf16.msra.mxu0 %v3565
        %3809 = vmatpush.bf16.msra.mxu0 %v3564
        %3810 = vmatpush.bf16.msra.mxu0 %v3563
        %3811 = vmatpush.bf16.msra.mxu0 %v3562
        %3812 = vmatpush.bf16.msra.mxu0 %v3561
        %3813 = vmatmul.bf16.gmra.mxu0 %v3234
        %v3814 = vpop.f32.mrf.mxu0
        %v3815 = vadd.f32 %v3766, %v3814
        %v3816 = vpop.f32.mrf.mxu0
        %v3817 = vadd.f32 %v3768, %v3816
        %3818 = vmatmul.bf16.gmra.mxu0 %v3241
        %v3819 = vpop.f32.mrf.mxu0
        %v3820 = vadd.f32 %v3771, %v3819
        %v3821 = vpop.f32.mrf.mxu0
        %v3822 = vadd.f32 %v3773, %v3821
        %3823 = vmatmul.bf16.gmra.mxu0 %v3248
        %v3824 = vpop.f32.mrf.mxu0
        %v3825 = vadd.f32 %v3776, %v3824
        %v3826 = vpop.f32.mrf.mxu0
        %v3827 = vadd.f32 %v3778, %v3826
        %3828 = vmatmul.bf16.gmra.mxu0 %v3255
        %v3829 = vpop.f32.mrf.mxu0
        %v3830 = vadd.f32 %v3781, %v3829
        %v3831 = vpop.f32.mrf.mxu0
        %v3832 = vadd.f32 %v3783, %v3831
        %3833 = vmatmul.bf16.gmra.mxu0 %v3262
        %v3834 = vpop.f32.mrf.mxu0
        %v3835 = vadd.f32 %v3786, %v3834
        %v3836 = vpop.f32.mrf.mxu0
        %v3837 = vadd.f32 %v3788, %v3836
        %3838 = vmatmul.bf16.gmra.mxu0 %v3269
        %v3839 = vpop.f32.mrf.mxu0
        %v3840 = vadd.f32 %v3791, %v3839
        %v3841 = vpop.f32.mrf.mxu0
        %v3842 = vadd.f32 %v3793, %v3841
        %3843 = vmatmul.bf16.gmra.mxu0 %v3276
        %v3844 = vpop.f32.mrf.mxu0
        %v3845 = vadd.f32 %v3796, %v3844
        %v3846 = vpop.f32.mrf.mxu0
        %v3847 = vadd.f32 %v3798, %v3846
        %3848 = vmatmul.bf16.gmra.mxu0 %v3283
        %v3849 = vpop.f32.mrf.mxu0
        %v3850 = vadd.f32 %v3801, %v3849
        %v3851 = vpop.f32.mrf.mxu0
        %v3852 = vadd.f32 %v3803, %v3851
        %3853 = vdwg.mxu0
        %v3854 = vmax.f32 %v3815, 0.0
        %v3855 = vmax.f32 %v3817, 0.0
        %v3856 = vmax.f32 %v3820, 0.0
        %v3857 = vmax.f32 %v3822, 0.0
        %v3858 = vmax.f32 %v3825, 0.0
        %v3859 = vmax.f32 %v3827, 0.0
        %v3860 = vmax.f32 %v3830, 0.0
        %v3861 = vmax.f32 %v3832, 0.0
        %v3862 = vmax.f32 %v3835, 0.0
        %v3863 = vmax.f32 %v3837, 0.0
        %v3864 = vmax.f32 %v3840, 0.0
        %v3865 = vmax.f32 %v3842, 0.0
        %v3866 = vmax.f32 %v3845, 0.0
        %v3867 = vmax.f32 %v3847, 0.0
        %v3868 = vmax.f32 %v3850, 0.0
        %v3869 = vmax.f32 %v3852, 0.0
        %v3870 = vpack.c.bf16 %v3855, %v3854
        %v3871 = vpack.c.bf16 %v3857, %v3856
        %v3872 = vpack.c.bf16 %v3859, %v3858
        %v3873 = vpack.c.bf16 %v3861, %v3860
        %v3874 = vpack.c.bf16 %v3863, %v3862
        %v3875 = vpack.c.bf16 %v3865, %v3864
        %v3876 = vpack.c.bf16 %v3867, %v3866
        %v3877 = vpack.c.bf16 %v3869, %v3868
        %v3878 = vld [vmem:[#allocation12] sm:$0xff]
        %v3879 = vld [vmem:[#allocation12 + $0x8] sm:$0xff]
        %v3880 = vld [vmem:[#allocation12 + $0x10] sm:$0xff]
        %v3881 = vld [vmem:[#allocation12 + $0x18] sm:$0xff]
        %v3882 = vld [vmem:[#allocation12 + $0x20] sm:$0xff]
        %v3883 = vld [vmem:[#allocation12 + $0x28] sm:$0xff]
        %v3884 = vld [vmem:[#allocation12 + $0x30] sm:$0xff]
        %v3885 = vld [vmem:[#allocation12 + $0x38] sm:$0xff]
        %v3886 = vld [vmem:[#allocation12 + $0x40] sm:$0xff]
        %v3887 = vld [vmem:[#allocation12 + $0x48] sm:$0xff]
        %v3888 = vld [vmem:[#allocation12 + $0x50] sm:$0xff]
        %v3889 = vld [vmem:[#allocation12 + $0x58] sm:$0xff]
        %v3890 = vld [vmem:[#allocation12 + $0x60] sm:$0xff]
        %v3891 = vld [vmem:[#allocation12 + $0x68] sm:$0xff]
        %v3892 = vld [vmem:[#allocation12 + $0x70] sm:$0xff]
        %v3893 = vld [vmem:[#allocation12 + $0x78] sm:$0xff]
        %v3894 = vld [vmem:[%s8] sm:$0x3]
        %v3896 = vperm.slane %v3894, 0
        %v3897 = vperm.slane %v3894, 1
        %v3916 = vunpack.c.l.b16 %v3878
        %v3917 = vunpack.c.h.b16 %v3878
        %v3918 = vunpack.c.l.b16 %v3879
        %v3919 = vunpack.c.h.b16 %v3879
        %v3920 = vunpack.c.l.b16 %v3880
        %v3921 = vunpack.c.h.b16 %v3880
        %v3922 = vunpack.c.l.b16 %v3881
        %v3923 = vunpack.c.h.b16 %v3881
        %v3924 = vunpack.c.l.b16 %v3882
        %v3925 = vunpack.c.h.b16 %v3882
        %v3926 = vunpack.c.l.b16 %v3883
        %v3927 = vunpack.c.h.b16 %v3883
        %v3928 = vunpack.c.l.b16 %v3884
        %v3929 = vunpack.c.h.b16 %v3884
        %v3930 = vunpack.c.l.b16 %v3885
        %v3931 = vunpack.c.h.b16 %v3885
        %v3932 = vunpack.c.l.b16 %v3886
        %v3933 = vunpack.c.h.b16 %v3886
        %v3934 = vunpack.c.l.b16 %v3887
        %v3935 = vunpack.c.h.b16 %v3887
        %v3936 = vunpack.c.l.b16 %v3888
        %v3937 = vunpack.c.h.b16 %v3888
        %v3938 = vunpack.c.l.b16 %v3889
        %v3939 = vunpack.c.h.b16 %v3889
        %v3940 = vunpack.c.l.b16 %v3890
        %v3941 = vunpack.c.h.b16 %v3890
        %v3942 = vunpack.c.l.b16 %v3891
        %v3943 = vunpack.c.h.b16 %v3891
        %v3944 = vunpack.c.l.b16 %v3892
        %v3945 = vunpack.c.h.b16 %v3892
        %v3946 = vunpack.c.l.b16 %v3893
        %v3947 = vunpack.c.h.b16 %v3893
        %v3948 = vpack.c.b16 %v3918, %v3916
        %v3949 = vpack.c.b16 %v3919, %v3917
        %v3950 = vpack.c.b16 %v3922, %v3920
        %v3951 = vpack.c.b16 %v3923, %v3921
        %v3952 = vpack.c.b16 %v3926, %v3924
        %v3953 = vpack.c.b16 %v3927, %v3925
        %v3954 = vpack.c.b16 %v3930, %v3928
        %v3955 = vpack.c.b16 %v3931, %v3929
        %v3956 = vpack.c.b16 %v3934, %v3932
        %v3957 = vpack.c.b16 %v3935, %v3933
        %v3958 = vpack.c.b16 %v3938, %v3936
        %v3959 = vpack.c.b16 %v3939, %v3937
        %v3960 = vpack.c.b16 %v3942, %v3940
        %v3961 = vpack.c.b16 %v3943, %v3941
        %v3962 = vpack.c.b16 %v3946, %v3944
        %v3963 = vpack.c.b16 %v3947, %v3945
        %3980 = vmatpush.bf16.msra.mxu0 %v3962
        %3981 = vmatpush.bf16.msra.mxu0 %v3960
        %3982 = vmatpush.bf16.msra.mxu0 %v3958
        %3983 = vmatpush.bf16.msra.mxu0 %v3956
        %3984 = vmatpush.bf16.msra.mxu0 %v3954
        %3985 = vmatpush.bf16.msra.mxu0 %v3952
        %3986 = vmatpush.bf16.msra.mxu0 %v3950
        %3987 = vmatpush.bf16.msra.mxu0 %v3948
        %3988 = vmatmul.bf16.gmra.mxu0 %v3870
        %v3989 = vpop.f32.mrf.mxu0
        %v3990 = vadd.f32 %v3896, %v3989
        %v3991 = vpop.f32.mrf.mxu0
        %v3992 = vadd.f32 %v3896, %v3991
        %3993 = vmatmul.bf16.gmra.mxu0 %v3871
        %v3994 = vpop.f32.mrf.mxu0
        %v3995 = vadd.f32 %v3896, %v3994
        %v3996 = vpop.f32.mrf.mxu0
        %v3997 = vadd.f32 %v3896, %v3996
        %3998 = vmatmul.bf16.gmra.mxu0 %v3872
        %v3999 = vpop.f32.mrf.mxu0
        %v4000 = vadd.f32 %v3896, %v3999
        %v4001 = vpop.f32.mrf.mxu0
        %v4002 = vadd.f32 %v3896, %v4001
        %4003 = vmatmul.bf16.gmra.mxu0 %v3873
        %v4004 = vpop.f32.mrf.mxu0
        %v4005 = vadd.f32 %v3896, %v4004
        %v4006 = vpop.f32.mrf.mxu0
        %v4007 = vadd.f32 %v3896, %v4006
        %4008 = vmatmul.bf16.gmra.mxu0 %v3874
        %v4009 = vpop.f32.mrf.mxu0
        %v4010 = vadd.f32 %v3896, %v4009
        %v4011 = vpop.f32.mrf.mxu0
        %v4012 = vadd.f32 %v3896, %v4011
        %4013 = vmatmul.bf16.gmra.mxu0 %v3875
        %v4014 = vpop.f32.mrf.mxu0
        %v4015 = vadd.f32 %v3896, %v4014
        %v4016 = vpop.f32.mrf.mxu0
        %v4017 = vadd.f32 %v3896, %v4016
        %4018 = vmatmul.bf16.gmra.mxu0 %v3876
        %v4019 = vpop.f32.mrf.mxu0
        %v4020 = vadd.f32 %v3896, %v4019
        %v4021 = vpop.f32.mrf.mxu0
        %v4022 = vadd.f32 %v3896, %v4021
        %4023 = vmatmul.bf16.gmra.mxu0 %v3877
        %v4024 = vpop.f32.mrf.mxu0
        %v4025 = vadd.f32 %v3896, %v4024
        %v4026 = vpop.f32.mrf.mxu0
        %v4027 = vadd.f32 %v3896, %v4026
        %4028 = vdwg.mxu0
        %4029 = vmatpush.bf16.msra.mxu0 %v3963
        %4030 = vmatpush.bf16.msra.mxu0 %v3961
        %4031 = vmatpush.bf16.msra.mxu0 %v3959
        %4032 = vmatpush.bf16.msra.mxu0 %v3957
        %4033 = vmatpush.bf16.msra.mxu0 %v3955
        %4034 = vmatpush.bf16.msra.mxu0 %v3953
        %4035 = vmatpush.bf16.msra.mxu0 %v3951
        %4036 = vmatpush.bf16.msra.mxu0 %v3949
        %4037 = vmatmul.bf16.gmra.mxu0 %v3870
        %v4038 = vpop.f32.mrf.mxu0
        %v4039 = vadd.f32 %v3897, %v4038
        %v4040 = vpop.f32.mrf.mxu0
        %v4041 = vadd.f32 %v3897, %v4040
        %4042 = vmatmul.bf16.gmra.mxu0 %v3871
        %v4043 = vpop.f32.mrf.mxu0
        %v4044 = vadd.f32 %v3897, %v4043
        %v4045 = vpop.f32.mrf.mxu0
        %v4046 = vadd.f32 %v3897, %v4045
        %4047 = vmatmul.bf16.gmra.mxu0 %v3872
        %v4048 = vpop.f32.mrf.mxu0
        %v4049 = vadd.f32 %v3897, %v4048
        %v4050 = vpop.f32.mrf.mxu0
        %v4051 = vadd.f32 %v3897, %v4050
        %4052 = vmatmul.bf16.gmra.mxu0 %v3873
        %v4053 = vpop.f32.mrf.mxu0
        %v4054 = vadd.f32 %v3897, %v4053
        %v4055 = vpop.f32.mrf.mxu0
        %v4056 = vadd.f32 %v3897, %v4055
        %4057 = vmatmul.bf16.gmra.mxu0 %v3874
        %v4058 = vpop.f32.mrf.mxu0
        %v4059 = vadd.f32 %v3897, %v4058
        %v4060 = vpop.f32.mrf.mxu0
        %v4061 = vadd.f32 %v3897, %v4060
        %4062 = vmatmul.bf16.gmra.mxu0 %v3875
        %v4063 = vpop.f32.mrf.mxu0
        %v4064 = vadd.f32 %v3897, %v4063
        %v4065 = vpop.f32.mrf.mxu0
        %v4066 = vadd.f32 %v3897, %v4065
        %4067 = vmatmul.bf16.gmra.mxu0 %v3876
        %v4068 = vpop.f32.mrf.mxu0
        %v4069 = vadd.f32 %v3897, %v4068
        %v4070 = vpop.f32.mrf.mxu0
        %v4071 = vadd.f32 %v3897, %v4070
        %4072 = vmatmul.bf16.gmra.mxu0 %v3877
        %v4073 = vpop.f32.mrf.mxu0
        %v4074 = vadd.f32 %v3897, %v4073
        %v4075 = vpop.f32.mrf.mxu0
        %v4076 = vadd.f32 %v3897, %v4075
        %4077 = vdwg.mxu0
        %4078 = vst [vmem:[%s434] sm:$0xff] %v3990
        %4079 = vst [vmem:[%s434 + $0x8] sm:$0xff] %v4039
        %4080 = vst [vmem:[%s434 + $0x10] sm:$0xff] %v3992
        %4081 = vst [vmem:[%s434 + $0x18] sm:$0xff] %v4041
        %s4082 = scalar_lea.vmem %s434, 32 [#allocation14]
        %4083 = vst [vmem:[%s4082] sm:$0xff] %v3995
        %4084 = vst [vmem:[%s4082 + $0x8] sm:$0xff] %v4044
        %4085 = vst [vmem:[%s4082 + $0x10] sm:$0xff] %v3997
        %4086 = vst [vmem:[%s4082 + $0x18] sm:$0xff] %v4046
        %s4087 = scalar_lea.vmem %s434, 64 [#allocation14]
        %4088 = vst [vmem:[%s4087] sm:$0xff] %v4000
        %4089 = vst [vmem:[%s4087 + $0x8] sm:$0xff] %v4049
        %4090 = vst [vmem:[%s4087 + $0x10] sm:$0xff] %v4002
        %4091 = vst [vmem:[%s4087 + $0x18] sm:$0xff] %v4051
        %s4092 = scalar_lea.vmem %s434, 96 [#allocation14]
        %4093 = vst [vmem:[%s4092] sm:$0xff] %v4005
        %4094 = vst [vmem:[%s4092 + $0x8] sm:$0xff] %v4054
        %4095 = vst [vmem:[%s4092 + $0x10] sm:$0xff] %v4007
        %4096 = vst [vmem:[%s4092 + $0x18] sm:$0xff] %v4056
        %s4097 = scalar_lea.vmem %s434, 128 [#allocation14]
        %4098 = vst [vmem:[%s4097] sm:$0xff] %v4010
        %4099 = vst [vmem:[%s4097 + $0x8] sm:$0xff] %v4059
        %4100 = vst [vmem:[%s4097 + $0x10] sm:$0xff] %v4012
        %4101 = vst [vmem:[%s4097 + $0x18] sm:$0xff] %v4061
        %s4102 = scalar_lea.vmem %s434, 160 [#allocation14]
        %4103 = vst [vmem:[%s4102] sm:$0xff] %v4015
        %4104 = vst [vmem:[%s4102 + $0x8] sm:$0xff] %v4064
        %4105 = vst [vmem:[%s4102 + $0x10] sm:$0xff] %v4017
        %4106 = vst [vmem:[%s4102 + $0x18] sm:$0xff] %v4066
        %s4107 = scalar_lea.vmem %s434, 192 [#allocation14]
        %4108 = vst [vmem:[%s4107] sm:$0xff] %v4020
        %4109 = vst [vmem:[%s4107 + $0x8] sm:$0xff] %v4069
        %4110 = vst [vmem:[%s4107 + $0x10] sm:$0xff] %v4022
        %4111 = vst [vmem:[%s4107 + $0x18] sm:$0xff] %v4071
        %s4112 = scalar_lea.vmem %s434, 224 [#allocation14]
        %4113 = vst [vmem:[%s4112] sm:$0xff] %v4025
        %4114 = vst [vmem:[%s4112 + $0x8] sm:$0xff] %v4074
        %4115 = vst [vmem:[%s4112 + $0x10] sm:$0xff] %v4027
        %4116 = vst [vmem:[%s4112 + $0x18] sm:$0xff] %v4076
        %s4117 = sand.u32 %s231, 1
        %s4118 = scalar_lea.sflag [#allocation5], %s4117
        %s4119 = sand.u32 %s231, 1
        %s4120 = smul.addr %s4119, 256
        %s4121 = scalar_lea.vmem [#allocation14], %s4120
        // Predicated region
        $region81: #{tpu_custom_call.1} parent=55 // pred_check
          %p4122 = pneg %p241
        $region82: #{tpu_custom_call.1} parent=55 // pred_check_branch
          %4124 = sbr.rel (%p4122) target = $region84
        $region83: #{tpu_custom_call.1} parent=55 // pred_region
          %s4125 = smul.u32 8, %s29
          %4127 = vsyncadd %s4118, 0
          %s4128 = smul.addr %s4125, 4
          %s4129 = smul.addr %s4128, 8
          %s4130 = scalar_lea.hbm %s9, %s4129
          %s4131 = sshll.u32 %s4121, 4
          %s4132 = int_to_ptr.vmem [resolvable:$true] %s4131
          %s4133 = sshll.u32 %s4130, 4
          %s4134 = int_to_ptr.hbm [resolvable:$true] %s4133
          %4139 = dma.vmem_to_hbm [thread:$0]  %s4132, 4096, %s4134, %s4118, 256, 256, 16
        $region84: #{tpu_custom_call.1} parent=55 // pred_fallthru
          _
      $region56: #{tpu_custom_call.1} parent=5 // pred_fallthru
        _
      %p4140 = scmp.le.s32.totalorder 2, %s24
      // Predicated region
      $region85: #{tpu_custom_call.1} parent=5 // pred_check
        %p4141 = pneg %p4140
      $region86: #{tpu_custom_call.1} parent=5 // pred_check_branch
        %4143 = sbr.rel (%p4141) target = $region88
      $region87: #{tpu_custom_call.1} parent=5 // pred_region
        %s4144 = ssub.s32 %s24, 2
        // Predicated region
        $region89: #{tpu_custom_call.1} parent=87 // pred_check
          %p4145 = pneg %p247
        $region90: #{tpu_custom_call.1} parent=87 // pred_check_branch
          %4147 = sbr.rel (%p4145) target = $region92
        $region91: #{tpu_custom_call.1} parent=87 // pred_region
          %s4148 = sand.u32 %s232, 1
          %s4149 = scalar_lea.sflag [#allocation5], %s4148
          %s4150 = sand.u32 %s232, 1
          %s4151 = smul.addr %s4150, 256
          %s4152 = scalar_lea.vmem [#allocation14], %s4151
          %4154 = dma.done %s4149, 4096
        $region92: #{tpu_custom_call.1} parent=87 // pred_fallthru
          _
      $region88: #{tpu_custom_call.1} parent=5 // pred_fallthru
        _
    $region6: #{tpu_custom_call.1} parent=1 // loop_footer
      %s28 = sadd.s32 1, %s24
    $region7: #{tpu_custom_call.1} parent=1 // loop_footer_branch
      %23 = sbr.rel target = $region3
    $region8: #{tpu_custom_call.1} parent=1 // loop_exit
      _
    %4155 = vsyncpa [#allocation4], 1
    %s4156 = scalar_lea.sflag [#allocation4], 1
    %4157 = vsyncpa %s4156, 1
    %4158 = vsyncpa [#allocation7], 1
    %4159 = vsyncpa [#allocation10], 1
    %4160 = vsyncpa [#allocation13], 1
    %4161 = vsyncpa [#allocation5], 1
    %s4162 = scalar_lea.sflag [#allocation5], 1
    %4163 = vsyncpa %s4162, 1

</llo_original>
